<compile_context>
chip_gen: v7x
topology: tpu7x:2x2x1
jax: 0.10.0
libtpu: 0.0.40
codegen_flags: <defaults>
</compile_context>

<pallas_src>
import math
import numpy as np
import jax
import jax.numpy as jnp
from jax import lax
from jax.experimental import pallas as pl
from jax.experimental.pallas import tpu as pltpu


def _round_up(v, m):
    return (v + m - 1) // m * m


# --------------------------------------------------------------------------
# Pallas kernel
# --------------------------------------------------------------------------
def make_resnet_block_kernel(*, S, nb, Cin, Cinp, Cout, Coutp, G1, G2,
                             K1, K2, eps, tap_offsets):
    Sb = nb * S
    Cg1 = Cin // G1
    Cg2 = Cout // G2

    def kernel(x_ref, masks_ref, w1_ref, w2_ref, pin_ref, pout_ref,
               out_ref, col_ref):
        x = x_ref[...]                 # (Cinp, Sb) f32; rows >= Cin are exact zeros
        masks = masks_ref[...]         # (27, Sb) f32 {0,1} per-sample boundary masks
        pin = pin_ref[...]             # (Cinp, 2 + G1)  [gamma1 | beta1 | group one-hots]
        pout = pout_ref[...]           # (Coutp, 4 + G2) [gamma2 | beta2 | b1 | cb2 | one-hots]
        gamma1, beta1, gsel1 = pin[:, 0:1], pin[:, 1:2], pin[:, 2:2 + G1]
        gamma2, beta2 = pout[:, 0:1], pout[:, 1:2]
        b1, cb2, gsel2 = pout[:, 2:3], pout[:, 3:4], pout[:, 4:4 + G2]

        def groupnorm(h, gamma, beta, gsel, Cg, G):
            # h: (Cp, Sb).  Statistics per (folded sample, group), exact f32.
            # Heavy reductions are lane reductions (VPU/XLU); the group combine
            # is a tiny masked sublane sum — no MXU round trips.  Zero pad rows
            # have all-zero one-hot columns and zero gamma/beta, so they are
            # excluded from the stats and stay exactly zero afterwards.
            inv_cnt = 1.0 / float(Cg * S)
            pieces = []
            for n in range(nb):
                hn = h[:, n * S:(n + 1) * S]                     # (Cp, S)
                s1 = jnp.sum(hn, axis=1, keepdims=True)          # (Cp, 1)
                s2 = jnp.sum(hn * hn, axis=1, keepdims=True)     # (Cp, 1)
                mean = jnp.zeros_like(s1)
                msq = jnp.zeros_like(s1)
                for g in range(G):
                    sel = gsel[:, g:g + 1]                       # (Cp, 1) one-hot
                    mean = mean + sel * jnp.sum(s1 * sel, axis=0, keepdims=True)
                    msq = msq + sel * jnp.sum(s2 * sel, axis=0, keepdims=True)
                mean = mean * inv_cnt
                var = msq * inv_cnt - mean * mean                # one-pass variance
                inv = lax.rsqrt(var + eps)
                pieces.append((hn - mean) * (inv * gamma) + beta)
            return pieces[0] if nb == 1 else jnp.concatenate(pieces, axis=1)

        def build_col(h, Cp):
            # im2col in (C, S) layout: 27 static lane rolls (XLU) + boundary
            # masks, written at 8-aligned row offsets of the shared bf16
            # scratch -> full-slot aligned stores, no zero fill of the slab.
            for k, off in enumerate(tap_offsets):
                if off == 0:
                    v = h                                        # center tap
                else:
                    v = pltpu.roll(h, shift=(-off) % Sb, axis=1) * masks[k:k + 1, :]
                col_ref[k * Cp:(k + 1) * Cp, :] = v.astype(col_ref.dtype)

        # ---- norm1 -> SiLU -> conv1 as one (Coutp, 27*Cinp) x (27*Cinp, Sb) matmul
        h = groupnorm(x, gamma1, beta1, gsel1, Cg1, G1)
        h = h * jax.nn.sigmoid(h)
        build_col(h, Cinp)
        h = jnp.dot(w1_ref[...], col_ref[0:K1, :],
                    preferred_element_type=jnp.float32) + b1

        # ---- norm2 -> SiLU -> conv2, 1x1x1 shortcut fused as extra K rows
        #      (skip_scale already folded into w2m / cb2)
        h = groupnorm(h, gamma2, beta2, gsel2, Cg2, G2)
        h = h * jax.nn.sigmoid(h)
        build_col(h, Coutp)
        col_ref[27 * Coutp:27 * Coutp + Cinp, :] = x.astype(col_ref.dtype)
        y = jnp.dot(w2_ref[...], col_ref[0:K2, :],
                    preferred_element_type=jnp.float32) + cb2

        out_ref[...] = y.astype(out_ref.dtype)       # (Coutp, Sb) lane-dense store

    return kernel


# --------------------------------------------------------------------------
# One-time parameter / constant preparation (hoisted out of the forward path)
# --------------------------------------------------------------------------
def prepare_resnet_block(params, *, N, D, H, W, groups, eps, skip_scale,
                         grid_blocks=1, col_dtype=jnp.bfloat16):
    """Weight re-layout, boundary masks, static metadata.

    grid_blocks: how many Pallas grid steps the batch is split into.
      1  -> whole batch folded into the lane axis (best on 1-TC v5e/v6e).
      2  -> two 'parallel' grid steps so both v7x TensorCores get work.
    col_dtype: dtype of the im2col slab and conv weights (the precision knob
      for the two conv matmuls; accumulation is always f32).
    """
    w1 = jnp.asarray(params["w1"], jnp.float32)          # (3,3,3,Cin,Cout) DHWIO
    Cin, Cout = int(w1.shape[3]), int(w1.shape[4])
    S = D * H * W
    if N % grid_blocks != 0:
        raise ValueError("N must be divisible by grid_blocks")
    nb = N // grid_blocks
    Sb = nb * S
    G1, G2 = min(groups, Cin), min(groups, Cout)
    Cinp, Coutp = _round_up(Cin, 8), _round_up(Cout, 8)
    K1 = 27 * Cinp
    K2 = 27 * Coutp + Cinp

    # 27-tap boundary masks + flat lane offsets (per sample), tiled across the
    # nb samples folded into the lane axis.  Any roll that crosses a sample
    # boundary lands on a lane whose mask is already 0.
    zz, yy, xx = np.meshgrid(np.arange(D), np.arange(H), np.arange(W),
                             indexing="ij")
    masks = np.empty((27, S), np.float32)
    offsets = []
    k = 0
    for dz in (-1, 0, 1):
        for dy in (-1, 0, 1):
            for dx in (-1, 0, 1):
                valid = ((zz + dz >= 0) & (zz + dz < D) &
                         (yy + dy >= 0) & (yy + dy < H) &
                         (xx + dx >= 0) & (xx + dx < W))
                masks[k] = valid.reshape(-1).astype(np.float32)
                offsets.append(dz * H * W + dy * W + dx)
                k += 1
    masks_full = jnp.asarray(np.tile(masks, (1, nb)))                # (27, Sb)

    # conv1 weights -> (Coutp, 27*Cinp) with zero-padded channels.
    w1p = jnp.pad(w1, ((0, 0), (0, 0), (0, 0),
                       (0, Cinp - Cin), (0, Coutp - Cout)))
    w1m = jnp.transpose(w1p.reshape(27, Cinp, Coutp), (2, 0, 1)
                        ).reshape(Coutp, K1)

    # conv2 weights + fused 1x1x1 shortcut (or identity); skip_scale folded in.
    w2 = jnp.asarray(params["w2"], jnp.float32)
    w2p = jnp.pad(w2, ((0, 0), (0, 0), (0, 0),
                       (0, Coutp - Cout), (0, Coutp - Cout)))
    w2m = jnp.transpose(w2p.reshape(27, Coutp, Coutp), (2, 0, 1)
                        ).reshape(Coutp, 27 * Coutp)
    if Cin != Cout:
        ws = jnp.transpose(jnp.asarray(params["ws"], jnp.float32))    # (Cout, Cin)
        bs = jnp.asarray(params["bs"], jnp.float32).reshape(-1)
    else:
        ws = jnp.eye(Cout, dtype=jnp.float32)
        bs = jnp.zeros((Cout,), jnp.float32)
    ws = jnp.pad(ws, ((0, Coutp - Cout), (0, Cinp - Cin)))
    w2m = jnp.concatenate([w2m, ws], axis=1) * jnp.float32(skip_scale)

    b1 = jnp.asarray(params["b1"], jnp.float32).reshape(-1)
    cb2 = jnp.float32(skip_scale) * (
        jnp.asarray(params["b2"], jnp.float32).reshape(-1) + bs)

    def group_onehot(C, Cp, G):
        Cg = C // G
        M = np.zeros((Cp, G), np.float32)
        for c in range(C):
            M[c, c // Cg] = 1.0
        return jnp.asarray(M)

    p_in = jnp.stack([jnp.asarray(params["gamma1"], jnp.float32).reshape(-1),
                      jnp.asarray(params["beta1"], jnp.float32).reshape(-1)],
                     axis=1)
    p_in = jnp.pad(p_in, ((0, Cinp - Cin), (0, 0)))
    p_in = jnp.concatenate([p_in, group_onehot(Cin, Cinp, G1)], axis=1)

    p_out = jnp.stack([jnp.asarray(params["gamma2"], jnp.float32).reshape(-1),
                       jnp.asarray(params["beta2"], jnp.float32).reshape(-1),
                       b1, cb2], axis=1)
    p_out = jnp.pad(p_out, ((0, Coutp - Cout), (0, 0)))
    p_out = jnp.concatenate([p_out, group_onehot(Cout, Coutp, G2)], axis=1)

    return dict(
        masks=masks_full,
        w1m=w1m.astype(col_dtype),
        w2m=w2m.astype(col_dtype),
        p_in=p_in,
        p_out=p_out,
        meta=dict(N=N, D=D, H=H, W=W, S=S, Sb=Sb, nb=nb, grid_blocks=grid_blocks,
                  Cin=Cin, Cinp=Cinp, Cout=Cout, Coutp=Coutp, G1=G1, G2=G2,
                  K1=K1, K2=K2, eps=float(eps), tap_offsets=tuple(offsets),
                  col_dtype=col_dtype),
    )


# --------------------------------------------------------------------------
# Forward wrapper (takes / returns PyTorch NCDHW layout)
# --------------------------------------------------------------------------
def resnet_block_forward(x_ncdhw, prep):
    m = prep["meta"]
    N, D, H, W = m["N"], m["D"], m["H"], m["W"]
    S, Sb, nb, gb = m["S"], m["Sb"], m["nb"], m["grid_blocks"]
    Cin, Cinp, Cout, Coutp = m["Cin"], m["Cinp"], m["Cout"], m["Coutp"]
    K1, K2 = m["K1"], m["K2"]

    assert x_ncdhw.shape == (N, Cin, D, H, W), x_ncdhw.shape

    # Pad channels to a sublane multiple and fold nb samples into the lane axis.
    x = x_ncdhw.reshape(N, Cin, S).astype(jnp.float32)
    x = jnp.pad(x, ((0, 0), (0, Cinp - Cin), (0, 0)))
    x = x.reshape(gb, nb, Cinp, S).transpose(0, 2, 1, 3).reshape(gb, Cinp, Sb)

    kernel = make_resnet_block_kernel(
        S=S, nb=nb, Cin=Cin, Cinp=Cinp, Cout=Cout, Coutp=Coutp,
        G1=m["G1"], G2=m["G2"], K1=K1, K2=K2,
        eps=m["eps"], tap_offsets=m["tap_offsets"])

    param_ops = [prep["masks"], prep["w1m"], prep["w2m"],
                 prep["p_in"], prep["p_out"]]

    in_specs = [pl.BlockSpec((None, Cinp, Sb), lambda b: (b, 0, 0))]
    for p in param_ops:
        nd = p.ndim
        in_specs.append(pl.BlockSpec(p.shape, lambda b, nd=nd: (0,) * nd))
    out_specs = pl.BlockSpec((None, Coutp, Sb), lambda b: (b, 0, 0))

    k_scratch = _round_up(max(K1, K2), 16)
    scratch_shapes = [pltpu.VMEM((k_scratch, Sb), m["col_dtype"])]

    flops = 2 * gb * Sb * Coutp * (K1 + K2)
    transcendentals = gb * Sb * (Cinp + Coutp)
    param_bytes = sum(int(p.size) * p.dtype.itemsize for p in param_ops)
    bytes_accessed = 4 * (gb * Cinp * Sb + gb * Coutp * Sb) + gb * param_bytes

    out = pl.pallas_call(
        kernel,
        out_shape=jax.ShapeDtypeStruct((gb, Coutp, Sb), jnp.float32),
        grid_spec=pltpu.PrefetchScalarGridSpec(
            num_scalar_prefetch=0,
            grid=(gb,),
            in_specs=in_specs,
            out_specs=out_specs,
            scratch_shapes=scratch_shapes,
        ),
        compiler_params=pltpu.CompilerParams(
            dimension_semantics=("parallel",),
            vmem_limit_bytes=64 * 1024 * 1024,
        ),
        cost_estimate=pl.CostEstimate(
            flops=int(flops),
            transcendentals=int(transcendentals),
            bytes_accessed=int(bytes_accessed),
        ),
    )(x, *param_ops)

    # Un-fold the batch, drop channel padding, back to NCDHW.
    out = out.reshape(gb, Coutp, nb, S)[:, :Cout]
    out = out.transpose(0, 2, 1, 3).reshape(N, Cout, D, H, W)
    return out


# --------------------------------------------------------------------------
# Pure-JAX reference (NCDHW), mirrors PyTorch semantics
# --------------------------------------------------------------------------
def ref_forward(x, params, *, groups, eps, skip_scale):
    N, Cin, D, H, W = x.shape
    Cout = params["w1"].shape[-1]
    G1 = min(groups, Cin)
    G2 = min(groups, Cout)

    def gn(h, G, gamma, beta):
        n, c = h.shape[0], h.shape[1]
        hg = h.reshape(n, G, -1)
        mean = hg.mean(axis=2, keepdims=True)
        var = ((hg - mean) ** 2).mean(axis=2, keepdims=True)
        hn = ((hg - mean) / jnp.sqrt(var + eps)).reshape(h.shape)
        return hn * gamma.reshape(1, c, 1, 1, 1) + beta.reshape(1, c, 1, 1, 1)

    def conv(h, w, b):
        y = lax.conv_general_dilated(
            h, w, window_strides=(1, 1, 1), padding="SAME",
            dimension_numbers=("NCDHW", "DHWIO", "NCDHW"),
            precision=lax.Precision.HIGHEST)
        return y + b.reshape(1, -1, 1, 1, 1)

    h = gn(x, G1, params["gamma1"], params["beta1"])
    h = jax.nn.silu(h)
    h = conv(h, params["w1"], params["b1"])
    h = gn(h, G2, params["gamma2"], params["beta2"])
    h = jax.nn.silu(h)
    h = conv(h, params["w2"], params["b2"])
    if Cin != Cout:
        res = jnp.einsum("ncdhw,co->nodhw", x, params["ws"],
                         precision=lax.Precision.HIGHEST) \
              + params["bs"].reshape(1, -1, 1, 1, 1)
    else:
        res = x
    return (h + res) * skip_scale


# --------------------------------------------------------------------------
# Main
# --------------------------------------------------------------------------
if __name__ == "__main__":
    N, Cin, Cout = 2, 4, 8
    D = H = W = 8
    groups = 2
    eps = 1e-5
    skip_scale = 1.0 / math.sqrt(2.0)

    key = jax.random.PRNGKey(0)
    keys = jax.random.split(key, 12)

    # deterministic synthetic parameters (shapes from the module __init__)
    params = {
        "gamma1": 1.0 + 0.1 * jax.random.normal(keys[0], (1, Cin), jnp.float32),
        "beta1": 0.1 * jax.random.normal(keys[1], (1, Cin), jnp.float32),
        "w1": jax.random.normal(keys[2], (3, 3, 3, Cin, Cout), jnp.float32)
              / math.sqrt(27 * Cin),
        "b1": 0.05 * jax.random.normal(keys[3], (1, Cout), jnp.float32),
        "gamma2": 1.0 + 0.1 * jax.random.normal(keys[4], (1, Cout), jnp.float32),
        "beta2": 0.1 * jax.random.normal(keys[5], (1, Cout), jnp.float32),
        "w2": jax.random.normal(keys[6], (3, 3, 3, Cout, Cout), jnp.float32)
              / math.sqrt(27 * Cout),
        "b2": 0.05 * jax.random.normal(keys[7], (1, Cout), jnp.float32),
        "ws": jax.random.normal(keys[8], (Cin, Cout), jnp.float32) / math.sqrt(Cin),
        "bs": 0.05 * jax.random.normal(keys[9], (1, Cout), jnp.float32),
    }

    # input in PyTorch NCDHW convention
    x_ncdhw = jax.random.normal(keys[10], (N, Cin, D, H, W), jnp.float32)

    ref = jax.block_until_ready(
        ref_forward(x_ncdhw, params, groups=groups, eps=eps,
                    skip_scale=skip_scale))

    # Config A (default): whole batch folded into the lane axis -> grid=(1,)
    # (one pipeline step; best on the single-TensorCore v5e / v6e parts).
    prep_fold = prepare_resnet_block(params, N=N, D=D, H=H, W=W, groups=groups,
                                     eps=eps, skip_scale=skip_scale,
                                     grid_blocks=1)
    out_fold = jax.block_until_ready(resnet_block_forward(x_ncdhw, prep_fold))

    # Config B (v7x-style): two 'parallel' grid steps so both TensorCores of a
    # v7x chip get work (one sample per step at this tiny batch).
    prep_par = prepare_resnet_block(params, N=N, D=D, H=H, W=W, groups=groups,
                                    eps=eps, skip_scale=skip_scale,
                                    grid_blocks=2)
    out_par = jax.block_until_ready(resnet_block_forward(x_ncdhw, prep_par))

    for name, out in (("fold", out_fold), ("parallel", out_par)):
        assert out.shape == ref.shape, (name, out.shape, ref.shape)
        err = float(jnp.max(jnp.abs(out - ref)))
        # GN statistics are exact f32; the conv matmuls use bf16 operands with
        # f32 accumulation on the MXU (same as XLA's default f32 matmul), while
        # the reference runs at HIGHEST precision -> small residual error.
        assert err < 5e-2, (name, err)

    print("KERNEL_OK")
</pallas_src>

<mosaic_0001>
module attributes {stable_mosaic.version = 11 : i64} {
  func.func @kernel(%arg0: i32, %arg1: memref<1x8x1024xf32, #tpu.memory_space<vmem>>, %arg2: memref<27x1024xf32, #tpu.memory_space<vmem>>, %arg3: memref<8x216xbf16, #tpu.memory_space<vmem>>, %arg4: memref<8x224xbf16, #tpu.memory_space<vmem>>, %arg5: memref<8x4xf32, #tpu.memory_space<vmem>>, %arg6: memref<8x6xf32, #tpu.memory_space<vmem>>, %arg7: memref<1x8x1024xf32, #tpu.memory_space<vmem>>, %arg8: memref<224x1024xbf16, #tpu.memory_space<vmem>>) attributes {dimension_semantics = [#tpu.dimension_semantics<parallel>], iteration_bounds = array<i64: 1>, scalar_prefetch = 0 : i64, scratch_operands = 1 : i64, tpu.core_type = #tpu.core_type<tc>, window_params = [{transform_indices = @transform_0, window_bounds = array<i64: 1, 8, 1024>}, {pipeline_mode = #tpu.pipeline_mode<synchronous>, transform_indices = @transform_1, window_bounds = array<i64: 27, 1024>}, {pipeline_mode = #tpu.pipeline_mode<synchronous>, transform_indices = @transform_2, window_bounds = array<i64: 8, 216>}, {pipeline_mode = #tpu.pipeline_mode<synchronous>, transform_indices = @transform_3, window_bounds = array<i64: 8, 224>}, {pipeline_mode = #tpu.pipeline_mode<synchronous>, transform_indices = @transform_4, window_bounds = array<i64: 8, 4>}, {pipeline_mode = #tpu.pipeline_mode<synchronous>, transform_indices = @transform_5, window_bounds = array<i64: 8, 6>}, {transform_indices = @transform_6, window_bounds = array<i64: 1, 8, 1024>}]} {
    %c0 = arith.constant 0 : index
    %c0_0 = arith.constant 0 : index
    %c0_1 = arith.constant 0 : index
    %0 = vector.load %arg1[%c0, %c0_0, %c0_1] : memref<1x8x1024xf32, #tpu.memory_space<vmem>>, vector<1x8x1024xf32>
    %1 = vector.shape_cast %0 : vector<1x8x1024xf32> to vector<8x1024xf32>
    %c0_2 = arith.constant 0 : index
    %c0_3 = arith.constant 0 : index
    %2 = vector.load %arg2[%c0_2, %c0_3] : memref<27x1024xf32, #tpu.memory_space<vmem>>, vector<27x1024xf32>
    %c0_4 = arith.constant 0 : index
    %c0_5 = arith.constant 0 : index
    %3 = vector.load %arg5[%c0_4, %c0_5] : memref<8x4xf32, #tpu.memory_space<vmem>>, vector<8x4xf32>
    %c0_6 = arith.constant 0 : index
    %c0_7 = arith.constant 0 : index
    %4 = vector.load %arg6[%c0_6, %c0_7] : memref<8x6xf32, #tpu.memory_space<vmem>>, vector<8x6xf32>
    %5 = vector.extract_strided_slice %3 {offsets = [0, 0], sizes = [8, 1], strides = [1, 1]} : vector<8x4xf32> to vector<8x1xf32>
    %6 = vector.extract_strided_slice %3 {offsets = [0, 1], sizes = [8, 1], strides = [1, 1]} : vector<8x4xf32> to vector<8x1xf32>
    %7 = vector.extract_strided_slice %3 {offsets = [0, 2], sizes = [8, 2], strides = [1, 1]} : vector<8x4xf32> to vector<8x2xf32>
    %8 = vector.extract_strided_slice %4 {offsets = [0, 0], sizes = [8, 1], strides = [1, 1]} : vector<8x6xf32> to vector<8x1xf32>
    %9 = vector.extract_strided_slice %4 {offsets = [0, 1], sizes = [8, 1], strides = [1, 1]} : vector<8x6xf32> to vector<8x1xf32>
    %10 = vector.extract_strided_slice %4 {offsets = [0, 2], sizes = [8, 1], strides = [1, 1]} : vector<8x6xf32> to vector<8x1xf32>
    %11 = vector.extract_strided_slice %4 {offsets = [0, 3], sizes = [8, 1], strides = [1, 1]} : vector<8x6xf32> to vector<8x1xf32>
    %12 = vector.extract_strided_slice %4 {offsets = [0, 4], sizes = [8, 2], strides = [1, 1]} : vector<8x6xf32> to vector<8x2xf32>
    %13 = vector.extract_strided_slice %1 {offsets = [0, 0], sizes = [8, 512], strides = [1, 1]} : vector<8x1024xf32> to vector<8x512xf32>
    %cst = arith.constant dense<0.000000e+00> : vector<8xf32>
    %14 = vector.multi_reduction <add>, %13, %cst [1] : vector<8x512xf32> to vector<8xf32>
    %15 = vector.shape_cast %14 : vector<8xf32> to vector<8x1xf32>
    %16 = arith.mulf %13, %13 : vector<8x512xf32>
    %cst_8 = arith.constant dense<0.000000e+00> : vector<8xf32>
    %17 = vector.multi_reduction <add>, %16, %cst_8 [1] : vector<8x512xf32> to vector<8xf32>
    %18 = vector.shape_cast %17 : vector<8xf32> to vector<8x1xf32>
    %cst_9 = arith.constant 0.000000e+00 : f32
    %19 = vector.broadcast %cst_9 : f32 to vector<8x1xf32>
    %cst_10 = arith.constant 0.000000e+00 : f32
    %20 = vector.broadcast %cst_10 : f32 to vector<8x1xf32>
    %21 = vector.extract_strided_slice %7 {offsets = [0, 0], sizes = [8, 1], strides = [1, 1]} : vector<8x2xf32> to vector<8x1xf32>
    %22 = arith.mulf %15, %21 : vector<8x1xf32>
    %cst_11 = arith.constant dense<0.000000e+00> : vector<1xf32>
    %23 = vector.multi_reduction <add>, %22, %cst_11 [0] : vector<8x1xf32> to vector<1xf32>
    %24 = vector.shape_cast %23 : vector<1xf32> to vector<1x1xf32>
    %25 = vector.broadcast %24 : vector<1x1xf32> to vector<8x1xf32>
    %26 = arith.mulf %21, %25 : vector<8x1xf32>
    %27 = arith.addf %19, %26 : vector<8x1xf32>
    %28 = arith.mulf %18, %21 : vector<8x1xf32>
    %cst_12 = arith.constant dense<0.000000e+00> : vector<1xf32>
    %29 = vector.multi_reduction <add>, %28, %cst_12 [0] : vector<8x1xf32> to vector<1xf32>
    %30 = vector.shape_cast %29 : vector<1xf32> to vector<1x1xf32>
    %31 = vector.broadcast %30 : vector<1x1xf32> to vector<8x1xf32>
    %32 = arith.mulf %21, %31 : vector<8x1xf32>
    %33 = arith.addf %20, %32 : vector<8x1xf32>
    %34 = vector.extract_strided_slice %7 {offsets = [0, 1], sizes = [8, 1], strides = [1, 1]} : vector<8x2xf32> to vector<8x1xf32>
    %35 = arith.mulf %15, %34 : vector<8x1xf32>
    %cst_13 = arith.constant dense<0.000000e+00> : vector<1xf32>
    %36 = vector.multi_reduction <add>, %35, %cst_13 [0] : vector<8x1xf32> to vector<1xf32>
    %37 = vector.shape_cast %36 : vector<1xf32> to vector<1x1xf32>
    %38 = vector.broadcast %37 : vector<1x1xf32> to vector<8x1xf32>
    %39 = arith.mulf %34, %38 : vector<8x1xf32>
    %40 = arith.addf %27, %39 : vector<8x1xf32>
    %41 = arith.mulf %18, %34 : vector<8x1xf32>
    %cst_14 = arith.constant dense<0.000000e+00> : vector<1xf32>
    %42 = vector.multi_reduction <add>, %41, %cst_14 [0] : vector<8x1xf32> to vector<1xf32>
    %43 = vector.shape_cast %42 : vector<1xf32> to vector<1x1xf32>
    %44 = vector.broadcast %43 : vector<1x1xf32> to vector<8x1xf32>
    %45 = arith.mulf %34, %44 : vector<8x1xf32>
    %46 = arith.addf %33, %45 : vector<8x1xf32>
    %cst_15 = arith.constant 9.765625E-4 : f32
    %47 = vector.broadcast %cst_15 : f32 to vector<8x1xf32>
    %48 = arith.mulf %40, %47 : vector<8x1xf32>
    %cst_16 = arith.constant 9.765625E-4 : f32
    %49 = vector.broadcast %cst_16 : f32 to vector<8x1xf32>
    %50 = arith.mulf %46, %49 : vector<8x1xf32>
    %51 = arith.mulf %48, %48 : vector<8x1xf32>
    %52 = arith.subf %50, %51 : vector<8x1xf32>
    %cst_17 = arith.constant 9.99999974E-6 : f32
    %53 = vector.broadcast %cst_17 : f32 to vector<8x1xf32>
    %54 = arith.addf %52, %53 : vector<8x1xf32>
    %55 = math.rsqrt %54 : vector<8x1xf32>
    %56 = vector.broadcast %48 : vector<8x1xf32> to vector<8x512xf32>
    %57 = arith.subf %13, %56 : vector<8x512xf32>
    %58 = arith.mulf %55, %5 : vector<8x1xf32>
    %59 = vector.broadcast %58 : vector<8x1xf32> to vector<8x512xf32>
    %60 = arith.mulf %57, %59 : vector<8x512xf32>
    %61 = vector.broadcast %6 : vector<8x1xf32> to vector<8x512xf32>
    %62 = arith.addf %60, %61 : vector<8x512xf32>
    %63 = vector.extract_strided_slice %1 {offsets = [0, 512], sizes = [8, 512], strides = [1, 1]} : vector<8x1024xf32> to vector<8x512xf32>
    %cst_18 = arith.constant dense<0.000000e+00> : vector<8xf32>
    %64 = vector.multi_reduction <add>, %63, %cst_18 [1] : vector<8x512xf32> to vector<8xf32>
    %65 = vector.shape_cast %64 : vector<8xf32> to vector<8x1xf32>
    %66 = arith.mulf %63, %63 : vector<8x512xf32>
    %cst_19 = arith.constant dense<0.000000e+00> : vector<8xf32>
    %67 = vector.multi_reduction <add>, %66, %cst_19 [1] : vector<8x512xf32> to vector<8xf32>
    %68 = vector.shape_cast %67 : vector<8xf32> to vector<8x1xf32>
    %cst_20 = arith.constant 0.000000e+00 : f32
    %69 = vector.broadcast %cst_20 : f32 to vector<8x1xf32>
    %cst_21 = arith.constant 0.000000e+00 : f32
    %70 = vector.broadcast %cst_21 : f32 to vector<8x1xf32>
    %71 = vector.extract_strided_slice %7 {offsets = [0, 0], sizes = [8, 1], strides = [1, 1]} : vector<8x2xf32> to vector<8x1xf32>
    %72 = arith.mulf %65, %71 : vector<8x1xf32>
    %cst_22 = arith.constant dense<0.000000e+00> : vector<1xf32>
    %73 = vector.multi_reduction <add>, %72, %cst_22 [0] : vector<8x1xf32> to vector<1xf32>
    %74 = vector.shape_cast %73 : vector<1xf32> to vector<1x1xf32>
    %75 = vector.broadcast %74 : vector<1x1xf32> to vector<8x1xf32>
    %76 = arith.mulf %71, %75 : vector<8x1xf32>
    %77 = arith.addf %69, %76 : vector<8x1xf32>
    %78 = arith.mulf %68, %71 : vector<8x1xf32>
    %cst_23 = arith.constant dense<0.000000e+00> : vector<1xf32>
    %79 = vector.multi_reduction <add>, %78, %cst_23 [0] : vector<8x1xf32> to vector<1xf32>
    %80 = vector.shape_cast %79 : vector<1xf32> to vector<1x1xf32>
    %81 = vector.broadcast %80 : vector<1x1xf32> to vector<8x1xf32>
    %82 = arith.mulf %71, %81 : vector<8x1xf32>
    %83 = arith.addf %70, %82 : vector<8x1xf32>
    %84 = vector.extract_strided_slice %7 {offsets = [0, 1], sizes = [8, 1], strides = [1, 1]} : vector<8x2xf32> to vector<8x1xf32>
    %85 = arith.mulf %65, %84 : vector<8x1xf32>
    %cst_24 = arith.constant dense<0.000000e+00> : vector<1xf32>
    %86 = vector.multi_reduction <add>, %85, %cst_24 [0] : vector<8x1xf32> to vector<1xf32>
    %87 = vector.shape_cast %86 : vector<1xf32> to vector<1x1xf32>
    %88 = vector.broadcast %87 : vector<1x1xf32> to vector<8x1xf32>
    %89 = arith.mulf %84, %88 : vector<8x1xf32>
    %90 = arith.addf %77, %89 : vector<8x1xf32>
    %91 = arith.mulf %68, %84 : vector<8x1xf32>
    %cst_25 = arith.constant dense<0.000000e+00> : vector<1xf32>
    %92 = vector.multi_reduction <add>, %91, %cst_25 [0] : vector<8x1xf32> to vector<1xf32>
    %93 = vector.shape_cast %92 : vector<1xf32> to vector<1x1xf32>
    %94 = vector.broadcast %93 : vector<1x1xf32> to vector<8x1xf32>
    %95 = arith.mulf %84, %94 : vector<8x1xf32>
    %96 = arith.addf %83, %95 : vector<8x1xf32>
    %cst_26 = arith.constant 9.765625E-4 : f32
    %97 = vector.broadcast %cst_26 : f32 to vector<8x1xf32>
    %98 = arith.mulf %90, %97 : vector<8x1xf32>
    %cst_27 = arith.constant 9.765625E-4 : f32
    %99 = vector.broadcast %cst_27 : f32 to vector<8x1xf32>
    %100 = arith.mulf %96, %99 : vector<8x1xf32>
    %101 = arith.mulf %98, %98 : vector<8x1xf32>
    %102 = arith.subf %100, %101 : vector<8x1xf32>
    %cst_28 = arith.constant 9.99999974E-6 : f32
    %103 = vector.broadcast %cst_28 : f32 to vector<8x1xf32>
    %104 = arith.addf %102, %103 : vector<8x1xf32>
    %105 = math.rsqrt %104 : vector<8x1xf32>
    %106 = vector.broadcast %98 : vector<8x1xf32> to vector<8x512xf32>
    %107 = arith.subf %63, %106 : vector<8x512xf32>
    %108 = arith.mulf %105, %5 : vector<8x1xf32>
    %109 = vector.broadcast %108 : vector<8x1xf32> to vector<8x512xf32>
    %110 = arith.mulf %107, %109 : vector<8x512xf32>
    %111 = vector.broadcast %6 : vector<8x1xf32> to vector<8x512xf32>
    %112 = arith.addf %110, %111 : vector<8x512xf32>
    %113 = tpu.concatenate %62, %112 in 1 : vector<8x512xf32>, vector<8x512xf32> -> vector<8x1024xf32>
    %114 = arith.negf %113 : vector<8x1024xf32>
    %115 = math.exp %114 : vector<8x1024xf32>
    %cst_29 = arith.constant 1.000000e+00 : f32
    %116 = vector.broadcast %cst_29 : f32 to vector<8x1024xf32>
    %117 = arith.addf %116, %115 : vector<8x1024xf32>
    %118 = arith.divf %116, %117 : vector<8x1024xf32>
    %119 = arith.mulf %113, %118 : vector<8x1024xf32>
    %c73_i32 = arith.constant 73 : i32
    %120 = tpu.dynamic_rotate %119 by %c73_i32 dim 1 : vector<8x1024xf32>, i32 -> vector<8x1024xf32>
    %121 = vector.extract_strided_slice %2 {offsets = [0, 0], sizes = [1, 1024], strides = [1, 1]} : vector<27x1024xf32> to vector<1x1024xf32>
    %122 = vector.broadcast %121 : vector<1x1024xf32> to vector<8x1024xf32>
    %123 = arith.mulf %120, %122 : vector<8x1024xf32>
    %124 = arith.truncf %123 : vector<8x1024xf32> to vector<8x1024xbf16>
    %c0_30 = arith.constant 0 : index
    %c0_31 = arith.constant 0 : index
    %125 = vector.load %arg8[%c0_30, %c0_31] : memref<224x1024xbf16, #tpu.memory_space<vmem>>, vector<8x1024xbf16>
    tpu.vector_store %arg8[%c0_30, %c0_31], %124 {strides = array<i32>} : memref<224x1024xbf16, #tpu.memory_space<vmem>>, vector<8x1024xbf16>,
    %c72_i32 = arith.constant 72 : i32
    %126 = tpu.dynamic_rotate %119 by %c72_i32 dim 1 : vector<8x1024xf32>, i32 -> vector<8x1024xf32>
    %127 = vector.extract_strided_slice %2 {offsets = [1, 0], sizes = [1, 1024], strides = [1, 1]} : vector<27x1024xf32> to vector<1x1024xf32>
    %128 = vector.broadcast %127 : vector<1x1024xf32> to vector<8x1024xf32>
    %129 = arith.mulf %126, %128 : vector<8x1024xf32>
    %130 = arith.truncf %129 : vector<8x1024xf32> to vector<8x1024xbf16>
    %c8 = arith.constant 8 : index
    %c0_32 = arith.constant 0 : index
    %131 = vector.load %arg8[%c8, %c0_32] : memref<224x1024xbf16, #tpu.memory_space<vmem>>, vector<8x1024xbf16>
    tpu.vector_store %arg8[%c8, %c0_32], %130 {strides = array<i32>} : memref<224x1024xbf16, #tpu.memory_space<vmem>>, vector<8x1024xbf16>,
    %c71_i32 = arith.constant 71 : i32
    %132 = tpu.dynamic_rotate %119 by %c71_i32 dim 1 : vector<8x1024xf32>, i32 -> vector<8x1024xf32>
    %133 = vector.extract_strided_slice %2 {offsets = [2, 0], sizes = [1, 1024], strides = [1, 1]} : vector<27x1024xf32> to vector<1x1024xf32>
    %134 = vector.broadcast %133 : vector<1x1024xf32> to vector<8x1024xf32>
    %135 = arith.mulf %132, %134 : vector<8x1024xf32>
    %136 = arith.truncf %135 : vector<8x1024xf32> to vector<8x1024xbf16>
    %c16 = arith.constant 16 : index
    %c0_33 = arith.constant 0 : index
    %137 = vector.load %arg8[%c16, %c0_33] : memref<224x1024xbf16, #tpu.memory_space<vmem>>, vector<8x1024xbf16>
    tpu.vector_store %arg8[%c16, %c0_33], %136 {strides = array<i32>} : memref<224x1024xbf16, #tpu.memory_space<vmem>>, vector<8x1024xbf16>,
    %c65_i32 = arith.constant 65 : i32
    %138 = tpu.dynamic_rotate %119 by %c65_i32 dim 1 : vector<8x1024xf32>, i32 -> vector<8x1024xf32>
    %139 = vector.extract_strided_slice %2 {offsets = [3, 0], sizes = [1, 1024], strides = [1, 1]} : vector<27x1024xf32> to vector<1x1024xf32>
    %140 = vector.broadcast %139 : vector<1x1024xf32> to vector<8x1024xf32>
    %141 = arith.mulf %138, %140 : vector<8x1024xf32>
    %142 = arith.truncf %141 : vector<8x1024xf32> to vector<8x1024xbf16>
    %c24 = arith.constant 24 : index
    %c0_34 = arith.constant 0 : index
    %143 = vector.load %arg8[%c24, %c0_34] : memref<224x1024xbf16, #tpu.memory_space<vmem>>, vector<8x1024xbf16>
    tpu.vector_store %arg8[%c24, %c0_34], %142 {strides = array<i32>} : memref<224x1024xbf16, #tpu.memory_space<vmem>>, vector<8x1024xbf16>,
    %c64_i32 = arith.constant 64 : i32
    %144 = tpu.dynamic_rotate %119 by %c64_i32 dim 1 : vector<8x1024xf32>, i32 -> vector<8x1024xf32>
    %145 = vector.extract_strided_slice %2 {offsets = [4, 0], sizes = [1, 1024], strides = [1, 1]} : vector<27x1024xf32> to vector<1x1024xf32>
    %146 = vector.broadcast %145 : vector<1x1024xf32> to vector<8x1024xf32>
    %147 = arith.mulf %144, %146 : vector<8x1024xf32>
    %148 = arith.truncf %147 : vector<8x1024xf32> to vector<8x1024xbf16>
    %c32 = arith.constant 32 : index
    %c0_35 = arith.constant 0 : index
    %149 = vector.load %arg8[%c32, %c0_35] : memref<224x1024xbf16, #tpu.memory_space<vmem>>, vector<8x1024xbf16>
    tpu.vector_store %arg8[%c32, %c0_35], %148 {strides = array<i32>} : memref<224x1024xbf16, #tpu.memory_space<vmem>>, vector<8x1024xbf16>,
    %c63_i32 = arith.constant 63 : i32
    %150 = tpu.dynamic_rotate %119 by %c63_i32 dim 1 : vector<8x1024xf32>, i32 -> vector<8x1024xf32>
    %151 = vector.extract_strided_slice %2 {offsets = [5, 0], sizes = [1, 1024], strides = [1, 1]} : vector<27x1024xf32> to vector<1x1024xf32>
    %152 = vector.broadcast %151 : vector<1x1024xf32> to vector<8x1024xf32>
    %153 = arith.mulf %150, %152 : vector<8x1024xf32>
    %154 = arith.truncf %153 : vector<8x1024xf32> to vector<8x1024xbf16>
    %c40 = arith.constant 40 : index
    %c0_36 = arith.constant 0 : index
    %155 = vector.load %arg8[%c40, %c0_36] : memref<224x1024xbf16, #tpu.memory_space<vmem>>, vector<8x1024xbf16>
    tpu.vector_store %arg8[%c40, %c0_36], %154 {strides = array<i32>} : memref<224x1024xbf16, #tpu.memory_space<vmem>>, vector<8x1024xbf16>,
    %c57_i32 = arith.constant 57 : i32
    %156 = tpu.dynamic_rotate %119 by %c57_i32 dim 1 : vector<8x1024xf32>, i32 -> vector<8x1024xf32>
    %157 = vector.extract_strided_slice %2 {offsets = [6, 0], sizes = [1, 1024], strides = [1, 1]} : vector<27x1024xf32> to vector<1x1024xf32>
    %158 = vector.broadcast %157 : vector<1x1024xf32> to vector<8x1024xf32>
    %159 = arith.mulf %156, %158 : vector<8x1024xf32>
    %160 = arith.truncf %159 : vector<8x1024xf32> to vector<8x1024xbf16>
    %c48 = arith.constant 48 : index
    %c0_37 = arith.constant 0 : index
    %161 = vector.load %arg8[%c48, %c0_37] : memref<224x1024xbf16, #tpu.memory_space<vmem>>, vector<8x1024xbf16>
    tpu.vector_store %arg8[%c48, %c0_37], %160 {strides = array<i32>} : memref<224x1024xbf16, #tpu.memory_space<vmem>>, vector<8x1024xbf16>,
    %c56_i32 = arith.constant 56 : i32
    %162 = tpu.dynamic_rotate %119 by %c56_i32 dim 1 : vector<8x1024xf32>, i32 -> vector<8x1024xf32>
    %163 = vector.extract_strided_slice %2 {offsets = [7, 0], sizes = [1, 1024], strides = [1, 1]} : vector<27x1024xf32> to vector<1x1024xf32>
    %164 = vector.broadcast %163 : vector<1x1024xf32> to vector<8x1024xf32>
    %165 = arith.mulf %162, %164 : vector<8x1024xf32>
    %166 = arith.truncf %165 : vector<8x1024xf32> to vector<8x1024xbf16>
    %c56 = arith.constant 56 : index
    %c0_38 = arith.constant 0 : index
    %167 = vector.load %arg8[%c56, %c0_38] : memref<224x1024xbf16, #tpu.memory_space<vmem>>, vector<8x1024xbf16>
    tpu.vector_store %arg8[%c56, %c0_38], %166 {strides = array<i32>} : memref<224x1024xbf16, #tpu.memory_space<vmem>>, vector<8x1024xbf16>,
    %c55_i32 = arith.constant 55 : i32
    %168 = tpu.dynamic_rotate %119 by %c55_i32 dim 1 : vector<8x1024xf32>, i32 -> vector<8x1024xf32>
    %169 = vector.extract_strided_slice %2 {offsets = [8, 0], sizes = [1, 1024], strides = [1, 1]} : vector<27x1024xf32> to vector<1x1024xf32>
    %170 = vector.broadcast %169 : vector<1x1024xf32> to vector<8x1024xf32>
    %171 = arith.mulf %168, %170 : vector<8x1024xf32>
    %172 = arith.truncf %171 : vector<8x1024xf32> to vector<8x1024xbf16>
    %c64 = arith.constant 64 : index
    %c0_39 = arith.constant 0 : index
    %173 = vector.load %arg8[%c64, %c0_39] : memref<224x1024xbf16, #tpu.memory_space<vmem>>, vector<8x1024xbf16>
    tpu.vector_store %arg8[%c64, %c0_39], %172 {strides = array<i32>} : memref<224x1024xbf16, #tpu.memory_space<vmem>>, vector<8x1024xbf16>,
    %c9_i32 = arith.constant 9 : i32
    %174 = tpu.dynamic_rotate %119 by %c9_i32 dim 1 : vector<8x1024xf32>, i32 -> vector<8x1024xf32>
    %175 = vector.extract_strided_slice %2 {offsets = [9, 0], sizes = [1, 1024], strides = [1, 1]} : vector<27x1024xf32> to vector<1x1024xf32>
    %176 = vector.broadcast %175 : vector<1x1024xf32> to vector<8x1024xf32>
    %177 = arith.mulf %174, %176 : vector<8x1024xf32>
    %178 = arith.truncf %177 : vector<8x1024xf32> to vector<8x1024xbf16>
    %c72 = arith.constant 72 : index
    %c0_40 = arith.constant 0 : index
    %179 = vector.load %arg8[%c72, %c0_40] : memref<224x1024xbf16, #tpu.memory_space<vmem>>, vector<8x1024xbf16>
    tpu.vector_store %arg8[%c72, %c0_40], %178 {strides = array<i32>} : memref<224x1024xbf16, #tpu.memory_space<vmem>>, vector<8x1024xbf16>,
    %c8_i32 = arith.constant 8 : i32
    %180 = tpu.dynamic_rotate %119 by %c8_i32 dim 1 : vector<8x1024xf32>, i32 -> vector<8x1024xf32>
    %181 = vector.extract_strided_slice %2 {offsets = [10, 0], sizes = [1, 1024], strides = [1, 1]} : vector<27x1024xf32> to vector<1x1024xf32>
    %182 = vector.broadcast %181 : vector<1x1024xf32> to vector<8x1024xf32>
    %183 = arith.mulf %180, %182 : vector<8x1024xf32>
    %184 = arith.truncf %183 : vector<8x1024xf32> to vector<8x1024xbf16>
    %c80 = arith.constant 80 : index
    %c0_41 = arith.constant 0 : index
    %185 = vector.load %arg8[%c80, %c0_41] : memref<224x1024xbf16, #tpu.memory_space<vmem>>, vector<8x1024xbf16>
    tpu.vector_store %arg8[%c80, %c0_41], %184 {strides = array<i32>} : memref<224x1024xbf16, #tpu.memory_space<vmem>>, vector<8x1024xbf16>,
    %c7_i32 = arith.constant 7 : i32
    %186 = tpu.dynamic_rotate %119 by %c7_i32 dim 1 : vector<8x1024xf32>, i32 -> vector<8x1024xf32>
    %187 = vector.extract_strided_slice %2 {offsets = [11, 0], sizes = [1, 1024], strides = [1, 1]} : vector<27x1024xf32> to vector<1x1024xf32>
    %188 = vector.broadcast %187 : vector<1x1024xf32> to vector<8x1024xf32>
    %189 = arith.mulf %186, %188 : vector<8x1024xf32>
    %190 = arith.truncf %189 : vector<8x1024xf32> to vector<8x1024xbf16>
    %c88 = arith.constant 88 : index
    %c0_42 = arith.constant 0 : index
    %191 = vector.load %arg8[%c88, %c0_42] : memref<224x1024xbf16, #tpu.memory_space<vmem>>, vector<8x1024xbf16>
    tpu.vector_store %arg8[%c88, %c0_42], %190 {strides = array<i32>} : memref<224x1024xbf16, #tpu.memory_space<vmem>>, vector<8x1024xbf16>,
    %c1_i32 = arith.constant 1 : i32
    %192 = tpu.dynamic_rotate %119 by %c1_i32 dim 1 : vector<8x1024xf32>, i32 -> vector<8x1024xf32>
    %193 = vector.extract_strided_slice %2 {offsets = [12, 0], sizes = [1, 1024], strides = [1, 1]} : vector<27x1024xf32> to vector<1x1024xf32>
    %194 = vector.broadcast %193 : vector<1x1024xf32> to vector<8x1024xf32>
    %195 = arith.mulf %192, %194 : vector<8x1024xf32>
    %196 = arith.truncf %195 : vector<8x1024xf32> to vector<8x1024xbf16>
    %c96 = arith.constant 96 : index
    %c0_43 = arith.constant 0 : index
    %197 = vector.load %arg8[%c96, %c0_43] : memref<224x1024xbf16, #tpu.memory_space<vmem>>, vector<8x1024xbf16>
    tpu.vector_store %arg8[%c96, %c0_43], %196 {strides = array<i32>} : memref<224x1024xbf16, #tpu.memory_space<vmem>>, vector<8x1024xbf16>,
    %198 = arith.truncf %119 : vector<8x1024xf32> to vector<8x1024xbf16>
    %c104 = arith.constant 104 : index
    %c0_44 = arith.constant 0 : index
    %199 = vector.load %arg8[%c104, %c0_44] : memref<224x1024xbf16, #tpu.memory_space<vmem>>, vector<8x1024xbf16>
    tpu.vector_store %arg8[%c104, %c0_44], %198 {strides = array<i32>} : memref<224x1024xbf16, #tpu.memory_space<vmem>>, vector<8x1024xbf16>,
    %c1023_i32 = arith.constant 1023 : i32
    %200 = tpu.dynamic_rotate %119 by %c1023_i32 dim 1 : vector<8x1024xf32>, i32 -> vector<8x1024xf32>
    %201 = vector.extract_strided_slice %2 {offsets = [14, 0], sizes = [1, 1024], strides = [1, 1]} : vector<27x1024xf32> to vector<1x1024xf32>
    %202 = vector.broadcast %201 : vector<1x1024xf32> to vector<8x1024xf32>
    %203 = arith.mulf %200, %202 : vector<8x1024xf32>
    %204 = arith.truncf %203 : vector<8x1024xf32> to vector<8x1024xbf16>
    %c112 = arith.constant 112 : index
    %c0_45 = arith.constant 0 : index
    %205 = vector.load %arg8[%c112, %c0_45] : memref<224x1024xbf16, #tpu.memory_space<vmem>>, vector<8x1024xbf16>
    tpu.vector_store %arg8[%c112, %c0_45], %204 {strides = array<i32>} : memref<224x1024xbf16, #tpu.memory_space<vmem>>, vector<8x1024xbf16>,
    %c1017_i32 = arith.constant 1017 : i32
    %206 = tpu.dynamic_rotate %119 by %c1017_i32 dim 1 : vector<8x1024xf32>, i32 -> vector<8x1024xf32>
    %207 = vector.extract_strided_slice %2 {offsets = [15, 0], sizes = [1, 1024], strides = [1, 1]} : vector<27x1024xf32> to vector<1x1024xf32>
    %208 = vector.broadcast %207 : vector<1x1024xf32> to vector<8x1024xf32>
    %209 = arith.mulf %206, %208 : vector<8x1024xf32>
    %210 = arith.truncf %209 : vector<8x1024xf32> to vector<8x1024xbf16>
    %c120 = arith.constant 120 : index
    %c0_46 = arith.constant 0 : index
    %211 = vector.load %arg8[%c120, %c0_46] : memref<224x1024xbf16, #tpu.memory_space<vmem>>, vector<8x1024xbf16>
    tpu.vector_store %arg8[%c120, %c0_46], %210 {strides = array<i32>} : memref<224x1024xbf16, #tpu.memory_space<vmem>>, vector<8x1024xbf16>,
    %c1016_i32 = arith.constant 1016 : i32
    %212 = tpu.dynamic_rotate %119 by %c1016_i32 dim 1 : vector<8x1024xf32>, i32 -> vector<8x1024xf32>
    %213 = vector.extract_strided_slice %2 {offsets = [16, 0], sizes = [1, 1024], strides = [1, 1]} : vector<27x1024xf32> to vector<1x1024xf32>
    %214 = vector.broadcast %213 : vector<1x1024xf32> to vector<8x1024xf32>
    %215 = arith.mulf %212, %214 : vector<8x1024xf32>
    %216 = arith.truncf %215 : vector<8x1024xf32> to vector<8x1024xbf16>
    %c128 = arith.constant 128 : index
    %c0_47 = arith.constant 0 : index
    %217 = vector.load %arg8[%c128, %c0_47] : memref<224x1024xbf16, #tpu.memory_space<vmem>>, vector<8x1024xbf16>
    tpu.vector_store %arg8[%c128, %c0_47], %216 {strides = array<i32>} : memref<224x1024xbf16, #tpu.memory_space<vmem>>, vector<8x1024xbf16>,
    %c1015_i32 = arith.constant 1015 : i32
    %218 = tpu.dynamic_rotate %119 by %c1015_i32 dim 1 : vector<8x1024xf32>, i32 -> vector<8x1024xf32>
    %219 = vector.extract_strided_slice %2 {offsets = [17, 0], sizes = [1, 1024], strides = [1, 1]} : vector<27x1024xf32> to vector<1x1024xf32>
    %220 = vector.broadcast %219 : vector<1x1024xf32> to vector<8x1024xf32>
    %221 = arith.mulf %218, %220 : vector<8x1024xf32>
    %222 = arith.truncf %221 : vector<8x1024xf32> to vector<8x1024xbf16>
    %c136 = arith.constant 136 : index
    %c0_48 = arith.constant 0 : index
    %223 = vector.load %arg8[%c136, %c0_48] : memref<224x1024xbf16, #tpu.memory_space<vmem>>, vector<8x1024xbf16>
    tpu.vector_store %arg8[%c136, %c0_48], %222 {strides = array<i32>} : memref<224x1024xbf16, #tpu.memory_space<vmem>>, vector<8x1024xbf16>,
    %c969_i32 = arith.constant 969 : i32
    %224 = tpu.dynamic_rotate %119 by %c969_i32 dim 1 : vector<8x1024xf32>, i32 -> vector<8x1024xf32>
    %225 = vector.extract_strided_slice %2 {offsets = [18, 0], sizes = [1, 1024], strides = [1, 1]} : vector<27x1024xf32> to vector<1x1024xf32>
    %226 = vector.broadcast %225 : vector<1x1024xf32> to vector<8x1024xf32>
    %227 = arith.mulf %224, %226 : vector<8x1024xf32>
    %228 = arith.truncf %227 : vector<8x1024xf32> to vector<8x1024xbf16>
    %c144 = arith.constant 144 : index
    %c0_49 = arith.constant 0 : index
    %229 = vector.load %arg8[%c144, %c0_49] : memref<224x1024xbf16, #tpu.memory_space<vmem>>, vector<8x1024xbf16>
    tpu.vector_store %arg8[%c144, %c0_49], %228 {strides = array<i32>} : memref<224x1024xbf16, #tpu.memory_space<vmem>>, vector<8x1024xbf16>,
    %c968_i32 = arith.constant 968 : i32
    %230 = tpu.dynamic_rotate %119 by %c968_i32 dim 1 : vector<8x1024xf32>, i32 -> vector<8x1024xf32>
    %231 = vector.extract_strided_slice %2 {offsets = [19, 0], sizes = [1, 1024], strides = [1, 1]} : vector<27x1024xf32> to vector<1x1024xf32>
    %232 = vector.broadcast %231 : vector<1x1024xf32> to vector<8x1024xf32>
    %233 = arith.mulf %230, %232 : vector<8x1024xf32>
    %234 = arith.truncf %233 : vector<8x1024xf32> to vector<8x1024xbf16>
    %c152 = arith.constant 152 : index
    %c0_50 = arith.constant 0 : index
    %235 = vector.load %arg8[%c152, %c0_50] : memref<224x1024xbf16, #tpu.memory_space<vmem>>, vector<8x1024xbf16>
    tpu.vector_store %arg8[%c152, %c0_50], %234 {strides = array<i32>} : memref<224x1024xbf16, #tpu.memory_space<vmem>>, vector<8x1024xbf16>,
    %c967_i32 = arith.constant 967 : i32
    %236 = tpu.dynamic_rotate %119 by %c967_i32 dim 1 : vector<8x1024xf32>, i32 -> vector<8x1024xf32>
    %237 = vector.extract_strided_slice %2 {offsets = [20, 0], sizes = [1, 1024], strides = [1, 1]} : vector<27x1024xf32> to vector<1x1024xf32>
    %238 = vector.broadcast %237 : vector<1x1024xf32> to vector<8x1024xf32>
    %239 = arith.mulf %236, %238 : vector<8x1024xf32>
    %240 = arith.truncf %239 : vector<8x1024xf32> to vector<8x1024xbf16>
    %c160 = arith.constant 160 : index
    %c0_51 = arith.constant 0 : index
    %241 = vector.load %arg8[%c160, %c0_51] : memref<224x1024xbf16, #tpu.memory_space<vmem>>, vector<8x1024xbf16>
    tpu.vector_store %arg8[%c160, %c0_51], %240 {strides = array<i32>} : memref<224x1024xbf16, #tpu.memory_space<vmem>>, vector<8x1024xbf16>,
    %c961_i32 = arith.constant 961 : i32
    %242 = tpu.dynamic_rotate %119 by %c961_i32 dim 1 : vector<8x1024xf32>, i32 -> vector<8x1024xf32>
    %243 = vector.extract_strided_slice %2 {offsets = [21, 0], sizes = [1, 1024], strides = [1, 1]} : vector<27x1024xf32> to vector<1x1024xf32>
    %244 = vector.broadcast %243 : vector<1x1024xf32> to vector<8x1024xf32>
    %245 = arith.mulf %242, %244 : vector<8x1024xf32>
    %246 = arith.truncf %245 : vector<8x1024xf32> to vector<8x1024xbf16>
    %c168 = arith.constant 168 : index
    %c0_52 = arith.constant 0 : index
    %247 = vector.load %arg8[%c168, %c0_52] : memref<224x1024xbf16, #tpu.memory_space<vmem>>, vector<8x1024xbf16>
    tpu.vector_store %arg8[%c168, %c0_52], %246 {strides = array<i32>} : memref<224x1024xbf16, #tpu.memory_space<vmem>>, vector<8x1024xbf16>,
    %c960_i32 = arith.constant 960 : i32
    %248 = tpu.dynamic_rotate %119 by %c960_i32 dim 1 : vector<8x1024xf32>, i32 -> vector<8x1024xf32>
    %249 = vector.extract_strided_slice %2 {offsets = [22, 0], sizes = [1, 1024], strides = [1, 1]} : vector<27x1024xf32> to vector<1x1024xf32>
    %250 = vector.broadcast %249 : vector<1x1024xf32> to vector<8x1024xf32>
    %251 = arith.mulf %248, %250 : vector<8x1024xf32>
    %252 = arith.truncf %251 : vector<8x1024xf32> to vector<8x1024xbf16>
    %c176 = arith.constant 176 : index
    %c0_53 = arith.constant 0 : index
    %253 = vector.load %arg8[%c176, %c0_53] : memref<224x1024xbf16, #tpu.memory_space<vmem>>, vector<8x1024xbf16>
    tpu.vector_store %arg8[%c176, %c0_53], %252 {strides = array<i32>} : memref<224x1024xbf16, #tpu.memory_space<vmem>>, vector<8x1024xbf16>,
    %c959_i32 = arith.constant 959 : i32
    %254 = tpu.dynamic_rotate %119 by %c959_i32 dim 1 : vector<8x1024xf32>, i32 -> vector<8x1024xf32>
    %255 = vector.extract_strided_slice %2 {offsets = [23, 0], sizes = [1, 1024], strides = [1, 1]} : vector<27x1024xf32> to vector<1x1024xf32>
    %256 = vector.broadcast %255 : vector<1x1024xf32> to vector<8x1024xf32>
    %257 = arith.mulf %254, %256 : vector<8x1024xf32>
    %258 = arith.truncf %257 : vector<8x1024xf32> to vector<8x1024xbf16>
    %c184 = arith.constant 184 : index
    %c0_54 = arith.constant 0 : index
    %259 = vector.load %arg8[%c184, %c0_54] : memref<224x1024xbf16, #tpu.memory_space<vmem>>, vector<8x1024xbf16>
    tpu.vector_store %arg8[%c184, %c0_54], %258 {strides = array<i32>} : memref<224x1024xbf16, #tpu.memory_space<vmem>>, vector<8x1024xbf16>,
    %c953_i32 = arith.constant 953 : i32
    %260 = tpu.dynamic_rotate %119 by %c953_i32 dim 1 : vector<8x1024xf32>, i32 -> vector<8x1024xf32>
    %261 = vector.extract_strided_slice %2 {offsets = [24, 0], sizes = [1, 1024], strides = [1, 1]} : vector<27x1024xf32> to vector<1x1024xf32>
    %262 = vector.broadcast %261 : vector<1x1024xf32> to vector<8x1024xf32>
    %263 = arith.mulf %260, %262 : vector<8x1024xf32>
    %264 = arith.truncf %263 : vector<8x1024xf32> to vector<8x1024xbf16>
    %c192 = arith.constant 192 : index
    %c0_55 = arith.constant 0 : index
    %265 = vector.load %arg8[%c192, %c0_55] : memref<224x1024xbf16, #tpu.memory_space<vmem>>, vector<8x1024xbf16>
    tpu.vector_store %arg8[%c192, %c0_55], %264 {strides = array<i32>} : memref<224x1024xbf16, #tpu.memory_space<vmem>>, vector<8x1024xbf16>,
    %c952_i32 = arith.constant 952 : i32
    %266 = tpu.dynamic_rotate %119 by %c952_i32 dim 1 : vector<8x1024xf32>, i32 -> vector<8x1024xf32>
    %267 = vector.extract_strided_slice %2 {offsets = [25, 0], sizes = [1, 1024], strides = [1, 1]} : vector<27x1024xf32> to vector<1x1024xf32>
    %268 = vector.broadcast %267 : vector<1x1024xf32> to vector<8x1024xf32>
    %269 = arith.mulf %266, %268 : vector<8x1024xf32>
    %270 = arith.truncf %269 : vector<8x1024xf32> to vector<8x1024xbf16>
    %c200 = arith.constant 200 : index
    %c0_56 = arith.constant 0 : index
    %271 = vector.load %arg8[%c200, %c0_56] : memref<224x1024xbf16, #tpu.memory_space<vmem>>, vector<8x1024xbf16>
    tpu.vector_store %arg8[%c200, %c0_56], %270 {strides = array<i32>} : memref<224x1024xbf16, #tpu.memory_space<vmem>>, vector<8x1024xbf16>,
    %c951_i32 = arith.constant 951 : i32
    %272 = tpu.dynamic_rotate %119 by %c951_i32 dim 1 : vector<8x1024xf32>, i32 -> vector<8x1024xf32>
    %273 = vector.extract_strided_slice %2 {offsets = [26, 0], sizes = [1, 1024], strides = [1, 1]} : vector<27x1024xf32> to vector<1x1024xf32>
    %274 = vector.broadcast %273 : vector<1x1024xf32> to vector<8x1024xf32>
    %275 = arith.mulf %272, %274 : vector<8x1024xf32>
    %276 = arith.truncf %275 : vector<8x1024xf32> to vector<8x1024xbf16>
    %c208 = arith.constant 208 : index
    %c0_57 = arith.constant 0 : index
    %277 = vector.load %arg8[%c208, %c0_57] : memref<224x1024xbf16, #tpu.memory_space<vmem>>, vector<8x1024xbf16>
    tpu.vector_store %arg8[%c208, %c0_57], %276 {strides = array<i32>} : memref<224x1024xbf16, #tpu.memory_space<vmem>>, vector<8x1024xbf16>,
    %c0_58 = arith.constant 0 : index
    %c0_59 = arith.constant 0 : index
    %278 = vector.load %arg3[%c0_58, %c0_59] : memref<8x216xbf16, #tpu.memory_space<vmem>>, vector<8x216xbf16>
    %c0_60 = arith.constant 0 : index
    %c0_61 = arith.constant 0 : index
    %279 = vector.load %arg8[%c0_60, %c0_61] : memref<224x1024xbf16, #tpu.memory_space<vmem>>, vector<216x1024xbf16>
    %cst_62 = arith.constant dense<0.000000e+00> : vector<8x1024xf32>
    %280 = tpu.matmul %278, %279, %cst_62 {dimension_numbers = #tpu.dot_dimension_numbers<[1], [0], [0], [1], [0, 0, 1, 1], [], []>} : vector<8x216xbf16>, vector<216x1024xbf16>, vector<8x1024xf32> -> vector<8x1024xf32>
    %281 = vector.broadcast %10 : vector<8x1xf32> to vector<8x1024xf32>
    %282 = arith.addf %280, %281 : vector<8x1024xf32>
    %283 = vector.extract_strided_slice %282 {offsets = [0, 0], sizes = [8, 512], strides = [1, 1]} : vector<8x1024xf32> to vector<8x512xf32>
    %cst_63 = arith.constant dense<0.000000e+00> : vector<8xf32>
    %284 = vector.multi_reduction <add>, %283, %cst_63 [1] : vector<8x512xf32> to vector<8xf32>
    %285 = vector.shape_cast %284 : vector<8xf32> to vector<8x1xf32>
    %286 = arith.mulf %283, %283 : vector<8x512xf32>
    %cst_64 = arith.constant dense<0.000000e+00> : vector<8xf32>
    %287 = vector.multi_reduction <add>, %286, %cst_64 [1] : vector<8x512xf32> to vector<8xf32>
    %288 = vector.shape_cast %287 : vector<8xf32> to vector<8x1xf32>
    %cst_65 = arith.constant 0.000000e+00 : f32
    %289 = vector.broadcast %cst_65 : f32 to vector<8x1xf32>
    %cst_66 = arith.constant 0.000000e+00 : f32
    %290 = vector.broadcast %cst_66 : f32 to vector<8x1xf32>
    %291 = vector.extract_strided_slice %12 {offsets = [0, 0], sizes = [8, 1], strides = [1, 1]} : vector<8x2xf32> to vector<8x1xf32>
    %292 = arith.mulf %285, %291 : vector<8x1xf32>
    %cst_67 = arith.constant dense<0.000000e+00> : vector<1xf32>
    %293 = vector.multi_reduction <add>, %292, %cst_67 [0] : vector<8x1xf32> to vector<1xf32>
    %294 = vector.shape_cast %293 : vector<1xf32> to vector<1x1xf32>
    %295 = vector.broadcast %294 : vector<1x1xf32> to vector<8x1xf32>
    %296 = arith.mulf %291, %295 : vector<8x1xf32>
    %297 = arith.addf %289, %296 : vector<8x1xf32>
    %298 = arith.mulf %288, %291 : vector<8x1xf32>
    %cst_68 = arith.constant dense<0.000000e+00> : vector<1xf32>
    %299 = vector.multi_reduction <add>, %298, %cst_68 [0] : vector<8x1xf32> to vector<1xf32>
    %300 = vector.shape_cast %299 : vector<1xf32> to vector<1x1xf32>
    %301 = vector.broadcast %300 : vector<1x1xf32> to vector<8x1xf32>
    %302 = arith.mulf %291, %301 : vector<8x1xf32>
    %303 = arith.addf %290, %302 : vector<8x1xf32>
    %304 = vector.extract_strided_slice %12 {offsets = [0, 1], sizes = [8, 1], strides = [1, 1]} : vector<8x2xf32> to vector<8x1xf32>
    %305 = arith.mulf %285, %304 : vector<8x1xf32>
    %cst_69 = arith.constant dense<0.000000e+00> : vector<1xf32>
    %306 = vector.multi_reduction <add>, %305, %cst_69 [0] : vector<8x1xf32> to vector<1xf32>
    %307 = vector.shape_cast %306 : vector<1xf32> to vector<1x1xf32>
    %308 = vector.broadcast %307 : vector<1x1xf32> to vector<8x1xf32>
    %309 = arith.mulf %304, %308 : vector<8x1xf32>
    %310 = arith.addf %297, %309 : vector<8x1xf32>
    %311 = arith.mulf %288, %304 : vector<8x1xf32>
    %cst_70 = arith.constant dense<0.000000e+00> : vector<1xf32>
    %312 = vector.multi_reduction <add>, %311, %cst_70 [0] : vector<8x1xf32> to vector<1xf32>
    %313 = vector.shape_cast %312 : vector<1xf32> to vector<1x1xf32>
    %314 = vector.broadcast %313 : vector<1x1xf32> to vector<8x1xf32>
    %315 = arith.mulf %304, %314 : vector<8x1xf32>
    %316 = arith.addf %303, %315 : vector<8x1xf32>
    %cst_71 = arith.constant 4.8828125E-4 : f32
    %317 = vector.broadcast %cst_71 : f32 to vector<8x1xf32>
    %318 = arith.mulf %310, %317 : vector<8x1xf32>
    %cst_72 = arith.constant 4.8828125E-4 : f32
    %319 = vector.broadcast %cst_72 : f32 to vector<8x1xf32>
    %320 = arith.mulf %316, %319 : vector<8x1xf32>
    %321 = arith.mulf %318, %318 : vector<8x1xf32>
    %322 = arith.subf %320, %321 : vector<8x1xf32>
    %cst_73 = arith.constant 9.99999974E-6 : f32
    %323 = vector.broadcast %cst_73 : f32 to vector<8x1xf32>
    %324 = arith.addf %322, %323 : vector<8x1xf32>
    %325 = math.rsqrt %324 : vector<8x1xf32>
    %326 = vector.broadcast %318 : vector<8x1xf32> to vector<8x512xf32>
    %327 = arith.subf %283, %326 : vector<8x512xf32>
    %328 = arith.mulf %325, %8 : vector<8x1xf32>
    %329 = vector.broadcast %328 : vector<8x1xf32> to vector<8x512xf32>
    %330 = arith.mulf %327, %329 : vector<8x512xf32>
    %331 = vector.broadcast %9 : vector<8x1xf32> to vector<8x512xf32>
    %332 = arith.addf %330, %331 : vector<8x512xf32>
    %333 = vector.extract_strided_slice %282 {offsets = [0, 512], sizes = [8, 512], strides = [1, 1]} : vector<8x1024xf32> to vector<8x512xf32>
    %cst_74 = arith.constant dense<0.000000e+00> : vector<8xf32>
    %334 = vector.multi_reduction <add>, %333, %cst_74 [1] : vector<8x512xf32> to vector<8xf32>
    %335 = vector.shape_cast %334 : vector<8xf32> to vector<8x1xf32>
    %336 = arith.mulf %333, %333 : vector<8x512xf32>
    %cst_75 = arith.constant dense<0.000000e+00> : vector<8xf32>
    %337 = vector.multi_reduction <add>, %336, %cst_75 [1] : vector<8x512xf32> to vector<8xf32>
    %338 = vector.shape_cast %337 : vector<8xf32> to vector<8x1xf32>
    %cst_76 = arith.constant 0.000000e+00 : f32
    %339 = vector.broadcast %cst_76 : f32 to vector<8x1xf32>
    %cst_77 = arith.constant 0.000000e+00 : f32
    %340 = vector.broadcast %cst_77 : f32 to vector<8x1xf32>
    %341 = vector.extract_strided_slice %12 {offsets = [0, 0], sizes = [8, 1], strides = [1, 1]} : vector<8x2xf32> to vector<8x1xf32>
    %342 = arith.mulf %335, %341 : vector<8x1xf32>
    %cst_78 = arith.constant dense<0.000000e+00> : vector<1xf32>
    %343 = vector.multi_reduction <add>, %342, %cst_78 [0] : vector<8x1xf32> to vector<1xf32>
    %344 = vector.shape_cast %343 : vector<1xf32> to vector<1x1xf32>
    %345 = vector.broadcast %344 : vector<1x1xf32> to vector<8x1xf32>
    %346 = arith.mulf %341, %345 : vector<8x1xf32>
    %347 = arith.addf %339, %346 : vector<8x1xf32>
    %348 = arith.mulf %338, %341 : vector<8x1xf32>
    %cst_79 = arith.constant dense<0.000000e+00> : vector<1xf32>
    %349 = vector.multi_reduction <add>, %348, %cst_79 [0] : vector<8x1xf32> to vector<1xf32>
    %350 = vector.shape_cast %349 : vector<1xf32> to vector<1x1xf32>
    %351 = vector.broadcast %350 : vector<1x1xf32> to vector<8x1xf32>
    %352 = arith.mulf %341, %351 : vector<8x1xf32>
    %353 = arith.addf %340, %352 : vector<8x1xf32>
    %354 = vector.extract_strided_slice %12 {offsets = [0, 1], sizes = [8, 1], strides = [1, 1]} : vector<8x2xf32> to vector<8x1xf32>
    %355 = arith.mulf %335, %354 : vector<8x1xf32>
    %cst_80 = arith.constant dense<0.000000e+00> : vector<1xf32>
    %356 = vector.multi_reduction <add>, %355, %cst_80 [0] : vector<8x1xf32> to vector<1xf32>
    %357 = vector.shape_cast %356 : vector<1xf32> to vector<1x1xf32>
    %358 = vector.broadcast %357 : vector<1x1xf32> to vector<8x1xf32>
    %359 = arith.mulf %354, %358 : vector<8x1xf32>
    %360 = arith.addf %347, %359 : vector<8x1xf32>
    %361 = arith.mulf %338, %354 : vector<8x1xf32>
    %cst_81 = arith.constant dense<0.000000e+00> : vector<1xf32>
    %362 = vector.multi_reduction <add>, %361, %cst_81 [0] : vector<8x1xf32> to vector<1xf32>
    %363 = vector.shape_cast %362 : vector<1xf32> to vector<1x1xf32>
    %364 = vector.broadcast %363 : vector<1x1xf32> to vector<8x1xf32>
    %365 = arith.mulf %354, %364 : vector<8x1xf32>
    %366 = arith.addf %353, %365 : vector<8x1xf32>
    %cst_82 = arith.constant 4.8828125E-4 : f32
    %367 = vector.broadcast %cst_82 : f32 to vector<8x1xf32>
    %368 = arith.mulf %360, %367 : vector<8x1xf32>
    %cst_83 = arith.constant 4.8828125E-4 : f32
    %369 = vector.broadcast %cst_83 : f32 to vector<8x1xf32>
    %370 = arith.mulf %366, %369 : vector<8x1xf32>
    %371 = arith.mulf %368, %368 : vector<8x1xf32>
    %372 = arith.subf %370, %371 : vector<8x1xf32>
    %cst_84 = arith.constant 9.99999974E-6 : f32
    %373 = vector.broadcast %cst_84 : f32 to vector<8x1xf32>
    %374 = arith.addf %372, %373 : vector<8x1xf32>
    %375 = math.rsqrt %374 : vector<8x1xf32>
    %376 = vector.broadcast %368 : vector<8x1xf32> to vector<8x512xf32>
    %377 = arith.subf %333, %376 : vector<8x512xf32>
    %378 = arith.mulf %375, %8 : vector<8x1xf32>
    %379 = vector.broadcast %378 : vector<8x1xf32> to vector<8x512xf32>
    %380 = arith.mulf %377, %379 : vector<8x512xf32>
    %381 = vector.broadcast %9 : vector<8x1xf32> to vector<8x512xf32>
    %382 = arith.addf %380, %381 : vector<8x512xf32>
    %383 = tpu.concatenate %332, %382 in 1 : vector<8x512xf32>, vector<8x512xf32> -> vector<8x1024xf32>
    %384 = arith.negf %383 : vector<8x1024xf32>
    %385 = math.exp %384 : vector<8x1024xf32>
    %cst_85 = arith.constant 1.000000e+00 : f32
    %386 = vector.broadcast %cst_85 : f32 to vector<8x1024xf32>
    %387 = arith.addf %386, %385 : vector<8x1024xf32>
    %388 = arith.divf %386, %387 : vector<8x1024xf32>
    %389 = arith.mulf %383, %388 : vector<8x1024xf32>
    %c73_i32_86 = arith.constant 73 : i32
    %390 = tpu.dynamic_rotate %389 by %c73_i32_86 dim 1 : vector<8x1024xf32>, i32 -> vector<8x1024xf32>
    %391 = vector.extract_strided_slice %2 {offsets = [0, 0], sizes = [1, 1024], strides = [1, 1]} : vector<27x1024xf32> to vector<1x1024xf32>
    %392 = vector.broadcast %391 : vector<1x1024xf32> to vector<8x1024xf32>
    %393 = arith.mulf %390, %392 : vector<8x1024xf32>
    %394 = arith.truncf %393 : vector<8x1024xf32> to vector<8x1024xbf16>
    %c0_87 = arith.constant 0 : index
    %c0_88 = arith.constant 0 : index
    %395 = vector.load %arg8[%c0_87, %c0_88] : memref<224x1024xbf16, #tpu.memory_space<vmem>>, vector<8x1024xbf16>
    tpu.vector_store %arg8[%c0_87, %c0_88], %394 {strides = array<i32>} : memref<224x1024xbf16, #tpu.memory_space<vmem>>, vector<8x1024xbf16>,
    %c72_i32_89 = arith.constant 72 : i32
    %396 = tpu.dynamic_rotate %389 by %c72_i32_89 dim 1 : vector<8x1024xf32>, i32 -> vector<8x1024xf32>
    %397 = vector.extract_strided_slice %2 {offsets = [1, 0], sizes = [1, 1024], strides = [1, 1]} : vector<27x1024xf32> to vector<1x1024xf32>
    %398 = vector.broadcast %397 : vector<1x1024xf32> to vector<8x1024xf32>
    %399 = arith.mulf %396, %398 : vector<8x1024xf32>
    %400 = arith.truncf %399 : vector<8x1024xf32> to vector<8x1024xbf16>
    %c8_90 = arith.constant 8 : index
    %c0_91 = arith.constant 0 : index
    %401 = vector.load %arg8[%c8_90, %c0_91] : memref<224x1024xbf16, #tpu.memory_space<vmem>>, vector<8x1024xbf16>
    tpu.vector_store %arg8[%c8_90, %c0_91], %400 {strides = array<i32>} : memref<224x1024xbf16, #tpu.memory_space<vmem>>, vector<8x1024xbf16>,
    %c71_i32_92 = arith.constant 71 : i32
    %402 = tpu.dynamic_rotate %389 by %c71_i32_92 dim 1 : vector<8x1024xf32>, i32 -> vector<8x1024xf32>
    %403 = vector.extract_strided_slice %2 {offsets = [2, 0], sizes = [1, 1024], strides = [1, 1]} : vector<27x1024xf32> to vector<1x1024xf32>
    %404 = vector.broadcast %403 : vector<1x1024xf32> to vector<8x1024xf32>
    %405 = arith.mulf %402, %404 : vector<8x1024xf32>
    %406 = arith.truncf %405 : vector<8x1024xf32> to vector<8x1024xbf16>
    %c16_93 = arith.constant 16 : index
    %c0_94 = arith.constant 0 : index
    %407 = vector.load %arg8[%c16_93, %c0_94] : memref<224x1024xbf16, #tpu.memory_space<vmem>>, vector<8x1024xbf16>
    tpu.vector_store %arg8[%c16_93, %c0_94], %406 {strides = array<i32>} : memref<224x1024xbf16, #tpu.memory_space<vmem>>, vector<8x1024xbf16>,
    %c65_i32_95 = arith.constant 65 : i32
    %408 = tpu.dynamic_rotate %389 by %c65_i32_95 dim 1 : vector<8x1024xf32>, i32 -> vector<8x1024xf32>
    %409 = vector.extract_strided_slice %2 {offsets = [3, 0], sizes = [1, 1024], strides = [1, 1]} : vector<27x1024xf32> to vector<1x1024xf32>
    %410 = vector.broadcast %409 : vector<1x1024xf32> to vector<8x1024xf32>
    %411 = arith.mulf %408, %410 : vector<8x1024xf32>
    %412 = arith.truncf %411 : vector<8x1024xf32> to vector<8x1024xbf16>
    %c24_96 = arith.constant 24 : index
    %c0_97 = arith.constant 0 : index
    %413 = vector.load %arg8[%c24_96, %c0_97] : memref<224x1024xbf16, #tpu.memory_space<vmem>>, vector<8x1024xbf16>
    tpu.vector_store %arg8[%c24_96, %c0_97], %412 {strides = array<i32>} : memref<224x1024xbf16, #tpu.memory_space<vmem>>, vector<8x1024xbf16>,
    %c64_i32_98 = arith.constant 64 : i32
    %414 = tpu.dynamic_rotate %389 by %c64_i32_98 dim 1 : vector<8x1024xf32>, i32 -> vector<8x1024xf32>
    %415 = vector.extract_strided_slice %2 {offsets = [4, 0], sizes = [1, 1024], strides = [1, 1]} : vector<27x1024xf32> to vector<1x1024xf32>
    %416 = vector.broadcast %415 : vector<1x1024xf32> to vector<8x1024xf32>
    %417 = arith.mulf %414, %416 : vector<8x1024xf32>
    %418 = arith.truncf %417 : vector<8x1024xf32> to vector<8x1024xbf16>
    %c32_99 = arith.constant 32 : index
    %c0_100 = arith.constant 0 : index
    %419 = vector.load %arg8[%c32_99, %c0_100] : memref<224x1024xbf16, #tpu.memory_space<vmem>>, vector<8x1024xbf16>
    tpu.vector_store %arg8[%c32_99, %c0_100], %418 {strides = array<i32>} : memref<224x1024xbf16, #tpu.memory_space<vmem>>, vector<8x1024xbf16>,
    %c63_i32_101 = arith.constant 63 : i32
    %420 = tpu.dynamic_rotate %389 by %c63_i32_101 dim 1 : vector<8x1024xf32>, i32 -> vector<8x1024xf32>
    %421 = vector.extract_strided_slice %2 {offsets = [5, 0], sizes = [1, 1024], strides = [1, 1]} : vector<27x1024xf32> to vector<1x1024xf32>
    %422 = vector.broadcast %421 : vector<1x1024xf32> to vector<8x1024xf32>
    %423 = arith.mulf %420, %422 : vector<8x1024xf32>
    %424 = arith.truncf %423 : vector<8x1024xf32> to vector<8x1024xbf16>
    %c40_102 = arith.constant 40 : index
    %c0_103 = arith.constant 0 : index
    %425 = vector.load %arg8[%c40_102, %c0_103] : memref<224x1024xbf16, #tpu.memory_space<vmem>>, vector<8x1024xbf16>
    tpu.vector_store %arg8[%c40_102, %c0_103], %424 {strides = array<i32>} : memref<224x1024xbf16, #tpu.memory_space<vmem>>, vector<8x1024xbf16>,
    %c57_i32_104 = arith.constant 57 : i32
    %426 = tpu.dynamic_rotate %389 by %c57_i32_104 dim 1 : vector<8x1024xf32>, i32 -> vector<8x1024xf32>
    %427 = vector.extract_strided_slice %2 {offsets = [6, 0], sizes = [1, 1024], strides = [1, 1]} : vector<27x1024xf32> to vector<1x1024xf32>
    %428 = vector.broadcast %427 : vector<1x1024xf32> to vector<8x1024xf32>
    %429 = arith.mulf %426, %428 : vector<8x1024xf32>
    %430 = arith.truncf %429 : vector<8x1024xf32> to vector<8x1024xbf16>
    %c48_105 = arith.constant 48 : index
    %c0_106 = arith.constant 0 : index
    %431 = vector.load %arg8[%c48_105, %c0_106] : memref<224x1024xbf16, #tpu.memory_space<vmem>>, vector<8x1024xbf16>
    tpu.vector_store %arg8[%c48_105, %c0_106], %430 {strides = array<i32>} : memref<224x1024xbf16, #tpu.memory_space<vmem>>, vector<8x1024xbf16>,
    %c56_i32_107 = arith.constant 56 : i32
    %432 = tpu.dynamic_rotate %389 by %c56_i32_107 dim 1 : vector<8x1024xf32>, i32 -> vector<8x1024xf32>
    %433 = vector.extract_strided_slice %2 {offsets = [7, 0], sizes = [1, 1024], strides = [1, 1]} : vector<27x1024xf32> to vector<1x1024xf32>
    %434 = vector.broadcast %433 : vector<1x1024xf32> to vector<8x1024xf32>
    %435 = arith.mulf %432, %434 : vector<8x1024xf32>
    %436 = arith.truncf %435 : vector<8x1024xf32> to vector<8x1024xbf16>
    %c56_108 = arith.constant 56 : index
    %c0_109 = arith.constant 0 : index
    %437 = vector.load %arg8[%c56_108, %c0_109] : memref<224x1024xbf16, #tpu.memory_space<vmem>>, vector<8x1024xbf16>
    tpu.vector_store %arg8[%c56_108, %c0_109], %436 {strides = array<i32>} : memref<224x1024xbf16, #tpu.memory_space<vmem>>, vector<8x1024xbf16>,
    %c55_i32_110 = arith.constant 55 : i32
    %438 = tpu.dynamic_rotate %389 by %c55_i32_110 dim 1 : vector<8x1024xf32>, i32 -> vector<8x1024xf32>
    %439 = vector.extract_strided_slice %2 {offsets = [8, 0], sizes = [1, 1024], strides = [1, 1]} : vector<27x1024xf32> to vector<1x1024xf32>
    %440 = vector.broadcast %439 : vector<1x1024xf32> to vector<8x1024xf32>
    %441 = arith.mulf %438, %440 : vector<8x1024xf32>
    %442 = arith.truncf %441 : vector<8x1024xf32> to vector<8x1024xbf16>
    %c64_111 = arith.constant 64 : index
    %c0_112 = arith.constant 0 : index
    %443 = vector.load %arg8[%c64_111, %c0_112] : memref<224x1024xbf16, #tpu.memory_space<vmem>>, vector<8x1024xbf16>
    tpu.vector_store %arg8[%c64_111, %c0_112], %442 {strides = array<i32>} : memref<224x1024xbf16, #tpu.memory_space<vmem>>, vector<8x1024xbf16>,
    %c9_i32_113 = arith.constant 9 : i32
    %444 = tpu.dynamic_rotate %389 by %c9_i32_113 dim 1 : vector<8x1024xf32>, i32 -> vector<8x1024xf32>
    %445 = vector.extract_strided_slice %2 {offsets = [9, 0], sizes = [1, 1024], strides = [1, 1]} : vector<27x1024xf32> to vector<1x1024xf32>
    %446 = vector.broadcast %445 : vector<1x1024xf32> to vector<8x1024xf32>
    %447 = arith.mulf %444, %446 : vector<8x1024xf32>
    %448 = arith.truncf %447 : vector<8x1024xf32> to vector<8x1024xbf16>
    %c72_114 = arith.constant 72 : index
    %c0_115 = arith.constant 0 : index
    %449 = vector.load %arg8[%c72_114, %c0_115] : memref<224x1024xbf16, #tpu.memory_space<vmem>>, vector<8x1024xbf16>
    tpu.vector_store %arg8[%c72_114, %c0_115], %448 {strides = array<i32>} : memref<224x1024xbf16, #tpu.memory_space<vmem>>, vector<8x1024xbf16>,
    %c8_i32_116 = arith.constant 8 : i32
    %450 = tpu.dynamic_rotate %389 by %c8_i32_116 dim 1 : vector<8x1024xf32>, i32 -> vector<8x1024xf32>
    %451 = vector.extract_strided_slice %2 {offsets = [10, 0], sizes = [1, 1024], strides = [1, 1]} : vector<27x1024xf32> to vector<1x1024xf32>
    %452 = vector.broadcast %451 : vector<1x1024xf32> to vector<8x1024xf32>
    %453 = arith.mulf %450, %452 : vector<8x1024xf32>
    %454 = arith.truncf %453 : vector<8x1024xf32> to vector<8x1024xbf16>
    %c80_117 = arith.constant 80 : index
    %c0_118 = arith.constant 0 : index
    %455 = vector.load %arg8[%c80_117, %c0_118] : memref<224x1024xbf16, #tpu.memory_space<vmem>>, vector<8x1024xbf16>
    tpu.vector_store %arg8[%c80_117, %c0_118], %454 {strides = array<i32>} : memref<224x1024xbf16, #tpu.memory_space<vmem>>, vector<8x1024xbf16>,
    %c7_i32_119 = arith.constant 7 : i32
    %456 = tpu.dynamic_rotate %389 by %c7_i32_119 dim 1 : vector<8x1024xf32>, i32 -> vector<8x1024xf32>
    %457 = vector.extract_strided_slice %2 {offsets = [11, 0], sizes = [1, 1024], strides = [1, 1]} : vector<27x1024xf32> to vector<1x1024xf32>
    %458 = vector.broadcast %457 : vector<1x1024xf32> to vector<8x1024xf32>
    %459 = arith.mulf %456, %458 : vector<8x1024xf32>
    %460 = arith.truncf %459 : vector<8x1024xf32> to vector<8x1024xbf16>
    %c88_120 = arith.constant 88 : index
    %c0_121 = arith.constant 0 : index
    %461 = vector.load %arg8[%c88_120, %c0_121] : memref<224x1024xbf16, #tpu.memory_space<vmem>>, vector<8x1024xbf16>
    tpu.vector_store %arg8[%c88_120, %c0_121], %460 {strides = array<i32>} : memref<224x1024xbf16, #tpu.memory_space<vmem>>, vector<8x1024xbf16>,
    %c1_i32_122 = arith.constant 1 : i32
    %462 = tpu.dynamic_rotate %389 by %c1_i32_122 dim 1 : vector<8x1024xf32>, i32 -> vector<8x1024xf32>
    %463 = vector.extract_strided_slice %2 {offsets = [12, 0], sizes = [1, 1024], strides = [1, 1]} : vector<27x1024xf32> to vector<1x1024xf32>
    %464 = vector.broadcast %463 : vector<1x1024xf32> to vector<8x1024xf32>
    %465 = arith.mulf %462, %464 : vector<8x1024xf32>
    %466 = arith.truncf %465 : vector<8x1024xf32> to vector<8x1024xbf16>
    %c96_123 = arith.constant 96 : index
    %c0_124 = arith.constant 0 : index
    %467 = vector.load %arg8[%c96_123, %c0_124] : memref<224x1024xbf16, #tpu.memory_space<vmem>>, vector<8x1024xbf16>
    tpu.vector_store %arg8[%c96_123, %c0_124], %466 {strides = array<i32>} : memref<224x1024xbf16, #tpu.memory_space<vmem>>, vector<8x1024xbf16>,
    %468 = arith.truncf %389 : vector<8x1024xf32> to vector<8x1024xbf16>
    %c104_125 = arith.constant 104 : index
    %c0_126 = arith.constant 0 : index
    %469 = vector.load %arg8[%c104_125, %c0_126] : memref<224x1024xbf16, #tpu.memory_space<vmem>>, vector<8x1024xbf16>
    tpu.vector_store %arg8[%c104_125, %c0_126], %468 {strides = array<i32>} : memref<224x1024xbf16, #tpu.memory_space<vmem>>, vector<8x1024xbf16>,
    %c1023_i32_127 = arith.constant 1023 : i32
    %470 = tpu.dynamic_rotate %389 by %c1023_i32_127 dim 1 : vector<8x1024xf32>, i32 -> vector<8x1024xf32>
    %471 = vector.extract_strided_slice %2 {offsets = [14, 0], sizes = [1, 1024], strides = [1, 1]} : vector<27x1024xf32> to vector<1x1024xf32>
    %472 = vector.broadcast %471 : vector<1x1024xf32> to vector<8x1024xf32>
    %473 = arith.mulf %470, %472 : vector<8x1024xf32>
    %474 = arith.truncf %473 : vector<8x1024xf32> to vector<8x1024xbf16>
    %c112_128 = arith.constant 112 : index
    %c0_129 = arith.constant 0 : index
    %475 = vector.load %arg8[%c112_128, %c0_129] : memref<224x1024xbf16, #tpu.memory_space<vmem>>, vector<8x1024xbf16>
    tpu.vector_store %arg8[%c112_128, %c0_129], %474 {strides = array<i32>} : memref<224x1024xbf16, #tpu.memory_space<vmem>>, vector<8x1024xbf16>,
    %c1017_i32_130 = arith.constant 1017 : i32
    %476 = tpu.dynamic_rotate %389 by %c1017_i32_130 dim 1 : vector<8x1024xf32>, i32 -> vector<8x1024xf32>
    %477 = vector.extract_strided_slice %2 {offsets = [15, 0], sizes = [1, 1024], strides = [1, 1]} : vector<27x1024xf32> to vector<1x1024xf32>
    %478 = vector.broadcast %477 : vector<1x1024xf32> to vector<8x1024xf32>
    %479 = arith.mulf %476, %478 : vector<8x1024xf32>
    %480 = arith.truncf %479 : vector<8x1024xf32> to vector<8x1024xbf16>
    %c120_131 = arith.constant 120 : index
    %c0_132 = arith.constant 0 : index
    %481 = vector.load %arg8[%c120_131, %c0_132] : memref<224x1024xbf16, #tpu.memory_space<vmem>>, vector<8x1024xbf16>
    tpu.vector_store %arg8[%c120_131, %c0_132], %480 {strides = array<i32>} : memref<224x1024xbf16, #tpu.memory_space<vmem>>, vector<8x1024xbf16>,
    %c1016_i32_133 = arith.constant 1016 : i32
    %482 = tpu.dynamic_rotate %389 by %c1016_i32_133 dim 1 : vector<8x1024xf32>, i32 -> vector<8x1024xf32>
    %483 = vector.extract_strided_slice %2 {offsets = [16, 0], sizes = [1, 1024], strides = [1, 1]} : vector<27x1024xf32> to vector<1x1024xf32>
    %484 = vector.broadcast %483 : vector<1x1024xf32> to vector<8x1024xf32>
    %485 = arith.mulf %482, %484 : vector<8x1024xf32>
    %486 = arith.truncf %485 : vector<8x1024xf32> to vector<8x1024xbf16>
    %c128_134 = arith.constant 128 : index
    %c0_135 = arith.constant 0 : index
    %487 = vector.load %arg8[%c128_134, %c0_135] : memref<224x1024xbf16, #tpu.memory_space<vmem>>, vector<8x1024xbf16>
    tpu.vector_store %arg8[%c128_134, %c0_135], %486 {strides = array<i32>} : memref<224x1024xbf16, #tpu.memory_space<vmem>>, vector<8x1024xbf16>,
    %c1015_i32_136 = arith.constant 1015 : i32
    %488 = tpu.dynamic_rotate %389 by %c1015_i32_136 dim 1 : vector<8x1024xf32>, i32 -> vector<8x1024xf32>
    %489 = vector.extract_strided_slice %2 {offsets = [17, 0], sizes = [1, 1024], strides = [1, 1]} : vector<27x1024xf32> to vector<1x1024xf32>
    %490 = vector.broadcast %489 : vector<1x1024xf32> to vector<8x1024xf32>
    %491 = arith.mulf %488, %490 : vector<8x1024xf32>
    %492 = arith.truncf %491 : vector<8x1024xf32> to vector<8x1024xbf16>
    %c136_137 = arith.constant 136 : index
    %c0_138 = arith.constant 0 : index
    %493 = vector.load %arg8[%c136_137, %c0_138] : memref<224x1024xbf16, #tpu.memory_space<vmem>>, vector<8x1024xbf16>
    tpu.vector_store %arg8[%c136_137, %c0_138], %492 {strides = array<i32>} : memref<224x1024xbf16, #tpu.memory_space<vmem>>, vector<8x1024xbf16>,
    %c969_i32_139 = arith.constant 969 : i32
    %494 = tpu.dynamic_rotate %389 by %c969_i32_139 dim 1 : vector<8x1024xf32>, i32 -> vector<8x1024xf32>
    %495 = vector.extract_strided_slice %2 {offsets = [18, 0], sizes = [1, 1024], strides = [1, 1]} : vector<27x1024xf32> to vector<1x1024xf32>
    %496 = vector.broadcast %495 : vector<1x1024xf32> to vector<8x1024xf32>
    %497 = arith.mulf %494, %496 : vector<8x1024xf32>
    %498 = arith.truncf %497 : vector<8x1024xf32> to vector<8x1024xbf16>
    %c144_140 = arith.constant 144 : index
    %c0_141 = arith.constant 0 : index
    %499 = vector.load %arg8[%c144_140, %c0_141] : memref<224x1024xbf16, #tpu.memory_space<vmem>>, vector<8x1024xbf16>
    tpu.vector_store %arg8[%c144_140, %c0_141], %498 {strides = array<i32>} : memref<224x1024xbf16, #tpu.memory_space<vmem>>, vector<8x1024xbf16>,
    %c968_i32_142 = arith.constant 968 : i32
    %500 = tpu.dynamic_rotate %389 by %c968_i32_142 dim 1 : vector<8x1024xf32>, i32 -> vector<8x1024xf32>
    %501 = vector.extract_strided_slice %2 {offsets = [19, 0], sizes = [1, 1024], strides = [1, 1]} : vector<27x1024xf32> to vector<1x1024xf32>
    %502 = vector.broadcast %501 : vector<1x1024xf32> to vector<8x1024xf32>
    %503 = arith.mulf %500, %502 : vector<8x1024xf32>
    %504 = arith.truncf %503 : vector<8x1024xf32> to vector<8x1024xbf16>
    %c152_143 = arith.constant 152 : index
    %c0_144 = arith.constant 0 : index
    %505 = vector.load %arg8[%c152_143, %c0_144] : memref<224x1024xbf16, #tpu.memory_space<vmem>>, vector<8x1024xbf16>
    tpu.vector_store %arg8[%c152_143, %c0_144], %504 {strides = array<i32>} : memref<224x1024xbf16, #tpu.memory_space<vmem>>, vector<8x1024xbf16>,
    %c967_i32_145 = arith.constant 967 : i32
    %506 = tpu.dynamic_rotate %389 by %c967_i32_145 dim 1 : vector<8x1024xf32>, i32 -> vector<8x1024xf32>
    %507 = vector.extract_strided_slice %2 {offsets = [20, 0], sizes = [1, 1024], strides = [1, 1]} : vector<27x1024xf32> to vector<1x1024xf32>
    %508 = vector.broadcast %507 : vector<1x1024xf32> to vector<8x1024xf32>
    %509 = arith.mulf %506, %508 : vector<8x1024xf32>
    %510 = arith.truncf %509 : vector<8x1024xf32> to vector<8x1024xbf16>
    %c160_146 = arith.constant 160 : index
    %c0_147 = arith.constant 0 : index
    %511 = vector.load %arg8[%c160_146, %c0_147] : memref<224x1024xbf16, #tpu.memory_space<vmem>>, vector<8x1024xbf16>
    tpu.vector_store %arg8[%c160_146, %c0_147], %510 {strides = array<i32>} : memref<224x1024xbf16, #tpu.memory_space<vmem>>, vector<8x1024xbf16>,
    %c961_i32_148 = arith.constant 961 : i32
    %512 = tpu.dynamic_rotate %389 by %c961_i32_148 dim 1 : vector<8x1024xf32>, i32 -> vector<8x1024xf32>
    %513 = vector.extract_strided_slice %2 {offsets = [21, 0], sizes = [1, 1024], strides = [1, 1]} : vector<27x1024xf32> to vector<1x1024xf32>
    %514 = vector.broadcast %513 : vector<1x1024xf32> to vector<8x1024xf32>
    %515 = arith.mulf %512, %514 : vector<8x1024xf32>
    %516 = arith.truncf %515 : vector<8x1024xf32> to vector<8x1024xbf16>
    %c168_149 = arith.constant 168 : index
    %c0_150 = arith.constant 0 : index
    %517 = vector.load %arg8[%c168_149, %c0_150] : memref<224x1024xbf16, #tpu.memory_space<vmem>>, vector<8x1024xbf16>
    tpu.vector_store %arg8[%c168_149, %c0_150], %516 {strides = array<i32>} : memref<224x1024xbf16, #tpu.memory_space<vmem>>, vector<8x1024xbf16>,
    %c960_i32_151 = arith.constant 960 : i32
    %518 = tpu.dynamic_rotate %389 by %c960_i32_151 dim 1 : vector<8x1024xf32>, i32 -> vector<8x1024xf32>
    %519 = vector.extract_strided_slice %2 {offsets = [22, 0], sizes = [1, 1024], strides = [1, 1]} : vector<27x1024xf32> to vector<1x1024xf32>
    %520 = vector.broadcast %519 : vector<1x1024xf32> to vector<8x1024xf32>
    %521 = arith.mulf %518, %520 : vector<8x1024xf32>
    %522 = arith.truncf %521 : vector<8x1024xf32> to vector<8x1024xbf16>
    %c176_152 = arith.constant 176 : index
    %c0_153 = arith.constant 0 : index
    %523 = vector.load %arg8[%c176_152, %c0_153] : memref<224x1024xbf16, #tpu.memory_space<vmem>>, vector<8x1024xbf16>
    tpu.vector_store %arg8[%c176_152, %c0_153], %522 {strides = array<i32>} : memref<224x1024xbf16, #tpu.memory_space<vmem>>, vector<8x1024xbf16>,
    %c959_i32_154 = arith.constant 959 : i32
    %524 = tpu.dynamic_rotate %389 by %c959_i32_154 dim 1 : vector<8x1024xf32>, i32 -> vector<8x1024xf32>
    %525 = vector.extract_strided_slice %2 {offsets = [23, 0], sizes = [1, 1024], strides = [1, 1]} : vector<27x1024xf32> to vector<1x1024xf32>
    %526 = vector.broadcast %525 : vector<1x1024xf32> to vector<8x1024xf32>
    %527 = arith.mulf %524, %526 : vector<8x1024xf32>
    %528 = arith.truncf %527 : vector<8x1024xf32> to vector<8x1024xbf16>
    %c184_155 = arith.constant 184 : index
    %c0_156 = arith.constant 0 : index
    %529 = vector.load %arg8[%c184_155, %c0_156] : memref<224x1024xbf16, #tpu.memory_space<vmem>>, vector<8x1024xbf16>
    tpu.vector_store %arg8[%c184_155, %c0_156], %528 {strides = array<i32>} : memref<224x1024xbf16, #tpu.memory_space<vmem>>, vector<8x1024xbf16>,
    %c953_i32_157 = arith.constant 953 : i32
    %530 = tpu.dynamic_rotate %389 by %c953_i32_157 dim 1 : vector<8x1024xf32>, i32 -> vector<8x1024xf32>
    %531 = vector.extract_strided_slice %2 {offsets = [24, 0], sizes = [1, 1024], strides = [1, 1]} : vector<27x1024xf32> to vector<1x1024xf32>
    %532 = vector.broadcast %531 : vector<1x1024xf32> to vector<8x1024xf32>
    %533 = arith.mulf %530, %532 : vector<8x1024xf32>
    %534 = arith.truncf %533 : vector<8x1024xf32> to vector<8x1024xbf16>
    %c192_158 = arith.constant 192 : index
    %c0_159 = arith.constant 0 : index
    %535 = vector.load %arg8[%c192_158, %c0_159] : memref<224x1024xbf16, #tpu.memory_space<vmem>>, vector<8x1024xbf16>
    tpu.vector_store %arg8[%c192_158, %c0_159], %534 {strides = array<i32>} : memref<224x1024xbf16, #tpu.memory_space<vmem>>, vector<8x1024xbf16>,
    %c952_i32_160 = arith.constant 952 : i32
    %536 = tpu.dynamic_rotate %389 by %c952_i32_160 dim 1 : vector<8x1024xf32>, i32 -> vector<8x1024xf32>
    %537 = vector.extract_strided_slice %2 {offsets = [25, 0], sizes = [1, 1024], strides = [1, 1]} : vector<27x1024xf32> to vector<1x1024xf32>
    %538 = vector.broadcast %537 : vector<1x1024xf32> to vector<8x1024xf32>
    %539 = arith.mulf %536, %538 : vector<8x1024xf32>
    %540 = arith.truncf %539 : vector<8x1024xf32> to vector<8x1024xbf16>
    %c200_161 = arith.constant 200 : index
    %c0_162 = arith.constant 0 : index
    %541 = vector.load %arg8[%c200_161, %c0_162] : memref<224x1024xbf16, #tpu.memory_space<vmem>>, vector<8x1024xbf16>
    tpu.vector_store %arg8[%c200_161, %c0_162], %540 {strides = array<i32>} : memref<224x1024xbf16, #tpu.memory_space<vmem>>, vector<8x1024xbf16>,
    %c951_i32_163 = arith.constant 951 : i32
    %542 = tpu.dynamic_rotate %389 by %c951_i32_163 dim 1 : vector<8x1024xf32>, i32 -> vector<8x1024xf32>
    %543 = vector.extract_strided_slice %2 {offsets = [26, 0], sizes = [1, 1024], strides = [1, 1]} : vector<27x1024xf32> to vector<1x1024xf32>
    %544 = vector.broadcast %543 : vector<1x1024xf32> to vector<8x1024xf32>
    %545 = arith.mulf %542, %544 : vector<8x1024xf32>
    %546 = arith.truncf %545 : vector<8x1024xf32> to vector<8x1024xbf16>
    %c208_164 = arith.constant 208 : index
    %c0_165 = arith.constant 0 : index
    %547 = vector.load %arg8[%c208_164, %c0_165] : memref<224x1024xbf16, #tpu.memory_space<vmem>>, vector<8x1024xbf16>
    tpu.vector_store %arg8[%c208_164, %c0_165], %546 {strides = array<i32>} : memref<224x1024xbf16, #tpu.memory_space<vmem>>, vector<8x1024xbf16>,
    %548 = arith.truncf %1 : vector<8x1024xf32> to vector<8x1024xbf16>
    %c216 = arith.constant 216 : index
    %c0_166 = arith.constant 0 : index
    %549 = vector.load %arg8[%c216, %c0_166] : memref<224x1024xbf16, #tpu.memory_space<vmem>>, vector<8x1024xbf16>
    tpu.vector_store %arg8[%c216, %c0_166], %548 {strides = array<i32>} : memref<224x1024xbf16, #tpu.memory_space<vmem>>, vector<8x1024xbf16>,
    %c0_167 = arith.constant 0 : index
    %c0_168 = arith.constant 0 : index
    %550 = vector.load %arg4[%c0_167, %c0_168] : memref<8x224xbf16, #tpu.memory_space<vmem>>, vector<8x224xbf16>
    %c0_169 = arith.constant 0 : index
    %c0_170 = arith.constant 0 : index
    %551 = vector.load %arg8[%c0_169, %c0_170] : memref<224x1024xbf16, #tpu.memory_space<vmem>>, vector<224x1024xbf16>
    %cst_171 = arith.constant dense<0.000000e+00> : vector<8x1024xf32>
    %552 = tpu.matmul %550, %551, %cst_171 {dimension_numbers = #tpu.dot_dimension_numbers<[1], [0], [0], [1], [0, 0, 1, 1], [], []>} : vector<8x224xbf16>, vector<224x1024xbf16>, vector<8x1024xf32> -> vector<8x1024xf32>
    %553 = vector.broadcast %11 : vector<8x1xf32> to vector<8x1024xf32>
    %554 = arith.addf %552, %553 : vector<8x1024xf32>
    %c0_172 = arith.constant 0 : index
    %c0_173 = arith.constant 0 : index
    %c0_174 = arith.constant 0 : index
    %555 = vector.load %arg7[%c0_172, %c0_173, %c0_174] : memref<1x8x1024xf32, #tpu.memory_space<vmem>>, vector<1x8x1024xf32>
    %556 = vector.shape_cast %555 : vector<1x8x1024xf32> to vector<8x1024xf32>
    %557 = vector.shape_cast %554 : vector<8x1024xf32> to vector<1x8x1024xf32>
    tpu.vector_store %arg7[%c0_172, %c0_173, %c0_174], %557 {strides = array<i32>} : memref<1x8x1024xf32, #tpu.memory_space<vmem>>, vector<1x8x1024xf32>,
    return
  }
  func.func @transform_0(%arg0: i32) -> (i32, i32, i32) {
    %c0_i32 = arith.constant 0 : i32
    %c0_i32_0 = arith.constant 0 : i32
    %c0_i32_1 = arith.constant 0 : i32
    return %arg0, %c0_i32, %c0_i32_0 : i32, i32, i32
  }
  func.func @transform_1(%arg0: i32) -> (i32, i32) {
    %c0_i32 = arith.constant 0 : i32
    %c0_i32_0 = arith.constant 0 : i32
    %c0_i32_1 = arith.constant 0 : i32
    return %c0_i32, %c0_i32_0 : i32, i32
  }
  func.func @transform_2(%arg0: i32) -> (i32, i32) {
    %c0_i32 = arith.constant 0 : i32
    %c0_i32_0 = arith.constant 0 : i32
    %c0_i32_1 = arith.constant 0 : i32
    return %c0_i32, %c0_i32_0 : i32, i32
  }
  func.func @transform_3(%arg0: i32) -> (i32, i32) {
    %c0_i32 = arith.constant 0 : i32
    %c0_i32_0 = arith.constant 0 : i32
    %c0_i32_1 = arith.constant 0 : i32
    return %c0_i32, %c0_i32_0 : i32, i32
  }
  func.func @transform_4(%arg0: i32) -> (i32, i32) {
    %c0_i32 = arith.constant 0 : i32
    %c0_i32_0 = arith.constant 0 : i32
    %c0_i32_1 = arith.constant 0 : i32
    return %c0_i32, %c0_i32_0 : i32, i32
  }
  func.func @transform_5(%arg0: i32) -> (i32, i32) {
    %c0_i32 = arith.constant 0 : i32
    %c0_i32_0 = arith.constant 0 : i32
    %c0_i32_1 = arith.constant 0 : i32
    return %c0_i32, %c0_i32_0 : i32, i32
  }
  func.func @transform_6(%arg0: i32) -> (i32, i32, i32) {
    %c0_i32 = arith.constant 0 : i32
    %c0_i32_0 = arith.constant 0 : i32
    %c0_i32_1 = arith.constant 0 : i32
    return %arg0, %c0_i32, %c0_i32_0 : i32, i32, i32
  }
}

</mosaic_0001>

<llo_original>
// kernel: tpu_custom_call.1
$region0: #{tpu_custom_call.1}
  #allocation0 [shape = 'u32[]', space=smem, size = 0x4, offset = 0x4, fixed_abs, tag = 'smem constant byte address 0x4 - core index']
  #allocation1 [shape = 'u32[144,128]{1,0:T(1,128)}', space=vmem, size = 0x12000, scoped, tag = 'internal scratch']
  #allocation2 [shape = 'bf16[224,1024]{1,0:T(16,128)(2,1)}', space=vmem, size = 0x70000, scoped, tag = 'scratch operand']
  %s0 = inlined_call_operand.hbm [shape: f32[1,8,1024], index: 0, kind: input, shape index: {}]
  %s1 = inlined_call_operand.hbm [shape: f32[27,1024], index: 1, kind: input, shape index: {}]
  %s2 = inlined_call_operand.hbm [shape: bf16[8,216], index: 2, kind: input, shape index: {}]
  %s3 = inlined_call_operand.hbm [shape: bf16[8,224], index: 3, kind: input, shape index: {}]
  %s4 = inlined_call_operand.hbm [shape: f32[8,4], index: 4, kind: input, shape index: {}]
  %s5 = inlined_call_operand.hbm [shape: f32[8,6], index: 5, kind: input, shape index: {}]
  %s6 = inlined_call_operand.hbm [shape: f32[1,8,1024], index: 6, kind: output, shape index: {}]
  %s7 = sld [smem:[#allocation0]]
  $region58: #{tpu_custom_call.1} parent=0
    _
  %s9 = ssub.s32 1, %s7
  %s10 = scalar_select 0, %s9, %s7
  $region1: #{tpu_custom_call.1} parent=0
    #allocation3 [shape = 'u8[32768]{0}', space=vmem, size = 0x8000, scoped, tag = 'input window, operand 0, single buffered']
    #allocation4 [shape = 's32[1]{0}', space=sflag, size = 0x4, scoped, tag = 'scoped memory for tpu_custom_call.1']
    #allocation5 [shape = 's32[1]{0}', space=sflag, size = 0x4, scoped, tag = 'scoped memory for tpu_custom_call.1']
    #allocation6 [shape = 'u8[131072]{0}', space=vmem, size = 0x20000, scoped, tag = 'input window, operand 1, single buffered']
    #allocation7 [shape = 's32[1]{0}', space=sflag, size = 0x4, scoped, tag = 'scoped memory for tpu_custom_call.1']
    #allocation8 [shape = 'u8[4096]{0}', space=vmem, size = 0x1000, scoped, tag = 'input window, operand 2, single buffered']
    #allocation9 [shape = 'u8[4096]{0}', space=vmem, size = 0x1000, scoped, tag = 'input window, operand 3, single buffered']
    #allocation10 [shape = 's32[1]{0}', space=sflag, size = 0x4, scoped, tag = 'scoped memory for tpu_custom_call.1']
    #allocation11 [shape = 'u8[4096]{0}', space=vmem, size = 0x1000, scoped, tag = 'input window, operand 4, single buffered']
    #allocation12 [shape = 'u8[4096]{0}', space=vmem, size = 0x1000, scoped, tag = 'input window, operand 5, single buffered']
    #allocation13 [shape = 's32[1]{0}', space=sflag, size = 0x4, scoped, tag = 'scoped memory for tpu_custom_call.1']
    #allocation14 [shape = 'u8[32768]{0}', space=vmem, size = 0x8000, scoped, tag = 'output window, operand 0, single buffered']
    %11 = vsyncpa [#allocation4], 0
    %12 = vsyncpa [#allocation7], 0
    %13 = vsyncpa [#allocation10], 0
    %14 = vsyncpa [#allocation13], 0
    %15 = vsyncpa [#allocation5], 0
    // Predicated region
    $region2: #{tpu_custom_call.1} parent=1 // pred_check
      _
    $region3: #{tpu_custom_call.1} parent=1 // pred_check_branch
      %17 = sbr.rel (0) target = $region5
    $region4: #{tpu_custom_call.1} parent=1 // pred_region
      %s19 = ssub.s32 1024, 1024
      %20 = vsyncadd [#allocation4], %s19
      %s22 = sshll.u32 [#allocation3], 4
      %s23 = int_to_ptr.vmem [resolvable:$true] %s22
      %25 = dma.hbm_to_vmem [thread:$0]  %s0, 1024, %s23, [#allocation4]
    $region5: #{tpu_custom_call.1} parent=1 // pred_fallthru
      _
    // Predicated region
    $region6: #{tpu_custom_call.1} parent=1 // pred_check
      _
    $region7: #{tpu_custom_call.1} parent=1 // pred_check_branch
      %27 = sbr.rel (0) target = $region9
    $region8: #{tpu_custom_call.1} parent=1 // pred_region
      %s29 = ssub.s32 4096, 4096
      %30 = vsyncadd [#allocation7], %s29
      %s31 = sshll.u32 [#allocation6], 4
      %s32 = int_to_ptr.vmem [resolvable:$true] %s31
      %37 = dma.hbm_to_vmem [thread:$0]  %s1, 4096, %s32, [#allocation7], 1024, 1024, 64
    $region9: #{tpu_custom_call.1} parent=1 // pred_fallthru
      _
    // Predicated region
    $region10: #{tpu_custom_call.1} parent=1 // pred_check
      _
    $region11: #{tpu_custom_call.1} parent=1 // pred_check_branch
      %39 = sbr.rel (0) target = $region13
    $region12: #{tpu_custom_call.1} parent=1 // pred_region
      %s41 = ssub.s32 128, 128
      %42 = vsyncadd [#allocation7], %s41
      %s44 = sshll.u32 [#allocation8], 4
      %s45 = int_to_ptr.vmem [resolvable:$true] %s44
      %47 = dma.hbm_to_vmem [thread:$0]  %s2, 128, %s45, [#allocation7]
    $region13: #{tpu_custom_call.1} parent=1 // pred_fallthru
      _
    // Predicated region
    $region14: #{tpu_custom_call.1} parent=1 // pred_check
      _
    $region15: #{tpu_custom_call.1} parent=1 // pred_check_branch
      %49 = sbr.rel (0) target = $region17
    $region16: #{tpu_custom_call.1} parent=1 // pred_region
      %s51 = ssub.s32 128, 128
      %52 = vsyncadd [#allocation10], %s51
      %s54 = sshll.u32 [#allocation9], 4
      %s55 = int_to_ptr.vmem [resolvable:$true] %s54
      %57 = dma.hbm_to_vmem [thread:$0]  %s3, 128, %s55, [#allocation10]
    $region17: #{tpu_custom_call.1} parent=1 // pred_fallthru
      _
    // Predicated region
    $region18: #{tpu_custom_call.1} parent=1 // pred_check
      _
    $region19: #{tpu_custom_call.1} parent=1 // pred_check_branch
      %59 = sbr.rel (0) target = $region21
    $region20: #{tpu_custom_call.1} parent=1 // pred_region
      %s61 = ssub.s32 128, 128
      %62 = vsyncadd [#allocation10], %s61
      %s64 = sshll.u32 [#allocation11], 4
      %s65 = int_to_ptr.vmem [resolvable:$true] %s64
      %67 = dma.hbm_to_vmem [thread:$0]  %s4, 128, %s65, [#allocation10]
    $region21: #{tpu_custom_call.1} parent=1 // pred_fallthru
      _
    // Predicated region
    $region22: #{tpu_custom_call.1} parent=1 // pred_check
      _
    $region23: #{tpu_custom_call.1} parent=1 // pred_check_branch
      %69 = sbr.rel (0) target = $region25
    $region24: #{tpu_custom_call.1} parent=1 // pred_region
      %s71 = ssub.s32 128, 128
      %72 = vsyncadd [#allocation13], %s71
      %s74 = sshll.u32 [#allocation12], 4
      %s75 = int_to_ptr.vmem [resolvable:$true] %s74
      %77 = dma.hbm_to_vmem [thread:$0]  %s5, 128, %s75, [#allocation13]
    $region25: #{tpu_custom_call.1} parent=1 // pred_fallthru
      _
    // Predicated region
    $region26: #{tpu_custom_call.1} parent=1 // pred_check
      _
    $region27: #{tpu_custom_call.1} parent=1 // pred_check_branch
      %79 = sbr.rel (0) target = $region29
    $region28: #{tpu_custom_call.1} parent=1 // pred_region
      %80 = dma.done [#allocation4], 1024
    $region29: #{tpu_custom_call.1} parent=1 // pred_fallthru
      _
    // Predicated region
    $region30: #{tpu_custom_call.1} parent=1 // pred_check
      _
    $region31: #{tpu_custom_call.1} parent=1 // pred_check_branch
      %82 = sbr.rel (0) target = $region33
    $region32: #{tpu_custom_call.1} parent=1 // pred_region
      %83 = dma.done [#allocation7], 4096
    $region33: #{tpu_custom_call.1} parent=1 // pred_fallthru
      _
    // Predicated region
    $region34: #{tpu_custom_call.1} parent=1 // pred_check
      _
    $region35: #{tpu_custom_call.1} parent=1 // pred_check_branch
      %85 = sbr.rel (0) target = $region37
    $region36: #{tpu_custom_call.1} parent=1 // pred_region
      %86 = dma.done [#allocation7], 128
    $region37: #{tpu_custom_call.1} parent=1 // pred_fallthru
      _
    // Predicated region
    $region38: #{tpu_custom_call.1} parent=1 // pred_check
      _
    $region39: #{tpu_custom_call.1} parent=1 // pred_check_branch
      %88 = sbr.rel (0) target = $region41
    $region40: #{tpu_custom_call.1} parent=1 // pred_region
      %89 = dma.done [#allocation10], 128
    $region41: #{tpu_custom_call.1} parent=1 // pred_fallthru
      _
    // Predicated region
    $region42: #{tpu_custom_call.1} parent=1 // pred_check
      _
    $region43: #{tpu_custom_call.1} parent=1 // pred_check_branch
      %91 = sbr.rel (0) target = $region45
    $region44: #{tpu_custom_call.1} parent=1 // pred_region
      %92 = dma.done [#allocation10], 128
    $region45: #{tpu_custom_call.1} parent=1 // pred_fallthru
      _
    // Predicated region
    $region46: #{tpu_custom_call.1} parent=1 // pred_check
      _
    $region47: #{tpu_custom_call.1} parent=1 // pred_check_branch
      %94 = sbr.rel (0) target = $region49
    $region48: #{tpu_custom_call.1} parent=1 // pred_region
      %95 = dma.done [#allocation13], 128
    $region49: #{tpu_custom_call.1} parent=1 // pred_fallthru
      _
    %v97 = vld [vmem:[#allocation3] sm:$0xff]
    %v98 = vld [vmem:[#allocation3 + $0x8] sm:$0xff]
    %v99 = vld [vmem:[#allocation3 + $0x10] sm:$0xff]
    %v100 = vld [vmem:[#allocation3 + $0x18] sm:$0xff]
    %v101 = vld [vmem:[#allocation3 + $0x20] sm:$0xff]
    %v102 = vld [vmem:[#allocation3 + $0x28] sm:$0xff]
    %v103 = vld [vmem:[#allocation3 + $0x30] sm:$0xff]
    %v104 = vld [vmem:[#allocation3 + $0x38] sm:$0xff]
    %v105 = vld [vmem:[#allocation6] sm:$0xff]
    %v106 = vld [vmem:[#allocation6 + $0x8] sm:$0xff]
    %v107 = vld [vmem:[#allocation6 + $0x10] sm:$0xff]
    %v108 = vld [vmem:[#allocation6 + $0x18] sm:$0xff]
    %v109 = vld [vmem:[#allocation6 + $0x20] sm:$0xff]
    %v110 = vld [vmem:[#allocation6 + $0x28] sm:$0xff]
    %v111 = vld [vmem:[#allocation6 + $0x30] sm:$0xff]
    %v112 = vld [vmem:[#allocation6 + $0x38] sm:$0xff]
    %v113 = vld [vmem:[#allocation6 + $0x40] sm:$0xff]
    %v114 = vld [vmem:[#allocation6 + $0x48] sm:$0xff]
    %v115 = vld [vmem:[#allocation6 + $0x50] sm:$0xff]
    %v116 = vld [vmem:[#allocation6 + $0x58] sm:$0xff]
    %v117 = vld [vmem:[#allocation6 + $0x60] sm:$0xff]
    %v118 = vld [vmem:[#allocation6 + $0x68] sm:$0xff]
    %v119 = vld [vmem:[#allocation6 + $0x70] sm:$0xff]
    %v120 = vld [vmem:[#allocation6 + $0x78] sm:$0xff]
    %v121 = vld [vmem:[#allocation6 + $0x80] sm:$0xff]
    %v122 = vld [vmem:[#allocation6 + $0x88] sm:$0xff]
    %v123 = vld [vmem:[#allocation6 + $0x90] sm:$0xff]
    %v124 = vld [vmem:[#allocation6 + $0x98] sm:$0xff]
    %v125 = vld [vmem:[#allocation6 + $0xa0] sm:$0xff]
    %v126 = vld [vmem:[#allocation6 + $0xa8] sm:$0xff]
    %v127 = vld [vmem:[#allocation6 + $0xb0] sm:$0xff]
    %v128 = vld [vmem:[#allocation6 + $0xb8] sm:$0xff]
    %v129 = vld [vmem:[#allocation6 + $0xc0] sm:$0x7]
    %v130 = vld [vmem:[#allocation6 + $0xc8] sm:$0x7]
    %v131 = vld [vmem:[#allocation6 + $0xd0] sm:$0x7]
    %v132 = vld [vmem:[#allocation6 + $0xd8] sm:$0x7]
    %v133 = vld [vmem:[#allocation6 + $0xe0] sm:$0x7]
    %v134 = vld [vmem:[#allocation6 + $0xe8] sm:$0x7]
    %v135 = vld [vmem:[#allocation6 + $0xf0] sm:$0x7]
    %v136 = vld [vmem:[#allocation6 + $0xf8] sm:$0x7]
    %v137 = vld [vmem:[#allocation11] sm:$0xff]
    %v138 = vld [vmem:[#allocation12] sm:$0xff]
    %v139 = vadd.f32 %v97, %v98
    %v140 = vadd.f32 %v139, %v99
    %v141 = vadd.f32 %v140, %v100
    %142 = vadd.xlane.f32.xlu0 %v141
    %v143 = vpop.xlane.xlu0 %142
    %v144 = vmul.f32 %v97, %v97
    %v145 = vmul.f32 %v98, %v98
    %v146 = vmul.f32 %v99, %v99
    %v147 = vmul.f32 %v100, %v100
    %v148 = vadd.f32 %v144, %v145
    %v149 = vadd.f32 %v148, %v146
    %v150 = vadd.f32 %v149, %v147
    %151 = vadd.xlane.f32.xlu0 %v150
    %v152 = vpop.xlane.xlu0 %151
    %v153 = vmul.f32 %v143, %v137
    %vm154 = vcmask 23568
    %v155 = vsel %vm154, %v153, 0.0
    %v156 = vrot.slane %v155, 4
    %v157 = vadd.f32 %v155, %v156
    %v158 = vrot.slane %v157, 2
    %v159 = vadd.f32 %v157, %v158
    %v160 = vrot.slane %v159, 1
    %v161 = vadd.f32 %v159, %v160
    %v162 = vmul.f32 %v137, %v161
    %v163 = vadd.f32 %v162, 0.0
    %v164 = vmul.f32 %v152, %v137
    %v165 = vsel %vm154, %v164, 0.0
    %v166 = vrot.slane %v165, 4
    %v167 = vadd.f32 %v165, %v166
    %v168 = vrot.slane %v167, 2
    %v169 = vadd.f32 %v167, %v168
    %v170 = vrot.slane %v169, 1
    %v171 = vadd.f32 %v169, %v170
    %v172 = vmul.f32 %v137, %v171
    %v173 = vadd.f32 %v172, 0.0
    %vm174 = vcmask 31768
    %v175 = vsel %vm174, %v153, 0.0
    %v176 = vrot.slane %v175, 4
    %v177 = vadd.f32 %v175, %v176
    %v178 = vrot.slane %v177, 2
    %v179 = vadd.f32 %v177, %v178
    %v180 = vrot.slane %v179, 1
    %v181 = vadd.f32 %v179, %v180
    %v182 = vmul.f32 %v137, %v181
    %184 = vrot.lane.b32.xlu0 %v182, 127
    %v185 = vpop.permute.xlu0 %184
    %v187 = vadd.f32 %v163, %v185
    %v188 = vsel %vm174, %v164, 0.0
    %v189 = vrot.slane %v188, 4
    %v190 = vadd.f32 %v188, %v189
    %v191 = vrot.slane %v190, 2
    %v192 = vadd.f32 %v190, %v191
    %v193 = vrot.slane %v192, 1
    %v194 = vadd.f32 %v192, %v193
    %v195 = vmul.f32 %v137, %v194
    %197 = vrot.lane.b32.xlu0 %v195, 127
    %v198 = vpop.permute.xlu0 %197
    %v200 = vadd.f32 %v173, %v198
    %v201 = vmul.f32 %v187, 0.0009765625
    %v202 = vmul.f32 %v200, 0.0009765625
    %v203 = vmul.f32 %v201, %v201
    %v204 = vsub.f32 %v202, %v203
    %v205 = vadd.f32 %v204, 1e-05
    %v206 = vrsqrt.pop %v205
    %208 = vset.pattern.permute.xlu0 2
    %209 = vperm.xlu0 %208, %v201
    %v210 = vpop.permute.xlu0 %209
    %v212 = vsub.f32 %v97, %v210
    %v213 = vsub.f32 %v98, %v210
    %v214 = vsub.f32 %v99, %v210
    %v215 = vsub.f32 %v100, %v210
    %217 = vrot.lane.b32.xlu0 %v137, 2
    %v218 = vpop.permute.xlu0 %217
    %v220 = vmul.f32 %v206, %v218
    %222 = vset.pattern.permute.xlu0 2
    %223 = vperm.xlu0 %222, %v220
    %v224 = vpop.permute.xlu0 %223
    %v226 = vmul.f32 %v212, %v224
    %v227 = vmul.f32 %v213, %v224
    %v228 = vmul.f32 %v214, %v224
    %v229 = vmul.f32 %v215, %v224
    %230 = vset.pattern.permute.xlu0 1
    %231 = vperm.xlu0 %230, %v137
    %v232 = vpop.permute.xlu0 %231
    %v234 = vadd.f32 %v226, %v232
    %v235 = vadd.f32 %v227, %v232
    %v236 = vadd.f32 %v228, %v232
    %v237 = vadd.f32 %v229, %v232
    %v238 = vadd.f32 %v101, %v102
    %v239 = vadd.f32 %v238, %v103
    %v240 = vadd.f32 %v239, %v104
    %241 = vadd.xlane.f32.xlu0 %v240
    %v242 = vpop.xlane.xlu0 %241
    %v243 = vmul.f32 %v101, %v101
    %v244 = vmul.f32 %v102, %v102
    %v245 = vmul.f32 %v103, %v103
    %v246 = vmul.f32 %v104, %v104
    %v247 = vadd.f32 %v243, %v244
    %v248 = vadd.f32 %v247, %v245
    %v249 = vadd.f32 %v248, %v246
    %250 = vadd.xlane.f32.xlu0 %v249
    %v251 = vpop.xlane.xlu0 %250
    %v252 = vmul.f32 %v242, %v137
    %v253 = vsel %vm154, %v252, 0.0
    %v254 = vrot.slane %v253, 4
    %v255 = vadd.f32 %v253, %v254
    %v256 = vrot.slane %v255, 2
    %v257 = vadd.f32 %v255, %v256
    %v258 = vrot.slane %v257, 1
    %v259 = vadd.f32 %v257, %v258
    %v260 = vmul.f32 %v137, %v259
    %v261 = vadd.f32 %v260, 0.0
    %v262 = vmul.f32 %v251, %v137
    %v263 = vsel %vm154, %v262, 0.0
    %v264 = vrot.slane %v263, 4
    %v265 = vadd.f32 %v263, %v264
    %v266 = vrot.slane %v265, 2
    %v267 = vadd.f32 %v265, %v266
    %v268 = vrot.slane %v267, 1
    %v269 = vadd.f32 %v267, %v268
    %v270 = vmul.f32 %v137, %v269
    %v271 = vadd.f32 %v270, 0.0
    %v272 = vsel %vm174, %v252, 0.0
    %v273 = vrot.slane %v272, 4
    %v274 = vadd.f32 %v272, %v273
    %v275 = vrot.slane %v274, 2
    %v276 = vadd.f32 %v274, %v275
    %v277 = vrot.slane %v276, 1
    %v278 = vadd.f32 %v276, %v277
    %v279 = vmul.f32 %v137, %v278
    %281 = vrot.lane.b32.xlu0 %v279, 127
    %v282 = vpop.permute.xlu0 %281
    %v284 = vadd.f32 %v261, %v282
    %v285 = vsel %vm174, %v262, 0.0
    %v286 = vrot.slane %v285, 4
    %v287 = vadd.f32 %v285, %v286
    %v288 = vrot.slane %v287, 2
    %v289 = vadd.f32 %v287, %v288
    %v290 = vrot.slane %v289, 1
    %v291 = vadd.f32 %v289, %v290
    %v292 = vmul.f32 %v137, %v291
    %294 = vrot.lane.b32.xlu0 %v292, 127
    %v295 = vpop.permute.xlu0 %294
    %v297 = vadd.f32 %v271, %v295
    %v298 = vmul.f32 %v284, 0.0009765625
    %v299 = vmul.f32 %v297, 0.0009765625
    %v300 = vmul.f32 %v298, %v298
    %v301 = vsub.f32 %v299, %v300
    %v302 = vadd.f32 %v301, 1e-05
    %v303 = vrsqrt.pop %v302
    %305 = vset.pattern.permute.xlu0 2
    %306 = vperm.xlu0 %305, %v298
    %v307 = vpop.permute.xlu0 %306
    %v309 = vsub.f32 %v101, %v307
    %v310 = vsub.f32 %v102, %v307
    %v311 = vsub.f32 %v103, %v307
    %v312 = vsub.f32 %v104, %v307
    %v313 = vmul.f32 %v303, %v218
    %315 = vset.pattern.permute.xlu0 2
    %316 = vperm.xlu0 %315, %v313
    %v317 = vpop.permute.xlu0 %316
    %v319 = vmul.f32 %v309, %v317
    %v320 = vmul.f32 %v310, %v317
    %v321 = vmul.f32 %v311, %v317
    %v322 = vmul.f32 %v312, %v317
    %v323 = vadd.f32 %v319, %v232
    %v324 = vadd.f32 %v320, %v232
    %v325 = vadd.f32 %v321, %v232
    %v326 = vadd.f32 %v322, %v232
    %v327 = vxor.u32 %v234, 2147483648
    %v328 = vxor.u32 %v235, 2147483648
    %v329 = vxor.u32 %v236, 2147483648
    %v330 = vxor.u32 %v237, 2147483648
    %v331 = vxor.u32 %v323, 2147483648
    %v332 = vxor.u32 %v324, 2147483648
    %v333 = vxor.u32 %v325, 2147483648
    %v334 = vxor.u32 %v326, 2147483648
    %v335 = vmul.f32 %v327, 1.442695
    %v336 = vpow.pop %v335
    %v337 = vmul.f32 %v328, 1.442695
    %v338 = vpow.pop %v337
    %v339 = vmul.f32 %v329, 1.442695
    %v340 = vpow.pop %v339
    %v341 = vmul.f32 %v330, 1.442695
    %v342 = vpow.pop %v341
    %v343 = vmul.f32 %v331, 1.442695
    %v344 = vpow.pop %v343
    %v345 = vmul.f32 %v332, 1.442695
    %v346 = vpow.pop %v345
    %v347 = vmul.f32 %v333, 1.442695
    %v348 = vpow.pop %v347
    %v349 = vmul.f32 %v334, 1.442695
    %v350 = vpow.pop %v349
    %v351 = vadd.f32 %v336, 1.0
    %v352 = vadd.f32 %v338, 1.0
    %v353 = vadd.f32 %v340, 1.0
    %v354 = vadd.f32 %v342, 1.0
    %v355 = vadd.f32 %v344, 1.0
    %v356 = vadd.f32 %v346, 1.0
    %v357 = vadd.f32 %v348, 1.0
    %v358 = vadd.f32 %v350, 1.0
    %v359 = vrcp.pop %v351
    %v360 = vmul.f32 1.0, %v359
    %v361 = vrcp.pop %v352
    %v362 = vmul.f32 1.0, %v361
    %v363 = vrcp.pop %v353
    %v364 = vmul.f32 1.0, %v363
    %v365 = vrcp.pop %v354
    %v366 = vmul.f32 1.0, %v365
    %v367 = vrcp.pop %v355
    %v368 = vmul.f32 1.0, %v367
    %v369 = vrcp.pop %v356
    %v370 = vmul.f32 1.0, %v369
    %v371 = vrcp.pop %v357
    %v372 = vmul.f32 1.0, %v371
    %v373 = vrcp.pop %v358
    %v374 = vmul.f32 1.0, %v373
    %v375 = vmul.f32 %v234, %v360
    %v376 = vmul.f32 %v235, %v362
    %v377 = vmul.f32 %v236, %v364
    %v378 = vmul.f32 %v237, %v366
    %v379 = vmul.f32 %v323, %v368
    %v380 = vmul.f32 %v324, %v370
    %v381 = vmul.f32 %v325, %v372
    %v382 = vmul.f32 %v326, %v374
    %383 = vrot.lane.b32.xlu0 %v375, 73
    %v384 = vpop.permute.xlu0 %383
    %385 = vrot.lane.b32.xlu0 %v376, 73
    %v386 = vpop.permute.xlu0 %385
    %387 = vrot.lane.b32.xlu0 %v377, 73
    %v388 = vpop.permute.xlu0 %387
    %389 = vrot.lane.b32.xlu0 %v378, 73
    %v390 = vpop.permute.xlu0 %389
    %391 = vrot.lane.b32.xlu0 %v379, 73
    %v392 = vpop.permute.xlu0 %391
    %393 = vrot.lane.b32.xlu0 %v380, 73
    %v394 = vpop.permute.xlu0 %393
    %395 = vrot.lane.b32.xlu0 %v381, 73
    %v396 = vpop.permute.xlu0 %395
    %397 = vrot.lane.b32.xlu0 %v382, 73
    %v398 = vpop.permute.xlu0 %397
    %v399 = vlaneseq
    %v400 = vand.u32 %v399, 127
    %vm401 = vcmp.lt.s32.totalorder %v400, 73
    %v402 = vsel %vm401, %v396, %v398
    %v403 = vsel %vm401, %v394, %v396
    %v404 = vsel %vm401, %v392, %v394
    %v405 = vsel %vm401, %v390, %v392
    %v406 = vsel %vm401, %v388, %v390
    %v407 = vsel %vm401, %v386, %v388
    %v408 = vsel %vm401, %v384, %v386
    %v409 = vsel %vm401, %v398, %v384
    %v410 = vlaneseq
    %v411 = vshrl.u32 %v410, 7
    %v412 = vsub.s32 0, %v411
    %v413 = vrot.slane %v105, %v412
    %v414 = vlaneseq
    %v415 = vshrl.u32 %v414, 7
    %v416 = vsub.s32 0, %v415
    %v417 = vrot.slane %v106, %v416
    %v418 = vlaneseq
    %v419 = vshrl.u32 %v418, 7
    %v420 = vsub.s32 0, %v419
    %v421 = vrot.slane %v107, %v420
    %v422 = vlaneseq
    %v423 = vshrl.u32 %v422, 7
    %v424 = vsub.s32 0, %v423
    %v425 = vrot.slane %v108, %v424
    %v426 = vlaneseq
    %v427 = vshrl.u32 %v426, 7
    %v428 = vsub.s32 0, %v427
    %v429 = vrot.slane %v109, %v428
    %v430 = vlaneseq
    %v431 = vshrl.u32 %v430, 7
    %v432 = vsub.s32 0, %v431
    %v433 = vrot.slane %v110, %v432
    %v434 = vlaneseq
    %v435 = vshrl.u32 %v434, 7
    %v436 = vsub.s32 0, %v435
    %v437 = vrot.slane %v111, %v436
    %v438 = vlaneseq
    %v439 = vshrl.u32 %v438, 7
    %v440 = vsub.s32 0, %v439
    %v441 = vrot.slane %v112, %v440
    %v442 = vmul.f32 %v409, %v413
    %v443 = vmul.f32 %v408, %v417
    %v444 = vmul.f32 %v407, %v421
    %v445 = vmul.f32 %v406, %v425
    %v446 = vmul.f32 %v405, %v429
    %v447 = vmul.f32 %v404, %v433
    %v448 = vmul.f32 %v403, %v437
    %v449 = vmul.f32 %v402, %v441
    %v450 = vpack.c.bf16 %v442, %v442
    %v451 = vpack.c.bf16 %v443, %v443
    %v452 = vpack.c.bf16 %v444, %v444
    %v453 = vpack.c.bf16 %v445, %v445
    %v454 = vpack.c.bf16 %v446, %v446
    %v455 = vpack.c.bf16 %v447, %v447
    %v456 = vpack.c.bf16 %v448, %v448
    %v457 = vpack.c.bf16 %v449, %v449
    %458 = vst [vmem:[#allocation2] sm:$0xf] %v450
    %459 = vst [vmem:[#allocation2 + $0x8] sm:$0xf] %v451
    %460 = vst [vmem:[#allocation2 + $0x10] sm:$0xf] %v452
    %461 = vst [vmem:[#allocation2 + $0x18] sm:$0xf] %v453
    %462 = vst [vmem:[#allocation2 + $0x20] sm:$0xf] %v454
    %463 = vst [vmem:[#allocation2 + $0x28] sm:$0xf] %v455
    %464 = vst [vmem:[#allocation2 + $0x30] sm:$0xf] %v456
    %465 = vst [vmem:[#allocation2 + $0x38] sm:$0xf] %v457
    %466 = vrot.lane.b32.xlu0 %v375, 72
    %v467 = vpop.permute.xlu0 %466
    %468 = vrot.lane.b32.xlu0 %v376, 72
    %v469 = vpop.permute.xlu0 %468
    %470 = vrot.lane.b32.xlu0 %v377, 72
    %v471 = vpop.permute.xlu0 %470
    %472 = vrot.lane.b32.xlu0 %v378, 72
    %v473 = vpop.permute.xlu0 %472
    %474 = vrot.lane.b32.xlu0 %v379, 72
    %v475 = vpop.permute.xlu0 %474
    %476 = vrot.lane.b32.xlu0 %v380, 72
    %v477 = vpop.permute.xlu0 %476
    %478 = vrot.lane.b32.xlu0 %v381, 72
    %v479 = vpop.permute.xlu0 %478
    %480 = vrot.lane.b32.xlu0 %v382, 72
    %v481 = vpop.permute.xlu0 %480
    %vm482 = vcmp.lt.s32.totalorder %v400, 72
    %v483 = vsel %vm482, %v479, %v481
    %v484 = vsel %vm482, %v477, %v479
    %v485 = vsel %vm482, %v475, %v477
    %v486 = vsel %vm482, %v473, %v475
    %v487 = vsel %vm482, %v471, %v473
    %v488 = vsel %vm482, %v469, %v471
    %v489 = vsel %vm482, %v467, %v469
    %v490 = vsel %vm482, %v481, %v467
    %v491 = vlaneseq
    %v492 = vshrl.u32 %v491, 7
    %v493 = vsub.s32 1, %v492
    %v494 = vrot.slane %v105, %v493
    %v495 = vlaneseq
    %v496 = vshrl.u32 %v495, 7
    %v497 = vsub.s32 1, %v496
    %v498 = vrot.slane %v106, %v497
    %v499 = vlaneseq
    %v500 = vshrl.u32 %v499, 7
    %v501 = vsub.s32 1, %v500
    %v502 = vrot.slane %v107, %v501
    %v503 = vlaneseq
    %v504 = vshrl.u32 %v503, 7
    %v505 = vsub.s32 1, %v504
    %v506 = vrot.slane %v108, %v505
    %v507 = vlaneseq
    %v508 = vshrl.u32 %v507, 7
    %v509 = vsub.s32 1, %v508
    %v510 = vrot.slane %v109, %v509
    %v511 = vlaneseq
    %v512 = vshrl.u32 %v511, 7
    %v513 = vsub.s32 1, %v512
    %v514 = vrot.slane %v110, %v513
    %v515 = vlaneseq
    %v516 = vshrl.u32 %v515, 7
    %v517 = vsub.s32 1, %v516
    %v518 = vrot.slane %v111, %v517
    %v519 = vlaneseq
    %v520 = vshrl.u32 %v519, 7
    %v521 = vsub.s32 1, %v520
    %v522 = vrot.slane %v112, %v521
    %v523 = vmul.f32 %v490, %v494
    %v524 = vmul.f32 %v489, %v498
    %v525 = vmul.f32 %v488, %v502
    %v526 = vmul.f32 %v487, %v506
    %v527 = vmul.f32 %v486, %v510
    %v528 = vmul.f32 %v485, %v514
    %v529 = vmul.f32 %v484, %v518
    %v530 = vmul.f32 %v483, %v522
    %v531 = vpack.c.bf16 %v523, %v523
    %v532 = vpack.c.bf16 %v524, %v524
    %v533 = vpack.c.bf16 %v525, %v525
    %v534 = vpack.c.bf16 %v526, %v526
    %v535 = vpack.c.bf16 %v527, %v527
    %v536 = vpack.c.bf16 %v528, %v528
    %v537 = vpack.c.bf16 %v529, %v529
    %v538 = vpack.c.bf16 %v530, %v530
    %v547 = vrot.slane %v531, 4
    %v548 = vrot.slane %v532, 4
    %v549 = vrot.slane %v533, 4
    %v550 = vrot.slane %v534, 4
    %v551 = vrot.slane %v535, 4
    %v552 = vrot.slane %v536, 4
    %v553 = vrot.slane %v537, 4
    %v554 = vrot.slane %v538, 4
    %563 = vst [vmem:[#allocation2] sm:$0xf0] %v547
    %564 = vst [vmem:[#allocation2 + $0x8] sm:$0xf0] %v548
    %565 = vst [vmem:[#allocation2 + $0x10] sm:$0xf0] %v549
    %566 = vst [vmem:[#allocation2 + $0x18] sm:$0xf0] %v550
    %567 = vst [vmem:[#allocation2 + $0x20] sm:$0xf0] %v551
    %568 = vst [vmem:[#allocation2 + $0x28] sm:$0xf0] %v552
    %569 = vst [vmem:[#allocation2 + $0x30] sm:$0xf0] %v553
    %570 = vst [vmem:[#allocation2 + $0x38] sm:$0xf0] %v554
    %571 = vrot.lane.b32.xlu0 %v375, 71
    %v572 = vpop.permute.xlu0 %571
    %573 = vrot.lane.b32.xlu0 %v376, 71
    %v574 = vpop.permute.xlu0 %573
    %575 = vrot.lane.b32.xlu0 %v377, 71
    %v576 = vpop.permute.xlu0 %575
    %577 = vrot.lane.b32.xlu0 %v378, 71
    %v578 = vpop.permute.xlu0 %577
    %579 = vrot.lane.b32.xlu0 %v379, 71
    %v580 = vpop.permute.xlu0 %579
    %581 = vrot.lane.b32.xlu0 %v380, 71
    %v582 = vpop.permute.xlu0 %581
    %583 = vrot.lane.b32.xlu0 %v381, 71
    %v584 = vpop.permute.xlu0 %583
    %585 = vrot.lane.b32.xlu0 %v382, 71
    %v586 = vpop.permute.xlu0 %585
    %vm587 = vcmp.lt.s32.totalorder %v400, 71
    %v588 = vsel %vm587, %v584, %v586
    %v589 = vsel %vm587, %v582, %v584
    %v590 = vsel %vm587, %v580, %v582
    %v591 = vsel %vm587, %v578, %v580
    %v592 = vsel %vm587, %v576, %v578
    %v593 = vsel %vm587, %v574, %v576
    %v594 = vsel %vm587, %v572, %v574
    %v595 = vsel %vm587, %v586, %v572
    %v596 = vlaneseq
    %v597 = vshrl.u32 %v596, 7
    %v598 = vsub.s32 2, %v597
    %v599 = vrot.slane %v105, %v598
    %v600 = vlaneseq
    %v601 = vshrl.u32 %v600, 7
    %v602 = vsub.s32 2, %v601
    %v603 = vrot.slane %v106, %v602
    %v604 = vlaneseq
    %v605 = vshrl.u32 %v604, 7
    %v606 = vsub.s32 2, %v605
    %v607 = vrot.slane %v107, %v606
    %v608 = vlaneseq
    %v609 = vshrl.u32 %v608, 7
    %v610 = vsub.s32 2, %v609
    %v611 = vrot.slane %v108, %v610
    %v612 = vlaneseq
    %v613 = vshrl.u32 %v612, 7
    %v614 = vsub.s32 2, %v613
    %v615 = vrot.slane %v109, %v614
    %v616 = vlaneseq
    %v617 = vshrl.u32 %v616, 7
    %v618 = vsub.s32 2, %v617
    %v619 = vrot.slane %v110, %v618
    %v620 = vlaneseq
    %v621 = vshrl.u32 %v620, 7
    %v622 = vsub.s32 2, %v621
    %v623 = vrot.slane %v111, %v622
    %v624 = vlaneseq
    %v625 = vshrl.u32 %v624, 7
    %v626 = vsub.s32 2, %v625
    %v627 = vrot.slane %v112, %v626
    %v628 = vmul.f32 %v595, %v599
    %v629 = vmul.f32 %v594, %v603
    %v630 = vmul.f32 %v593, %v607
    %v631 = vmul.f32 %v592, %v611
    %v632 = vmul.f32 %v591, %v615
    %v633 = vmul.f32 %v590, %v619
    %v634 = vmul.f32 %v589, %v623
    %v635 = vmul.f32 %v588, %v627
    %v636 = vpack.c.bf16 %v628, %v628
    %v637 = vpack.c.bf16 %v629, %v629
    %v638 = vpack.c.bf16 %v630, %v630
    %v639 = vpack.c.bf16 %v631, %v631
    %v640 = vpack.c.bf16 %v632, %v632
    %v641 = vpack.c.bf16 %v633, %v633
    %v642 = vpack.c.bf16 %v634, %v634
    %v643 = vpack.c.bf16 %v635, %v635
    %644 = vst [vmem:[#allocation2 + $0x40] sm:$0xf] %v636
    %645 = vst [vmem:[#allocation2 + $0x48] sm:$0xf] %v637
    %646 = vst [vmem:[#allocation2 + $0x50] sm:$0xf] %v638
    %647 = vst [vmem:[#allocation2 + $0x58] sm:$0xf] %v639
    %648 = vst [vmem:[#allocation2 + $0x60] sm:$0xf] %v640
    %649 = vst [vmem:[#allocation2 + $0x68] sm:$0xf] %v641
    %650 = vst [vmem:[#allocation2 + $0x70] sm:$0xf] %v642
    %651 = vst [vmem:[#allocation2 + $0x78] sm:$0xf] %v643
    %652 = vrot.lane.b32.xlu0 %v375, 65
    %v653 = vpop.permute.xlu0 %652
    %654 = vrot.lane.b32.xlu0 %v376, 65
    %v655 = vpop.permute.xlu0 %654
    %656 = vrot.lane.b32.xlu0 %v377, 65
    %v657 = vpop.permute.xlu0 %656
    %658 = vrot.lane.b32.xlu0 %v378, 65
    %v659 = vpop.permute.xlu0 %658
    %660 = vrot.lane.b32.xlu0 %v379, 65
    %v661 = vpop.permute.xlu0 %660
    %662 = vrot.lane.b32.xlu0 %v380, 65
    %v663 = vpop.permute.xlu0 %662
    %664 = vrot.lane.b32.xlu0 %v381, 65
    %v665 = vpop.permute.xlu0 %664
    %666 = vrot.lane.b32.xlu0 %v382, 65
    %v667 = vpop.permute.xlu0 %666
    %vm668 = vcmp.lt.s32.totalorder %v400, 65
    %v669 = vsel %vm668, %v665, %v667
    %v670 = vsel %vm668, %v663, %v665
    %v671 = vsel %vm668, %v661, %v663
    %v672 = vsel %vm668, %v659, %v661
    %v673 = vsel %vm668, %v657, %v659
    %v674 = vsel %vm668, %v655, %v657
    %v675 = vsel %vm668, %v653, %v655
    %v676 = vsel %vm668, %v667, %v653
    %v677 = vlaneseq
    %v678 = vshrl.u32 %v677, 7
    %v679 = vsub.s32 3, %v678
    %v680 = vrot.slane %v105, %v679
    %v681 = vlaneseq
    %v682 = vshrl.u32 %v681, 7
    %v683 = vsub.s32 3, %v682
    %v684 = vrot.slane %v106, %v683
    %v685 = vlaneseq
    %v686 = vshrl.u32 %v685, 7
    %v687 = vsub.s32 3, %v686
    %v688 = vrot.slane %v107, %v687
    %v689 = vlaneseq
    %v690 = vshrl.u32 %v689, 7
    %v691 = vsub.s32 3, %v690
    %v692 = vrot.slane %v108, %v691
    %v693 = vlaneseq
    %v694 = vshrl.u32 %v693, 7
    %v695 = vsub.s32 3, %v694
    %v696 = vrot.slane %v109, %v695
    %v697 = vlaneseq
    %v698 = vshrl.u32 %v697, 7
    %v699 = vsub.s32 3, %v698
    %v700 = vrot.slane %v110, %v699
    %v701 = vlaneseq
    %v702 = vshrl.u32 %v701, 7
    %v703 = vsub.s32 3, %v702
    %v704 = vrot.slane %v111, %v703
    %v705 = vlaneseq
    %v706 = vshrl.u32 %v705, 7
    %v707 = vsub.s32 3, %v706
    %v708 = vrot.slane %v112, %v707
    %v709 = vmul.f32 %v676, %v680
    %v710 = vmul.f32 %v675, %v684
    %v711 = vmul.f32 %v674, %v688
    %v712 = vmul.f32 %v673, %v692
    %v713 = vmul.f32 %v672, %v696
    %v714 = vmul.f32 %v671, %v700
    %v715 = vmul.f32 %v670, %v704
    %v716 = vmul.f32 %v669, %v708
    %v717 = vpack.c.bf16 %v709, %v709
    %v718 = vpack.c.bf16 %v710, %v710
    %v719 = vpack.c.bf16 %v711, %v711
    %v720 = vpack.c.bf16 %v712, %v712
    %v721 = vpack.c.bf16 %v713, %v713
    %v722 = vpack.c.bf16 %v714, %v714
    %v723 = vpack.c.bf16 %v715, %v715
    %v724 = vpack.c.bf16 %v716, %v716
    %v733 = vrot.slane %v717, 4
    %v734 = vrot.slane %v718, 4
    %v735 = vrot.slane %v719, 4
    %v736 = vrot.slane %v720, 4
    %v737 = vrot.slane %v721, 4
    %v738 = vrot.slane %v722, 4
    %v739 = vrot.slane %v723, 4
    %v740 = vrot.slane %v724, 4
    %749 = vst [vmem:[#allocation2 + $0x40] sm:$0xf0] %v733
    %750 = vst [vmem:[#allocation2 + $0x48] sm:$0xf0] %v734
    %751 = vst [vmem:[#allocation2 + $0x50] sm:$0xf0] %v735
    %752 = vst [vmem:[#allocation2 + $0x58] sm:$0xf0] %v736
    %753 = vst [vmem:[#allocation2 + $0x60] sm:$0xf0] %v737
    %754 = vst [vmem:[#allocation2 + $0x68] sm:$0xf0] %v738
    %755 = vst [vmem:[#allocation2 + $0x70] sm:$0xf0] %v739
    %756 = vst [vmem:[#allocation2 + $0x78] sm:$0xf0] %v740
    %757 = vrot.lane.b32.xlu0 %v375, 64
    %v758 = vpop.permute.xlu0 %757
    %759 = vrot.lane.b32.xlu0 %v376, 64
    %v760 = vpop.permute.xlu0 %759
    %761 = vrot.lane.b32.xlu0 %v377, 64
    %v762 = vpop.permute.xlu0 %761
    %763 = vrot.lane.b32.xlu0 %v378, 64
    %v764 = vpop.permute.xlu0 %763
    %765 = vrot.lane.b32.xlu0 %v379, 64
    %v766 = vpop.permute.xlu0 %765
    %767 = vrot.lane.b32.xlu0 %v380, 64
    %v768 = vpop.permute.xlu0 %767
    %769 = vrot.lane.b32.xlu0 %v381, 64
    %v770 = vpop.permute.xlu0 %769
    %771 = vrot.lane.b32.xlu0 %v382, 64
    %v772 = vpop.permute.xlu0 %771
    %vm773 = vcmp.lt.s32.totalorder %v400, 64
    %v774 = vsel %vm773, %v770, %v772
    %v775 = vsel %vm773, %v768, %v770
    %v776 = vsel %vm773, %v766, %v768
    %v777 = vsel %vm773, %v764, %v766
    %v778 = vsel %vm773, %v762, %v764
    %v779 = vsel %vm773, %v760, %v762
    %v780 = vsel %vm773, %v758, %v760
    %v781 = vsel %vm773, %v772, %v758
    %v782 = vlaneseq
    %v783 = vshrl.u32 %v782, 7
    %v784 = vsub.s32 4, %v783
    %v785 = vrot.slane %v105, %v784
    %v786 = vlaneseq
    %v787 = vshrl.u32 %v786, 7
    %v788 = vsub.s32 4, %v787
    %v789 = vrot.slane %v106, %v788
    %v790 = vlaneseq
    %v791 = vshrl.u32 %v790, 7
    %v792 = vsub.s32 4, %v791
    %v793 = vrot.slane %v107, %v792
    %v794 = vlaneseq
    %v795 = vshrl.u32 %v794, 7
    %v796 = vsub.s32 4, %v795
    %v797 = vrot.slane %v108, %v796
    %v798 = vlaneseq
    %v799 = vshrl.u32 %v798, 7
    %v800 = vsub.s32 4, %v799
    %v801 = vrot.slane %v109, %v800
    %v802 = vlaneseq
    %v803 = vshrl.u32 %v802, 7
    %v804 = vsub.s32 4, %v803
    %v805 = vrot.slane %v110, %v804
    %v806 = vlaneseq
    %v807 = vshrl.u32 %v806, 7
    %v808 = vsub.s32 4, %v807
    %v809 = vrot.slane %v111, %v808
    %v810 = vlaneseq
    %v811 = vshrl.u32 %v810, 7
    %v812 = vsub.s32 4, %v811
    %v813 = vrot.slane %v112, %v812
    %v814 = vmul.f32 %v781, %v785
    %v815 = vmul.f32 %v780, %v789
    %v816 = vmul.f32 %v779, %v793
    %v817 = vmul.f32 %v778, %v797
    %v818 = vmul.f32 %v777, %v801
    %v819 = vmul.f32 %v776, %v805
    %v820 = vmul.f32 %v775, %v809
    %v821 = vmul.f32 %v774, %v813
    %v822 = vpack.c.bf16 %v814, %v814
    %v823 = vpack.c.bf16 %v815, %v815
    %v824 = vpack.c.bf16 %v816, %v816
    %v825 = vpack.c.bf16 %v817, %v817
    %v826 = vpack.c.bf16 %v818, %v818
    %v827 = vpack.c.bf16 %v819, %v819
    %v828 = vpack.c.bf16 %v820, %v820
    %v829 = vpack.c.bf16 %v821, %v821
    %830 = vst [vmem:[#allocation2 + $0x80] sm:$0xf] %v822
    %831 = vst [vmem:[#allocation2 + $0x88] sm:$0xf] %v823
    %832 = vst [vmem:[#allocation2 + $0x90] sm:$0xf] %v824
    %833 = vst [vmem:[#allocation2 + $0x98] sm:$0xf] %v825
    %834 = vst [vmem:[#allocation2 + $0xa0] sm:$0xf] %v826
    %835 = vst [vmem:[#allocation2 + $0xa8] sm:$0xf] %v827
    %836 = vst [vmem:[#allocation2 + $0xb0] sm:$0xf] %v828
    %837 = vst [vmem:[#allocation2 + $0xb8] sm:$0xf] %v829
    %838 = vrot.lane.b32.xlu0 %v375, 63
    %v839 = vpop.permute.xlu0 %838
    %840 = vrot.lane.b32.xlu0 %v376, 63
    %v841 = vpop.permute.xlu0 %840
    %842 = vrot.lane.b32.xlu0 %v377, 63
    %v843 = vpop.permute.xlu0 %842
    %844 = vrot.lane.b32.xlu0 %v378, 63
    %v845 = vpop.permute.xlu0 %844
    %846 = vrot.lane.b32.xlu0 %v379, 63
    %v847 = vpop.permute.xlu0 %846
    %848 = vrot.lane.b32.xlu0 %v380, 63
    %v849 = vpop.permute.xlu0 %848
    %850 = vrot.lane.b32.xlu0 %v381, 63
    %v851 = vpop.permute.xlu0 %850
    %852 = vrot.lane.b32.xlu0 %v382, 63
    %v853 = vpop.permute.xlu0 %852
    %vm854 = vcmp.lt.s32.totalorder %v400, 63
    %v855 = vsel %vm854, %v851, %v853
    %v856 = vsel %vm854, %v849, %v851
    %v857 = vsel %vm854, %v847, %v849
    %v858 = vsel %vm854, %v845, %v847
    %v859 = vsel %vm854, %v843, %v845
    %v860 = vsel %vm854, %v841, %v843
    %v861 = vsel %vm854, %v839, %v841
    %v862 = vsel %vm854, %v853, %v839
    %v863 = vlaneseq
    %v864 = vshrl.u32 %v863, 7
    %v865 = vsub.s32 5, %v864
    %v866 = vrot.slane %v105, %v865
    %v867 = vlaneseq
    %v868 = vshrl.u32 %v867, 7
    %v869 = vsub.s32 5, %v868
    %v870 = vrot.slane %v106, %v869
    %v871 = vlaneseq
    %v872 = vshrl.u32 %v871, 7
    %v873 = vsub.s32 5, %v872
    %v874 = vrot.slane %v107, %v873
    %v875 = vlaneseq
    %v876 = vshrl.u32 %v875, 7
    %v877 = vsub.s32 5, %v876
    %v878 = vrot.slane %v108, %v877
    %v879 = vlaneseq
    %v880 = vshrl.u32 %v879, 7
    %v881 = vsub.s32 5, %v880
    %v882 = vrot.slane %v109, %v881
    %v883 = vlaneseq
    %v884 = vshrl.u32 %v883, 7
    %v885 = vsub.s32 5, %v884
    %v886 = vrot.slane %v110, %v885
    %v887 = vlaneseq
    %v888 = vshrl.u32 %v887, 7
    %v889 = vsub.s32 5, %v888
    %v890 = vrot.slane %v111, %v889
    %v891 = vlaneseq
    %v892 = vshrl.u32 %v891, 7
    %v893 = vsub.s32 5, %v892
    %v894 = vrot.slane %v112, %v893
    %v895 = vmul.f32 %v862, %v866
    %v896 = vmul.f32 %v861, %v870
    %v897 = vmul.f32 %v860, %v874
    %v898 = vmul.f32 %v859, %v878
    %v899 = vmul.f32 %v858, %v882
    %v900 = vmul.f32 %v857, %v886
    %v901 = vmul.f32 %v856, %v890
    %v902 = vmul.f32 %v855, %v894
    %v903 = vpack.c.bf16 %v895, %v895
    %v904 = vpack.c.bf16 %v896, %v896
    %v905 = vpack.c.bf16 %v897, %v897
    %v906 = vpack.c.bf16 %v898, %v898
    %v907 = vpack.c.bf16 %v899, %v899
    %v908 = vpack.c.bf16 %v900, %v900
    %v909 = vpack.c.bf16 %v901, %v901
    %v910 = vpack.c.bf16 %v902, %v902
    %v919 = vrot.slane %v903, 4
    %v920 = vrot.slane %v904, 4
    %v921 = vrot.slane %v905, 4
    %v922 = vrot.slane %v906, 4
    %v923 = vrot.slane %v907, 4
    %v924 = vrot.slane %v908, 4
    %v925 = vrot.slane %v909, 4
    %v926 = vrot.slane %v910, 4
    %935 = vst [vmem:[#allocation2 + $0x80] sm:$0xf0] %v919
    %936 = vst [vmem:[#allocation2 + $0x88] sm:$0xf0] %v920
    %937 = vst [vmem:[#allocation2 + $0x90] sm:$0xf0] %v921
    %938 = vst [vmem:[#allocation2 + $0x98] sm:$0xf0] %v922
    %939 = vst [vmem:[#allocation2 + $0xa0] sm:$0xf0] %v923
    %940 = vst [vmem:[#allocation2 + $0xa8] sm:$0xf0] %v924
    %941 = vst [vmem:[#allocation2 + $0xb0] sm:$0xf0] %v925
    %942 = vst [vmem:[#allocation2 + $0xb8] sm:$0xf0] %v926
    %943 = vrot.lane.b32.xlu0 %v375, 57
    %v944 = vpop.permute.xlu0 %943
    %945 = vrot.lane.b32.xlu0 %v376, 57
    %v946 = vpop.permute.xlu0 %945
    %947 = vrot.lane.b32.xlu0 %v377, 57
    %v948 = vpop.permute.xlu0 %947
    %949 = vrot.lane.b32.xlu0 %v378, 57
    %v950 = vpop.permute.xlu0 %949
    %951 = vrot.lane.b32.xlu0 %v379, 57
    %v952 = vpop.permute.xlu0 %951
    %953 = vrot.lane.b32.xlu0 %v380, 57
    %v954 = vpop.permute.xlu0 %953
    %955 = vrot.lane.b32.xlu0 %v381, 57
    %v956 = vpop.permute.xlu0 %955
    %957 = vrot.lane.b32.xlu0 %v382, 57
    %v958 = vpop.permute.xlu0 %957
    %vm959 = vcmp.lt.s32.totalorder %v400, 57
    %v960 = vsel %vm959, %v956, %v958
    %v961 = vsel %vm959, %v954, %v956
    %v962 = vsel %vm959, %v952, %v954
    %v963 = vsel %vm959, %v950, %v952
    %v964 = vsel %vm959, %v948, %v950
    %v965 = vsel %vm959, %v946, %v948
    %v966 = vsel %vm959, %v944, %v946
    %v967 = vsel %vm959, %v958, %v944
    %v968 = vlaneseq
    %v969 = vshrl.u32 %v968, 7
    %v970 = vsub.s32 6, %v969
    %v971 = vrot.slane %v105, %v970
    %v972 = vlaneseq
    %v973 = vshrl.u32 %v972, 7
    %v974 = vsub.s32 6, %v973
    %v975 = vrot.slane %v106, %v974
    %v976 = vlaneseq
    %v977 = vshrl.u32 %v976, 7
    %v978 = vsub.s32 6, %v977
    %v979 = vrot.slane %v107, %v978
    %v980 = vlaneseq
    %v981 = vshrl.u32 %v980, 7
    %v982 = vsub.s32 6, %v981
    %v983 = vrot.slane %v108, %v982
    %v984 = vlaneseq
    %v985 = vshrl.u32 %v984, 7
    %v986 = vsub.s32 6, %v985
    %v987 = vrot.slane %v109, %v986
    %v988 = vlaneseq
    %v989 = vshrl.u32 %v988, 7
    %v990 = vsub.s32 6, %v989
    %v991 = vrot.slane %v110, %v990
    %v992 = vlaneseq
    %v993 = vshrl.u32 %v992, 7
    %v994 = vsub.s32 6, %v993
    %v995 = vrot.slane %v111, %v994
    %v996 = vlaneseq
    %v997 = vshrl.u32 %v996, 7
    %v998 = vsub.s32 6, %v997
    %v999 = vrot.slane %v112, %v998
    %v1000 = vmul.f32 %v967, %v971
    %v1001 = vmul.f32 %v966, %v975
    %v1002 = vmul.f32 %v965, %v979
    %v1003 = vmul.f32 %v964, %v983
    %v1004 = vmul.f32 %v963, %v987
    %v1005 = vmul.f32 %v962, %v991
    %v1006 = vmul.f32 %v961, %v995
    %v1007 = vmul.f32 %v960, %v999
    %v1008 = vpack.c.bf16 %v1000, %v1000
    %v1009 = vpack.c.bf16 %v1001, %v1001
    %v1010 = vpack.c.bf16 %v1002, %v1002
    %v1011 = vpack.c.bf16 %v1003, %v1003
    %v1012 = vpack.c.bf16 %v1004, %v1004
    %v1013 = vpack.c.bf16 %v1005, %v1005
    %v1014 = vpack.c.bf16 %v1006, %v1006
    %v1015 = vpack.c.bf16 %v1007, %v1007
    %1016 = vst [vmem:[#allocation2 + $0xc0] sm:$0xf] %v1008
    %1017 = vst [vmem:[#allocation2 + $0xc8] sm:$0xf] %v1009
    %1018 = vst [vmem:[#allocation2 + $0xd0] sm:$0xf] %v1010
    %1019 = vst [vmem:[#allocation2 + $0xd8] sm:$0xf] %v1011
    %1020 = vst [vmem:[#allocation2 + $0xe0] sm:$0xf] %v1012
    %1021 = vst [vmem:[#allocation2 + $0xe8] sm:$0xf] %v1013
    %1022 = vst [vmem:[#allocation2 + $0xf0] sm:$0xf] %v1014
    %1023 = vst [vmem:[#allocation2 + $0xf8] sm:$0xf] %v1015
    %1024 = vrot.lane.b32.xlu0 %v375, 56
    %v1025 = vpop.permute.xlu0 %1024
    %1026 = vrot.lane.b32.xlu0 %v376, 56
    %v1027 = vpop.permute.xlu0 %1026
    %1028 = vrot.lane.b32.xlu0 %v377, 56
    %v1029 = vpop.permute.xlu0 %1028
    %1030 = vrot.lane.b32.xlu0 %v378, 56
    %v1031 = vpop.permute.xlu0 %1030
    %1032 = vrot.lane.b32.xlu0 %v379, 56
    %v1033 = vpop.permute.xlu0 %1032
    %1034 = vrot.lane.b32.xlu0 %v380, 56
    %v1035 = vpop.permute.xlu0 %1034
    %1036 = vrot.lane.b32.xlu0 %v381, 56
    %v1037 = vpop.permute.xlu0 %1036
    %1038 = vrot.lane.b32.xlu0 %v382, 56
    %v1039 = vpop.permute.xlu0 %1038
    %vm1040 = vcmp.lt.s32.totalorder %v400, 56
    %v1041 = vsel %vm1040, %v1037, %v1039
    %v1042 = vsel %vm1040, %v1035, %v1037
    %v1043 = vsel %vm1040, %v1033, %v1035
    %v1044 = vsel %vm1040, %v1031, %v1033
    %v1045 = vsel %vm1040, %v1029, %v1031
    %v1046 = vsel %vm1040, %v1027, %v1029
    %v1047 = vsel %vm1040, %v1025, %v1027
    %v1048 = vsel %vm1040, %v1039, %v1025
    %v1049 = vlaneseq
    %v1050 = vshrl.u32 %v1049, 7
    %v1051 = vsub.s32 7, %v1050
    %v1052 = vrot.slane %v105, %v1051
    %v1053 = vlaneseq
    %v1054 = vshrl.u32 %v1053, 7
    %v1055 = vsub.s32 7, %v1054
    %v1056 = vrot.slane %v106, %v1055
    %v1057 = vlaneseq
    %v1058 = vshrl.u32 %v1057, 7
    %v1059 = vsub.s32 7, %v1058
    %v1060 = vrot.slane %v107, %v1059
    %v1061 = vlaneseq
    %v1062 = vshrl.u32 %v1061, 7
    %v1063 = vsub.s32 7, %v1062
    %v1064 = vrot.slane %v108, %v1063
    %v1065 = vlaneseq
    %v1066 = vshrl.u32 %v1065, 7
    %v1067 = vsub.s32 7, %v1066
    %v1068 = vrot.slane %v109, %v1067
    %v1069 = vlaneseq
    %v1070 = vshrl.u32 %v1069, 7
    %v1071 = vsub.s32 7, %v1070
    %v1072 = vrot.slane %v110, %v1071
    %v1073 = vlaneseq
    %v1074 = vshrl.u32 %v1073, 7
    %v1075 = vsub.s32 7, %v1074
    %v1076 = vrot.slane %v111, %v1075
    %v1077 = vlaneseq
    %v1078 = vshrl.u32 %v1077, 7
    %v1079 = vsub.s32 7, %v1078
    %v1080 = vrot.slane %v112, %v1079
    %v1081 = vmul.f32 %v1048, %v1052
    %v1082 = vmul.f32 %v1047, %v1056
    %v1083 = vmul.f32 %v1046, %v1060
    %v1084 = vmul.f32 %v1045, %v1064
    %v1085 = vmul.f32 %v1044, %v1068
    %v1086 = vmul.f32 %v1043, %v1072
    %v1087 = vmul.f32 %v1042, %v1076
    %v1088 = vmul.f32 %v1041, %v1080
    %v1089 = vpack.c.bf16 %v1081, %v1081
    %v1090 = vpack.c.bf16 %v1082, %v1082
    %v1091 = vpack.c.bf16 %v1083, %v1083
    %v1092 = vpack.c.bf16 %v1084, %v1084
    %v1093 = vpack.c.bf16 %v1085, %v1085
    %v1094 = vpack.c.bf16 %v1086, %v1086
    %v1095 = vpack.c.bf16 %v1087, %v1087
    %v1096 = vpack.c.bf16 %v1088, %v1088
    %v1105 = vrot.slane %v1089, 4
    %v1106 = vrot.slane %v1090, 4
    %v1107 = vrot.slane %v1091, 4
    %v1108 = vrot.slane %v1092, 4
    %v1109 = vrot.slane %v1093, 4
    %v1110 = vrot.slane %v1094, 4
    %v1111 = vrot.slane %v1095, 4
    %v1112 = vrot.slane %v1096, 4
    %1121 = vst [vmem:[#allocation2 + $0xc0] sm:$0xf0] %v1105
    %1122 = vst [vmem:[#allocation2 + $0xc8] sm:$0xf0] %v1106
    %1123 = vst [vmem:[#allocation2 + $0xd0] sm:$0xf0] %v1107
    %1124 = vst [vmem:[#allocation2 + $0xd8] sm:$0xf0] %v1108
    %1125 = vst [vmem:[#allocation2 + $0xe0] sm:$0xf0] %v1109
    %1126 = vst [vmem:[#allocation2 + $0xe8] sm:$0xf0] %v1110
    %1127 = vst [vmem:[#allocation2 + $0xf0] sm:$0xf0] %v1111
    %1128 = vst [vmem:[#allocation2 + $0xf8] sm:$0xf0] %v1112
    %1129 = vrot.lane.b32.xlu0 %v375, 55
    %v1130 = vpop.permute.xlu0 %1129
    %1131 = vrot.lane.b32.xlu0 %v376, 55
    %v1132 = vpop.permute.xlu0 %1131
    %1133 = vrot.lane.b32.xlu0 %v377, 55
    %v1134 = vpop.permute.xlu0 %1133
    %1135 = vrot.lane.b32.xlu0 %v378, 55
    %v1136 = vpop.permute.xlu0 %1135
    %1137 = vrot.lane.b32.xlu0 %v379, 55
    %v1138 = vpop.permute.xlu0 %1137
    %1139 = vrot.lane.b32.xlu0 %v380, 55
    %v1140 = vpop.permute.xlu0 %1139
    %1141 = vrot.lane.b32.xlu0 %v381, 55
    %v1142 = vpop.permute.xlu0 %1141
    %1143 = vrot.lane.b32.xlu0 %v382, 55
    %v1144 = vpop.permute.xlu0 %1143
    %vm1145 = vcmp.lt.s32.totalorder %v400, 55
    %v1146 = vsel %vm1145, %v1142, %v1144
    %v1147 = vsel %vm1145, %v1140, %v1142
    %v1148 = vsel %vm1145, %v1138, %v1140
    %v1149 = vsel %vm1145, %v1136, %v1138
    %v1150 = vsel %vm1145, %v1134, %v1136
    %v1151 = vsel %vm1145, %v1132, %v1134
    %v1152 = vsel %vm1145, %v1130, %v1132
    %v1153 = vsel %vm1145, %v1144, %v1130
    %v1154 = vlaneseq
    %v1155 = vshrl.u32 %v1154, 7
    %v1156 = vsub.s32 0, %v1155
    %v1157 = vrot.slane %v113, %v1156
    %v1158 = vlaneseq
    %v1159 = vshrl.u32 %v1158, 7
    %v1160 = vsub.s32 0, %v1159
    %v1161 = vrot.slane %v114, %v1160
    %v1162 = vlaneseq
    %v1163 = vshrl.u32 %v1162, 7
    %v1164 = vsub.s32 0, %v1163
    %v1165 = vrot.slane %v115, %v1164
    %v1166 = vlaneseq
    %v1167 = vshrl.u32 %v1166, 7
    %v1168 = vsub.s32 0, %v1167
    %v1169 = vrot.slane %v116, %v1168
    %v1170 = vlaneseq
    %v1171 = vshrl.u32 %v1170, 7
    %v1172 = vsub.s32 0, %v1171
    %v1173 = vrot.slane %v117, %v1172
    %v1174 = vlaneseq
    %v1175 = vshrl.u32 %v1174, 7
    %v1176 = vsub.s32 0, %v1175
    %v1177 = vrot.slane %v118, %v1176
    %v1178 = vlaneseq
    %v1179 = vshrl.u32 %v1178, 7
    %v1180 = vsub.s32 0, %v1179
    %v1181 = vrot.slane %v119, %v1180
    %v1182 = vlaneseq
    %v1183 = vshrl.u32 %v1182, 7
    %v1184 = vsub.s32 0, %v1183
    %v1185 = vrot.slane %v120, %v1184
    %v1186 = vmul.f32 %v1153, %v1157
    %v1187 = vmul.f32 %v1152, %v1161
    %v1188 = vmul.f32 %v1151, %v1165
    %v1189 = vmul.f32 %v1150, %v1169
    %v1190 = vmul.f32 %v1149, %v1173
    %v1191 = vmul.f32 %v1148, %v1177
    %v1192 = vmul.f32 %v1147, %v1181
    %v1193 = vmul.f32 %v1146, %v1185
    %v1194 = vpack.c.bf16 %v1186, %v1186
    %v1195 = vpack.c.bf16 %v1187, %v1187
    %v1196 = vpack.c.bf16 %v1188, %v1188
    %v1197 = vpack.c.bf16 %v1189, %v1189
    %v1198 = vpack.c.bf16 %v1190, %v1190
    %v1199 = vpack.c.bf16 %v1191, %v1191
    %v1200 = vpack.c.bf16 %v1192, %v1192
    %v1201 = vpack.c.bf16 %v1193, %v1193
    %1202 = vst [vmem:[#allocation2 + $0x100] sm:$0xf] %v1194
    %1203 = vst [vmem:[#allocation2 + $0x108] sm:$0xf] %v1195
    %1204 = vst [vmem:[#allocation2 + $0x110] sm:$0xf] %v1196
    %1205 = vst [vmem:[#allocation2 + $0x118] sm:$0xf] %v1197
    %1206 = vst [vmem:[#allocation2 + $0x120] sm:$0xf] %v1198
    %1207 = vst [vmem:[#allocation2 + $0x128] sm:$0xf] %v1199
    %1208 = vst [vmem:[#allocation2 + $0x130] sm:$0xf] %v1200
    %1209 = vst [vmem:[#allocation2 + $0x138] sm:$0xf] %v1201
    %1210 = vrot.lane.b32.xlu0 %v375, 9
    %v1211 = vpop.permute.xlu0 %1210
    %1212 = vrot.lane.b32.xlu0 %v376, 9
    %v1213 = vpop.permute.xlu0 %1212
    %1214 = vrot.lane.b32.xlu0 %v377, 9
    %v1215 = vpop.permute.xlu0 %1214
    %1216 = vrot.lane.b32.xlu0 %v378, 9
    %v1217 = vpop.permute.xlu0 %1216
    %1218 = vrot.lane.b32.xlu0 %v379, 9
    %v1219 = vpop.permute.xlu0 %1218
    %1220 = vrot.lane.b32.xlu0 %v380, 9
    %v1221 = vpop.permute.xlu0 %1220
    %1222 = vrot.lane.b32.xlu0 %v381, 9
    %v1223 = vpop.permute.xlu0 %1222
    %1224 = vrot.lane.b32.xlu0 %v382, 9
    %v1225 = vpop.permute.xlu0 %1224
    %vm1226 = vcmp.lt.s32.totalorder %v400, 9
    %v1227 = vsel %vm1226, %v1223, %v1225
    %v1228 = vsel %vm1226, %v1221, %v1223
    %v1229 = vsel %vm1226, %v1219, %v1221
    %v1230 = vsel %vm1226, %v1217, %v1219
    %v1231 = vsel %vm1226, %v1215, %v1217
    %v1232 = vsel %vm1226, %v1213, %v1215
    %v1233 = vsel %vm1226, %v1211, %v1213
    %v1234 = vsel %vm1226, %v1225, %v1211
    %v1235 = vlaneseq
    %v1236 = vshrl.u32 %v1235, 7
    %v1237 = vsub.s32 1, %v1236
    %v1238 = vrot.slane %v113, %v1237
    %v1239 = vlaneseq
    %v1240 = vshrl.u32 %v1239, 7
    %v1241 = vsub.s32 1, %v1240
    %v1242 = vrot.slane %v114, %v1241
    %v1243 = vlaneseq
    %v1244 = vshrl.u32 %v1243, 7
    %v1245 = vsub.s32 1, %v1244
    %v1246 = vrot.slane %v115, %v1245
    %v1247 = vlaneseq
    %v1248 = vshrl.u32 %v1247, 7
    %v1249 = vsub.s32 1, %v1248
    %v1250 = vrot.slane %v116, %v1249
    %v1251 = vlaneseq
    %v1252 = vshrl.u32 %v1251, 7
    %v1253 = vsub.s32 1, %v1252
    %v1254 = vrot.slane %v117, %v1253
    %v1255 = vlaneseq
    %v1256 = vshrl.u32 %v1255, 7
    %v1257 = vsub.s32 1, %v1256
    %v1258 = vrot.slane %v118, %v1257
    %v1259 = vlaneseq
    %v1260 = vshrl.u32 %v1259, 7
    %v1261 = vsub.s32 1, %v1260
    %v1262 = vrot.slane %v119, %v1261
    %v1263 = vlaneseq
    %v1264 = vshrl.u32 %v1263, 7
    %v1265 = vsub.s32 1, %v1264
    %v1266 = vrot.slane %v120, %v1265
    %v1267 = vmul.f32 %v1234, %v1238
    %v1268 = vmul.f32 %v1233, %v1242
    %v1269 = vmul.f32 %v1232, %v1246
    %v1270 = vmul.f32 %v1231, %v1250
    %v1271 = vmul.f32 %v1230, %v1254
    %v1272 = vmul.f32 %v1229, %v1258
    %v1273 = vmul.f32 %v1228, %v1262
    %v1274 = vmul.f32 %v1227, %v1266
    %v1275 = vpack.c.bf16 %v1267, %v1267
    %v1276 = vpack.c.bf16 %v1268, %v1268
    %v1277 = vpack.c.bf16 %v1269, %v1269
    %v1278 = vpack.c.bf16 %v1270, %v1270
    %v1279 = vpack.c.bf16 %v1271, %v1271
    %v1280 = vpack.c.bf16 %v1272, %v1272
    %v1281 = vpack.c.bf16 %v1273, %v1273
    %v1282 = vpack.c.bf16 %v1274, %v1274
    %v1291 = vrot.slane %v1275, 4
    %v1292 = vrot.slane %v1276, 4
    %v1293 = vrot.slane %v1277, 4
    %v1294 = vrot.slane %v1278, 4
    %v1295 = vrot.slane %v1279, 4
    %v1296 = vrot.slane %v1280, 4
    %v1297 = vrot.slane %v1281, 4
    %v1298 = vrot.slane %v1282, 4
    %1307 = vst [vmem:[#allocation2 + $0x100] sm:$0xf0] %v1291
    %1308 = vst [vmem:[#allocation2 + $0x108] sm:$0xf0] %v1292
    %1309 = vst [vmem:[#allocation2 + $0x110] sm:$0xf0] %v1293
    %1310 = vst [vmem:[#allocation2 + $0x118] sm:$0xf0] %v1294
    %1311 = vst [vmem:[#allocation2 + $0x120] sm:$0xf0] %v1295
    %1312 = vst [vmem:[#allocation2 + $0x128] sm:$0xf0] %v1296
    %1313 = vst [vmem:[#allocation2 + $0x130] sm:$0xf0] %v1297
    %1314 = vst [vmem:[#allocation2 + $0x138] sm:$0xf0] %v1298
    %1315 = vrot.lane.b32.xlu0 %v375, 8
    %v1316 = vpop.permute.xlu0 %1315
    %1317 = vrot.lane.b32.xlu0 %v376, 8
    %v1318 = vpop.permute.xlu0 %1317
    %1319 = vrot.lane.b32.xlu0 %v377, 8
    %v1320 = vpop.permute.xlu0 %1319
    %1321 = vrot.lane.b32.xlu0 %v378, 8
    %v1322 = vpop.permute.xlu0 %1321
    %1323 = vrot.lane.b32.xlu0 %v379, 8
    %v1324 = vpop.permute.xlu0 %1323
    %1325 = vrot.lane.b32.xlu0 %v380, 8
    %v1326 = vpop.permute.xlu0 %1325
    %1327 = vrot.lane.b32.xlu0 %v381, 8
    %v1328 = vpop.permute.xlu0 %1327
    %1329 = vrot.lane.b32.xlu0 %v382, 8
    %v1330 = vpop.permute.xlu0 %1329
    %vm1331 = vcmp.lt.s32.totalorder %v400, 8
    %v1332 = vsel %vm1331, %v1328, %v1330
    %v1333 = vsel %vm1331, %v1326, %v1328
    %v1334 = vsel %vm1331, %v1324, %v1326
    %v1335 = vsel %vm1331, %v1322, %v1324
    %v1336 = vsel %vm1331, %v1320, %v1322
    %v1337 = vsel %vm1331, %v1318, %v1320
    %v1338 = vsel %vm1331, %v1316, %v1318
    %v1339 = vsel %vm1331, %v1330, %v1316
    %v1340 = vlaneseq
    %v1341 = vshrl.u32 %v1340, 7
    %v1342 = vsub.s32 2, %v1341
    %v1343 = vrot.slane %v113, %v1342
    %v1344 = vlaneseq
    %v1345 = vshrl.u32 %v1344, 7
    %v1346 = vsub.s32 2, %v1345
    %v1347 = vrot.slane %v114, %v1346
    %v1348 = vlaneseq
    %v1349 = vshrl.u32 %v1348, 7
    %v1350 = vsub.s32 2, %v1349
    %v1351 = vrot.slane %v115, %v1350
    %v1352 = vlaneseq
    %v1353 = vshrl.u32 %v1352, 7
    %v1354 = vsub.s32 2, %v1353
    %v1355 = vrot.slane %v116, %v1354
    %v1356 = vlaneseq
    %v1357 = vshrl.u32 %v1356, 7
    %v1358 = vsub.s32 2, %v1357
    %v1359 = vrot.slane %v117, %v1358
    %v1360 = vlaneseq
    %v1361 = vshrl.u32 %v1360, 7
    %v1362 = vsub.s32 2, %v1361
    %v1363 = vrot.slane %v118, %v1362
    %v1364 = vlaneseq
    %v1365 = vshrl.u32 %v1364, 7
    %v1366 = vsub.s32 2, %v1365
    %v1367 = vrot.slane %v119, %v1366
    %v1368 = vlaneseq
    %v1369 = vshrl.u32 %v1368, 7
    %v1370 = vsub.s32 2, %v1369
    %v1371 = vrot.slane %v120, %v1370
    %v1372 = vmul.f32 %v1339, %v1343
    %v1373 = vmul.f32 %v1338, %v1347
    %v1374 = vmul.f32 %v1337, %v1351
    %v1375 = vmul.f32 %v1336, %v1355
    %v1376 = vmul.f32 %v1335, %v1359
    %v1377 = vmul.f32 %v1334, %v1363
    %v1378 = vmul.f32 %v1333, %v1367
    %v1379 = vmul.f32 %v1332, %v1371
    %v1380 = vpack.c.bf16 %v1372, %v1372
    %v1381 = vpack.c.bf16 %v1373, %v1373
    %v1382 = vpack.c.bf16 %v1374, %v1374
    %v1383 = vpack.c.bf16 %v1375, %v1375
    %v1384 = vpack.c.bf16 %v1376, %v1376
    %v1385 = vpack.c.bf16 %v1377, %v1377
    %v1386 = vpack.c.bf16 %v1378, %v1378
    %v1387 = vpack.c.bf16 %v1379, %v1379
    %1388 = vst [vmem:[#allocation2 + $0x140] sm:$0xf] %v1380
    %1389 = vst [vmem:[#allocation2 + $0x148] sm:$0xf] %v1381
    %1390 = vst [vmem:[#allocation2 + $0x150] sm:$0xf] %v1382
    %1391 = vst [vmem:[#allocation2 + $0x158] sm:$0xf] %v1383
    %1392 = vst [vmem:[#allocation2 + $0x160] sm:$0xf] %v1384
    %1393 = vst [vmem:[#allocation2 + $0x168] sm:$0xf] %v1385
    %1394 = vst [vmem:[#allocation2 + $0x170] sm:$0xf] %v1386
    %1395 = vst [vmem:[#allocation2 + $0x178] sm:$0xf] %v1387
    %1396 = vrot.lane.b32.xlu0 %v375, 7
    %v1397 = vpop.permute.xlu0 %1396
    %1398 = vrot.lane.b32.xlu0 %v376, 7
    %v1399 = vpop.permute.xlu0 %1398
    %1400 = vrot.lane.b32.xlu0 %v377, 7
    %v1401 = vpop.permute.xlu0 %1400
    %1402 = vrot.lane.b32.xlu0 %v378, 7
    %v1403 = vpop.permute.xlu0 %1402
    %1404 = vrot.lane.b32.xlu0 %v379, 7
    %v1405 = vpop.permute.xlu0 %1404
    %1406 = vrot.lane.b32.xlu0 %v380, 7
    %v1407 = vpop.permute.xlu0 %1406
    %1408 = vrot.lane.b32.xlu0 %v381, 7
    %v1409 = vpop.permute.xlu0 %1408
    %1410 = vrot.lane.b32.xlu0 %v382, 7
    %v1411 = vpop.permute.xlu0 %1410
    %vm1412 = vcmp.lt.s32.totalorder %v400, 7
    %v1413 = vsel %vm1412, %v1409, %v1411
    %v1414 = vsel %vm1412, %v1407, %v1409
    %v1415 = vsel %vm1412, %v1405, %v1407
    %v1416 = vsel %vm1412, %v1403, %v1405
    %v1417 = vsel %vm1412, %v1401, %v1403
    %v1418 = vsel %vm1412, %v1399, %v1401
    %v1419 = vsel %vm1412, %v1397, %v1399
    %v1420 = vsel %vm1412, %v1411, %v1397
    %v1421 = vlaneseq
    %v1422 = vshrl.u32 %v1421, 7
    %v1423 = vsub.s32 3, %v1422
    %v1424 = vrot.slane %v113, %v1423
    %v1425 = vlaneseq
    %v1426 = vshrl.u32 %v1425, 7
    %v1427 = vsub.s32 3, %v1426
    %v1428 = vrot.slane %v114, %v1427
    %v1429 = vlaneseq
    %v1430 = vshrl.u32 %v1429, 7
    %v1431 = vsub.s32 3, %v1430
    %v1432 = vrot.slane %v115, %v1431
    %v1433 = vlaneseq
    %v1434 = vshrl.u32 %v1433, 7
    %v1435 = vsub.s32 3, %v1434
    %v1436 = vrot.slane %v116, %v1435
    %v1437 = vlaneseq
    %v1438 = vshrl.u32 %v1437, 7
    %v1439 = vsub.s32 3, %v1438
    %v1440 = vrot.slane %v117, %v1439
    %v1441 = vlaneseq
    %v1442 = vshrl.u32 %v1441, 7
    %v1443 = vsub.s32 3, %v1442
    %v1444 = vrot.slane %v118, %v1443
    %v1445 = vlaneseq
    %v1446 = vshrl.u32 %v1445, 7
    %v1447 = vsub.s32 3, %v1446
    %v1448 = vrot.slane %v119, %v1447
    %v1449 = vlaneseq
    %v1450 = vshrl.u32 %v1449, 7
    %v1451 = vsub.s32 3, %v1450
    %v1452 = vrot.slane %v120, %v1451
    %v1453 = vmul.f32 %v1420, %v1424
    %v1454 = vmul.f32 %v1419, %v1428
    %v1455 = vmul.f32 %v1418, %v1432
    %v1456 = vmul.f32 %v1417, %v1436
    %v1457 = vmul.f32 %v1416, %v1440
    %v1458 = vmul.f32 %v1415, %v1444
    %v1459 = vmul.f32 %v1414, %v1448
    %v1460 = vmul.f32 %v1413, %v1452
    %v1461 = vpack.c.bf16 %v1453, %v1453
    %v1462 = vpack.c.bf16 %v1454, %v1454
    %v1463 = vpack.c.bf16 %v1455, %v1455
    %v1464 = vpack.c.bf16 %v1456, %v1456
    %v1465 = vpack.c.bf16 %v1457, %v1457
    %v1466 = vpack.c.bf16 %v1458, %v1458
    %v1467 = vpack.c.bf16 %v1459, %v1459
    %v1468 = vpack.c.bf16 %v1460, %v1460
    %v1477 = vrot.slane %v1461, 4
    %v1478 = vrot.slane %v1462, 4
    %v1479 = vrot.slane %v1463, 4
    %v1480 = vrot.slane %v1464, 4
    %v1481 = vrot.slane %v1465, 4
    %v1482 = vrot.slane %v1466, 4
    %v1483 = vrot.slane %v1467, 4
    %v1484 = vrot.slane %v1468, 4
    %1493 = vst [vmem:[#allocation2 + $0x140] sm:$0xf0] %v1477
    %1494 = vst [vmem:[#allocation2 + $0x148] sm:$0xf0] %v1478
    %1495 = vst [vmem:[#allocation2 + $0x150] sm:$0xf0] %v1479
    %1496 = vst [vmem:[#allocation2 + $0x158] sm:$0xf0] %v1480
    %1497 = vst [vmem:[#allocation2 + $0x160] sm:$0xf0] %v1481
    %1498 = vst [vmem:[#allocation2 + $0x168] sm:$0xf0] %v1482
    %1499 = vst [vmem:[#allocation2 + $0x170] sm:$0xf0] %v1483
    %1500 = vst [vmem:[#allocation2 + $0x178] sm:$0xf0] %v1484
    %1501 = vrot.lane.b32.xlu0 %v375, 1
    %v1502 = vpop.permute.xlu0 %1501
    %1503 = vrot.lane.b32.xlu0 %v376, 1
    %v1504 = vpop.permute.xlu0 %1503
    %1505 = vrot.lane.b32.xlu0 %v377, 1
    %v1506 = vpop.permute.xlu0 %1505
    %1507 = vrot.lane.b32.xlu0 %v378, 1
    %v1508 = vpop.permute.xlu0 %1507
    %1509 = vrot.lane.b32.xlu0 %v379, 1
    %v1510 = vpop.permute.xlu0 %1509
    %1511 = vrot.lane.b32.xlu0 %v380, 1
    %v1512 = vpop.permute.xlu0 %1511
    %1513 = vrot.lane.b32.xlu0 %v381, 1
    %v1514 = vpop.permute.xlu0 %1513
    %1515 = vrot.lane.b32.xlu0 %v382, 1
    %v1516 = vpop.permute.xlu0 %1515
    %vm1517 = vcmp.lt.s32.totalorder %v400, 1
    %v1518 = vsel %vm1517, %v1514, %v1516
    %v1519 = vsel %vm1517, %v1512, %v1514
    %v1520 = vsel %vm1517, %v1510, %v1512
    %v1521 = vsel %vm1517, %v1508, %v1510
    %v1522 = vsel %vm1517, %v1506, %v1508
    %v1523 = vsel %vm1517, %v1504, %v1506
    %v1524 = vsel %vm1517, %v1502, %v1504
    %v1525 = vsel %vm1517, %v1516, %v1502
    %v1526 = vlaneseq
    %v1527 = vshrl.u32 %v1526, 7
    %v1528 = vsub.s32 4, %v1527
    %v1529 = vrot.slane %v113, %v1528
    %v1530 = vlaneseq
    %v1531 = vshrl.u32 %v1530, 7
    %v1532 = vsub.s32 4, %v1531
    %v1533 = vrot.slane %v114, %v1532
    %v1534 = vlaneseq
    %v1535 = vshrl.u32 %v1534, 7
    %v1536 = vsub.s32 4, %v1535
    %v1537 = vrot.slane %v115, %v1536
    %v1538 = vlaneseq
    %v1539 = vshrl.u32 %v1538, 7
    %v1540 = vsub.s32 4, %v1539
    %v1541 = vrot.slane %v116, %v1540
    %v1542 = vlaneseq
    %v1543 = vshrl.u32 %v1542, 7
    %v1544 = vsub.s32 4, %v1543
    %v1545 = vrot.slane %v117, %v1544
    %v1546 = vlaneseq
    %v1547 = vshrl.u32 %v1546, 7
    %v1548 = vsub.s32 4, %v1547
    %v1549 = vrot.slane %v118, %v1548
    %v1550 = vlaneseq
    %v1551 = vshrl.u32 %v1550, 7
    %v1552 = vsub.s32 4, %v1551
    %v1553 = vrot.slane %v119, %v1552
    %v1554 = vlaneseq
    %v1555 = vshrl.u32 %v1554, 7
    %v1556 = vsub.s32 4, %v1555
    %v1557 = vrot.slane %v120, %v1556
    %v1558 = vmul.f32 %v1525, %v1529
    %v1559 = vmul.f32 %v1524, %v1533
    %v1560 = vmul.f32 %v1523, %v1537
    %v1561 = vmul.f32 %v1522, %v1541
    %v1562 = vmul.f32 %v1521, %v1545
    %v1563 = vmul.f32 %v1520, %v1549
    %v1564 = vmul.f32 %v1519, %v1553
    %v1565 = vmul.f32 %v1518, %v1557
    %v1566 = vpack.c.bf16 %v1558, %v1558
    %v1567 = vpack.c.bf16 %v1559, %v1559
    %v1568 = vpack.c.bf16 %v1560, %v1560
    %v1569 = vpack.c.bf16 %v1561, %v1561
    %v1570 = vpack.c.bf16 %v1562, %v1562
    %v1571 = vpack.c.bf16 %v1563, %v1563
    %v1572 = vpack.c.bf16 %v1564, %v1564
    %v1573 = vpack.c.bf16 %v1565, %v1565
    %1574 = vst [vmem:[#allocation2 + $0x180] sm:$0xf] %v1566
    %1575 = vst [vmem:[#allocation2 + $0x188] sm:$0xf] %v1567
    %1576 = vst [vmem:[#allocation2 + $0x190] sm:$0xf] %v1568
    %1577 = vst [vmem:[#allocation2 + $0x198] sm:$0xf] %v1569
    %1578 = vst [vmem:[#allocation2 + $0x1a0] sm:$0xf] %v1570
    %1579 = vst [vmem:[#allocation2 + $0x1a8] sm:$0xf] %v1571
    %1580 = vst [vmem:[#allocation2 + $0x1b0] sm:$0xf] %v1572
    %1581 = vst [vmem:[#allocation2 + $0x1b8] sm:$0xf] %v1573
    %v1582 = vpack.c.bf16 %v375, %v375
    %v1583 = vpack.c.bf16 %v376, %v376
    %v1584 = vpack.c.bf16 %v377, %v377
    %v1585 = vpack.c.bf16 %v378, %v378
    %v1586 = vpack.c.bf16 %v379, %v379
    %v1587 = vpack.c.bf16 %v380, %v380
    %v1588 = vpack.c.bf16 %v381, %v381
    %v1589 = vpack.c.bf16 %v382, %v382
    %v1598 = vrot.slane %v1582, 4
    %v1599 = vrot.slane %v1583, 4
    %v1600 = vrot.slane %v1584, 4
    %v1601 = vrot.slane %v1585, 4
    %v1602 = vrot.slane %v1586, 4
    %v1603 = vrot.slane %v1587, 4
    %v1604 = vrot.slane %v1588, 4
    %v1605 = vrot.slane %v1589, 4
    %1614 = vst [vmem:[#allocation2 + $0x180] sm:$0xf0] %v1598
    %1615 = vst [vmem:[#allocation2 + $0x188] sm:$0xf0] %v1599
    %1616 = vst [vmem:[#allocation2 + $0x190] sm:$0xf0] %v1600
    %1617 = vst [vmem:[#allocation2 + $0x198] sm:$0xf0] %v1601
    %1618 = vst [vmem:[#allocation2 + $0x1a0] sm:$0xf0] %v1602
    %1619 = vst [vmem:[#allocation2 + $0x1a8] sm:$0xf0] %v1603
    %1620 = vst [vmem:[#allocation2 + $0x1b0] sm:$0xf0] %v1604
    %1621 = vst [vmem:[#allocation2 + $0x1b8] sm:$0xf0] %v1605
    %1622 = vrot.lane.b32.xlu0 %v375, 127
    %v1623 = vpop.permute.xlu0 %1622
    %1624 = vrot.lane.b32.xlu0 %v376, 127
    %v1625 = vpop.permute.xlu0 %1624
    %1626 = vrot.lane.b32.xlu0 %v377, 127
    %v1627 = vpop.permute.xlu0 %1626
    %1628 = vrot.lane.b32.xlu0 %v378, 127
    %v1629 = vpop.permute.xlu0 %1628
    %1630 = vrot.lane.b32.xlu0 %v379, 127
    %v1631 = vpop.permute.xlu0 %1630
    %1632 = vrot.lane.b32.xlu0 %v380, 127
    %v1633 = vpop.permute.xlu0 %1632
    %1634 = vrot.lane.b32.xlu0 %v381, 127
    %v1635 = vpop.permute.xlu0 %1634
    %1636 = vrot.lane.b32.xlu0 %v382, 127
    %v1637 = vpop.permute.xlu0 %1636
    %vm1638 = vcmp.lt.s32.totalorder %v400, 127
    %v1639 = vsel %vm1638, %v1635, %v1637
    %v1640 = vsel %vm1638, %v1633, %v1635
    %v1641 = vsel %vm1638, %v1631, %v1633
    %v1642 = vsel %vm1638, %v1629, %v1631
    %v1643 = vsel %vm1638, %v1627, %v1629
    %v1644 = vsel %vm1638, %v1625, %v1627
    %v1645 = vsel %vm1638, %v1623, %v1625
    %v1646 = vsel %vm1638, %v1637, %v1623
    %v1647 = vlaneseq
    %v1648 = vshrl.u32 %v1647, 7
    %v1649 = vsub.s32 6, %v1648
    %v1650 = vrot.slane %v113, %v1649
    %v1651 = vlaneseq
    %v1652 = vshrl.u32 %v1651, 7
    %v1653 = vsub.s32 6, %v1652
    %v1654 = vrot.slane %v114, %v1653
    %v1655 = vlaneseq
    %v1656 = vshrl.u32 %v1655, 7
    %v1657 = vsub.s32 6, %v1656
    %v1658 = vrot.slane %v115, %v1657
    %v1659 = vlaneseq
    %v1660 = vshrl.u32 %v1659, 7
    %v1661 = vsub.s32 6, %v1660
    %v1662 = vrot.slane %v116, %v1661
    %v1663 = vlaneseq
    %v1664 = vshrl.u32 %v1663, 7
    %v1665 = vsub.s32 6, %v1664
    %v1666 = vrot.slane %v117, %v1665
    %v1667 = vlaneseq
    %v1668 = vshrl.u32 %v1667, 7
    %v1669 = vsub.s32 6, %v1668
    %v1670 = vrot.slane %v118, %v1669
    %v1671 = vlaneseq
    %v1672 = vshrl.u32 %v1671, 7
    %v1673 = vsub.s32 6, %v1672
    %v1674 = vrot.slane %v119, %v1673
    %v1675 = vlaneseq
    %v1676 = vshrl.u32 %v1675, 7
    %v1677 = vsub.s32 6, %v1676
    %v1678 = vrot.slane %v120, %v1677
    %v1679 = vmul.f32 %v1645, %v1650
    %v1680 = vmul.f32 %v1644, %v1654
    %v1681 = vmul.f32 %v1643, %v1658
    %v1682 = vmul.f32 %v1642, %v1662
    %v1683 = vmul.f32 %v1641, %v1666
    %v1684 = vmul.f32 %v1640, %v1670
    %v1685 = vmul.f32 %v1639, %v1674
    %v1686 = vmul.f32 %v1646, %v1678
    %v1687 = vpack.c.bf16 %v1679, %v1679
    %v1688 = vpack.c.bf16 %v1680, %v1680
    %v1689 = vpack.c.bf16 %v1681, %v1681
    %v1690 = vpack.c.bf16 %v1682, %v1682
    %v1691 = vpack.c.bf16 %v1683, %v1683
    %v1692 = vpack.c.bf16 %v1684, %v1684
    %v1693 = vpack.c.bf16 %v1685, %v1685
    %v1694 = vpack.c.bf16 %v1686, %v1686
    %1695 = vst [vmem:[#allocation2 + $0x1c0] sm:$0xf] %v1687
    %1696 = vst [vmem:[#allocation2 + $0x1c8] sm:$0xf] %v1688
    %1697 = vst [vmem:[#allocation2 + $0x1d0] sm:$0xf] %v1689
    %1698 = vst [vmem:[#allocation2 + $0x1d8] sm:$0xf] %v1690
    %1699 = vst [vmem:[#allocation2 + $0x1e0] sm:$0xf] %v1691
    %1700 = vst [vmem:[#allocation2 + $0x1e8] sm:$0xf] %v1692
    %1701 = vst [vmem:[#allocation2 + $0x1f0] sm:$0xf] %v1693
    %1702 = vst [vmem:[#allocation2 + $0x1f8] sm:$0xf] %v1694
    %1703 = vrot.lane.b32.xlu0 %v375, 121
    %v1704 = vpop.permute.xlu0 %1703
    %1705 = vrot.lane.b32.xlu0 %v376, 121
    %v1706 = vpop.permute.xlu0 %1705
    %1707 = vrot.lane.b32.xlu0 %v377, 121
    %v1708 = vpop.permute.xlu0 %1707
    %1709 = vrot.lane.b32.xlu0 %v378, 121
    %v1710 = vpop.permute.xlu0 %1709
    %1711 = vrot.lane.b32.xlu0 %v379, 121
    %v1712 = vpop.permute.xlu0 %1711
    %1713 = vrot.lane.b32.xlu0 %v380, 121
    %v1714 = vpop.permute.xlu0 %1713
    %1715 = vrot.lane.b32.xlu0 %v381, 121
    %v1716 = vpop.permute.xlu0 %1715
    %1717 = vrot.lane.b32.xlu0 %v382, 121
    %v1718 = vpop.permute.xlu0 %1717
    %vm1719 = vcmp.lt.s32.totalorder %v400, 121
    %v1720 = vsel %vm1719, %v1716, %v1718
    %v1721 = vsel %vm1719, %v1714, %v1716
    %v1722 = vsel %vm1719, %v1712, %v1714
    %v1723 = vsel %vm1719, %v1710, %v1712
    %v1724 = vsel %vm1719, %v1708, %v1710
    %v1725 = vsel %vm1719, %v1706, %v1708
    %v1726 = vsel %vm1719, %v1704, %v1706
    %v1727 = vsel %vm1719, %v1718, %v1704
    %v1728 = vlaneseq
    %v1729 = vshrl.u32 %v1728, 7
    %v1730 = vsub.s32 7, %v1729
    %v1731 = vrot.slane %v113, %v1730
    %v1732 = vlaneseq
    %v1733 = vshrl.u32 %v1732, 7
    %v1734 = vsub.s32 7, %v1733
    %v1735 = vrot.slane %v114, %v1734
    %v1736 = vlaneseq
    %v1737 = vshrl.u32 %v1736, 7
    %v1738 = vsub.s32 7, %v1737
    %v1739 = vrot.slane %v115, %v1738
    %v1740 = vlaneseq
    %v1741 = vshrl.u32 %v1740, 7
    %v1742 = vsub.s32 7, %v1741
    %v1743 = vrot.slane %v116, %v1742
    %v1744 = vlaneseq
    %v1745 = vshrl.u32 %v1744, 7
    %v1746 = vsub.s32 7, %v1745
    %v1747 = vrot.slane %v117, %v1746
    %v1748 = vlaneseq
    %v1749 = vshrl.u32 %v1748, 7
    %v1750 = vsub.s32 7, %v1749
    %v1751 = vrot.slane %v118, %v1750
    %v1752 = vlaneseq
    %v1753 = vshrl.u32 %v1752, 7
    %v1754 = vsub.s32 7, %v1753
    %v1755 = vrot.slane %v119, %v1754
    %v1756 = vlaneseq
    %v1757 = vshrl.u32 %v1756, 7
    %v1758 = vsub.s32 7, %v1757
    %v1759 = vrot.slane %v120, %v1758
    %v1760 = vmul.f32 %v1726, %v1731
    %v1761 = vmul.f32 %v1725, %v1735
    %v1762 = vmul.f32 %v1724, %v1739
    %v1763 = vmul.f32 %v1723, %v1743
    %v1764 = vmul.f32 %v1722, %v1747
    %v1765 = vmul.f32 %v1721, %v1751
    %v1766 = vmul.f32 %v1720, %v1755
    %v1767 = vmul.f32 %v1727, %v1759
    %v1768 = vpack.c.bf16 %v1760, %v1760
    %v1769 = vpack.c.bf16 %v1761, %v1761
    %v1770 = vpack.c.bf16 %v1762, %v1762
    %v1771 = vpack.c.bf16 %v1763, %v1763
    %v1772 = vpack.c.bf16 %v1764, %v1764
    %v1773 = vpack.c.bf16 %v1765, %v1765
    %v1774 = vpack.c.bf16 %v1766, %v1766
    %v1775 = vpack.c.bf16 %v1767, %v1767
    %v1784 = vrot.slane %v1768, 4
    %v1785 = vrot.slane %v1769, 4
    %v1786 = vrot.slane %v1770, 4
    %v1787 = vrot.slane %v1771, 4
    %v1788 = vrot.slane %v1772, 4
    %v1789 = vrot.slane %v1773, 4
    %v1790 = vrot.slane %v1774, 4
    %v1791 = vrot.slane %v1775, 4
    %1800 = vst [vmem:[#allocation2 + $0x1c0] sm:$0xf0] %v1784
    %1801 = vst [vmem:[#allocation2 + $0x1c8] sm:$0xf0] %v1785
    %1802 = vst [vmem:[#allocation2 + $0x1d0] sm:$0xf0] %v1786
    %1803 = vst [vmem:[#allocation2 + $0x1d8] sm:$0xf0] %v1787
    %1804 = vst [vmem:[#allocation2 + $0x1e0] sm:$0xf0] %v1788
    %1805 = vst [vmem:[#allocation2 + $0x1e8] sm:$0xf0] %v1789
    %1806 = vst [vmem:[#allocation2 + $0x1f0] sm:$0xf0] %v1790
    %1807 = vst [vmem:[#allocation2 + $0x1f8] sm:$0xf0] %v1791
    %1808 = vrot.lane.b32.xlu0 %v375, 120
    %v1809 = vpop.permute.xlu0 %1808
    %1810 = vrot.lane.b32.xlu0 %v376, 120
    %v1811 = vpop.permute.xlu0 %1810
    %1812 = vrot.lane.b32.xlu0 %v377, 120
    %v1813 = vpop.permute.xlu0 %1812
    %1814 = vrot.lane.b32.xlu0 %v378, 120
    %v1815 = vpop.permute.xlu0 %1814
    %1816 = vrot.lane.b32.xlu0 %v379, 120
    %v1817 = vpop.permute.xlu0 %1816
    %1818 = vrot.lane.b32.xlu0 %v380, 120
    %v1819 = vpop.permute.xlu0 %1818
    %1820 = vrot.lane.b32.xlu0 %v381, 120
    %v1821 = vpop.permute.xlu0 %1820
    %1822 = vrot.lane.b32.xlu0 %v382, 120
    %v1823 = vpop.permute.xlu0 %1822
    %vm1824 = vcmp.lt.s32.totalorder %v400, 120
    %v1825 = vsel %vm1824, %v1821, %v1823
    %v1826 = vsel %vm1824, %v1819, %v1821
    %v1827 = vsel %vm1824, %v1817, %v1819
    %v1828 = vsel %vm1824, %v1815, %v1817
    %v1829 = vsel %vm1824, %v1813, %v1815
    %v1830 = vsel %vm1824, %v1811, %v1813
    %v1831 = vsel %vm1824, %v1809, %v1811
    %v1832 = vsel %vm1824, %v1823, %v1809
    %v1833 = vlaneseq
    %v1834 = vshrl.u32 %v1833, 7
    %v1835 = vsub.s32 0, %v1834
    %v1836 = vrot.slane %v121, %v1835
    %v1837 = vlaneseq
    %v1838 = vshrl.u32 %v1837, 7
    %v1839 = vsub.s32 0, %v1838
    %v1840 = vrot.slane %v122, %v1839
    %v1841 = vlaneseq
    %v1842 = vshrl.u32 %v1841, 7
    %v1843 = vsub.s32 0, %v1842
    %v1844 = vrot.slane %v123, %v1843
    %v1845 = vlaneseq
    %v1846 = vshrl.u32 %v1845, 7
    %v1847 = vsub.s32 0, %v1846
    %v1848 = vrot.slane %v124, %v1847
    %v1849 = vlaneseq
    %v1850 = vshrl.u32 %v1849, 7
    %v1851 = vsub.s32 0, %v1850
    %v1852 = vrot.slane %v125, %v1851
    %v1853 = vlaneseq
    %v1854 = vshrl.u32 %v1853, 7
    %v1855 = vsub.s32 0, %v1854
    %v1856 = vrot.slane %v126, %v1855
    %v1857 = vlaneseq
    %v1858 = vshrl.u32 %v1857, 7
    %v1859 = vsub.s32 0, %v1858
    %v1860 = vrot.slane %v127, %v1859
    %v1861 = vlaneseq
    %v1862 = vshrl.u32 %v1861, 7
    %v1863 = vsub.s32 0, %v1862
    %v1864 = vrot.slane %v128, %v1863
    %v1865 = vmul.f32 %v1831, %v1836
    %v1866 = vmul.f32 %v1830, %v1840
    %v1867 = vmul.f32 %v1829, %v1844
    %v1868 = vmul.f32 %v1828, %v1848
    %v1869 = vmul.f32 %v1827, %v1852
    %v1870 = vmul.f32 %v1826, %v1856
    %v1871 = vmul.f32 %v1825, %v1860
    %v1872 = vmul.f32 %v1832, %v1864
    %v1873 = vpack.c.bf16 %v1865, %v1865
    %v1874 = vpack.c.bf16 %v1866, %v1866
    %v1875 = vpack.c.bf16 %v1867, %v1867
    %v1876 = vpack.c.bf16 %v1868, %v1868
    %v1877 = vpack.c.bf16 %v1869, %v1869
    %v1878 = vpack.c.bf16 %v1870, %v1870
    %v1879 = vpack.c.bf16 %v1871, %v1871
    %v1880 = vpack.c.bf16 %v1872, %v1872
    %1881 = vst [vmem:[#allocation2 + $0x200] sm:$0xf] %v1873
    %1882 = vst [vmem:[#allocation2 + $0x208] sm:$0xf] %v1874
    %1883 = vst [vmem:[#allocation2 + $0x210] sm:$0xf] %v1875
    %1884 = vst [vmem:[#allocation2 + $0x218] sm:$0xf] %v1876
    %1885 = vst [vmem:[#allocation2 + $0x220] sm:$0xf] %v1877
    %1886 = vst [vmem:[#allocation2 + $0x228] sm:$0xf] %v1878
    %1887 = vst [vmem:[#allocation2 + $0x230] sm:$0xf] %v1879
    %1888 = vst [vmem:[#allocation2 + $0x238] sm:$0xf] %v1880
    %1889 = vrot.lane.b32.xlu0 %v375, 119
    %v1890 = vpop.permute.xlu0 %1889
    %1891 = vrot.lane.b32.xlu0 %v376, 119
    %v1892 = vpop.permute.xlu0 %1891
    %1893 = vrot.lane.b32.xlu0 %v377, 119
    %v1894 = vpop.permute.xlu0 %1893
    %1895 = vrot.lane.b32.xlu0 %v378, 119
    %v1896 = vpop.permute.xlu0 %1895
    %1897 = vrot.lane.b32.xlu0 %v379, 119
    %v1898 = vpop.permute.xlu0 %1897
    %1899 = vrot.lane.b32.xlu0 %v380, 119
    %v1900 = vpop.permute.xlu0 %1899
    %1901 = vrot.lane.b32.xlu0 %v381, 119
    %v1902 = vpop.permute.xlu0 %1901
    %1903 = vrot.lane.b32.xlu0 %v382, 119
    %v1904 = vpop.permute.xlu0 %1903
    %vm1905 = vcmp.lt.s32.totalorder %v400, 119
    %v1906 = vsel %vm1905, %v1902, %v1904
    %v1907 = vsel %vm1905, %v1900, %v1902
    %v1908 = vsel %vm1905, %v1898, %v1900
    %v1909 = vsel %vm1905, %v1896, %v1898
    %v1910 = vsel %vm1905, %v1894, %v1896
    %v1911 = vsel %vm1905, %v1892, %v1894
    %v1912 = vsel %vm1905, %v1890, %v1892
    %v1913 = vsel %vm1905, %v1904, %v1890
    %v1914 = vlaneseq
    %v1915 = vshrl.u32 %v1914, 7
    %v1916 = vsub.s32 1, %v1915
    %v1917 = vrot.slane %v121, %v1916
    %v1918 = vlaneseq
    %v1919 = vshrl.u32 %v1918, 7
    %v1920 = vsub.s32 1, %v1919
    %v1921 = vrot.slane %v122, %v1920
    %v1922 = vlaneseq
    %v1923 = vshrl.u32 %v1922, 7
    %v1924 = vsub.s32 1, %v1923
    %v1925 = vrot.slane %v123, %v1924
    %v1926 = vlaneseq
    %v1927 = vshrl.u32 %v1926, 7
    %v1928 = vsub.s32 1, %v1927
    %v1929 = vrot.slane %v124, %v1928
    %v1930 = vlaneseq
    %v1931 = vshrl.u32 %v1930, 7
    %v1932 = vsub.s32 1, %v1931
    %v1933 = vrot.slane %v125, %v1932
    %v1934 = vlaneseq
    %v1935 = vshrl.u32 %v1934, 7
    %v1936 = vsub.s32 1, %v1935
    %v1937 = vrot.slane %v126, %v1936
    %v1938 = vlaneseq
    %v1939 = vshrl.u32 %v1938, 7
    %v1940 = vsub.s32 1, %v1939
    %v1941 = vrot.slane %v127, %v1940
    %v1942 = vlaneseq
    %v1943 = vshrl.u32 %v1942, 7
    %v1944 = vsub.s32 1, %v1943
    %v1945 = vrot.slane %v128, %v1944
    %v1946 = vmul.f32 %v1912, %v1917
    %v1947 = vmul.f32 %v1911, %v1921
    %v1948 = vmul.f32 %v1910, %v1925
    %v1949 = vmul.f32 %v1909, %v1929
    %v1950 = vmul.f32 %v1908, %v1933
    %v1951 = vmul.f32 %v1907, %v1937
    %v1952 = vmul.f32 %v1906, %v1941
    %v1953 = vmul.f32 %v1913, %v1945
    %v1954 = vpack.c.bf16 %v1946, %v1946
    %v1955 = vpack.c.bf16 %v1947, %v1947
    %v1956 = vpack.c.bf16 %v1948, %v1948
    %v1957 = vpack.c.bf16 %v1949, %v1949
    %v1958 = vpack.c.bf16 %v1950, %v1950
    %v1959 = vpack.c.bf16 %v1951, %v1951
    %v1960 = vpack.c.bf16 %v1952, %v1952
    %v1961 = vpack.c.bf16 %v1953, %v1953
    %v1970 = vrot.slane %v1954, 4
    %v1971 = vrot.slane %v1955, 4
    %v1972 = vrot.slane %v1956, 4
    %v1973 = vrot.slane %v1957, 4
    %v1974 = vrot.slane %v1958, 4
    %v1975 = vrot.slane %v1959, 4
    %v1976 = vrot.slane %v1960, 4
    %v1977 = vrot.slane %v1961, 4
    %1986 = vst [vmem:[#allocation2 + $0x200] sm:$0xf0] %v1970
    %1987 = vst [vmem:[#allocation2 + $0x208] sm:$0xf0] %v1971
    %1988 = vst [vmem:[#allocation2 + $0x210] sm:$0xf0] %v1972
    %1989 = vst [vmem:[#allocation2 + $0x218] sm:$0xf0] %v1973
    %1990 = vst [vmem:[#allocation2 + $0x220] sm:$0xf0] %v1974
    %1991 = vst [vmem:[#allocation2 + $0x228] sm:$0xf0] %v1975
    %1992 = vst [vmem:[#allocation2 + $0x230] sm:$0xf0] %v1976
    %1993 = vst [vmem:[#allocation2 + $0x238] sm:$0xf0] %v1977
    %v1994 = vlaneseq
    %v1995 = vshrl.u32 %v1994, 7
    %v1996 = vsub.s32 2, %v1995
    %v1997 = vrot.slane %v121, %v1996
    %v1998 = vlaneseq
    %v1999 = vshrl.u32 %v1998, 7
    %v2000 = vsub.s32 2, %v1999
    %v2001 = vrot.slane %v122, %v2000
    %v2002 = vlaneseq
    %v2003 = vshrl.u32 %v2002, 7
    %v2004 = vsub.s32 2, %v2003
    %v2005 = vrot.slane %v123, %v2004
    %v2006 = vlaneseq
    %v2007 = vshrl.u32 %v2006, 7
    %v2008 = vsub.s32 2, %v2007
    %v2009 = vrot.slane %v124, %v2008
    %v2010 = vlaneseq
    %v2011 = vshrl.u32 %v2010, 7
    %v2012 = vsub.s32 2, %v2011
    %v2013 = vrot.slane %v125, %v2012
    %v2014 = vlaneseq
    %v2015 = vshrl.u32 %v2014, 7
    %v2016 = vsub.s32 2, %v2015
    %v2017 = vrot.slane %v126, %v2016
    %v2018 = vlaneseq
    %v2019 = vshrl.u32 %v2018, 7
    %v2020 = vsub.s32 2, %v2019
    %v2021 = vrot.slane %v127, %v2020
    %v2022 = vlaneseq
    %v2023 = vshrl.u32 %v2022, 7
    %v2024 = vsub.s32 2, %v2023
    %v2025 = vrot.slane %v128, %v2024
    %v2026 = vmul.f32 %v408, %v1997
    %v2027 = vmul.f32 %v407, %v2001
    %v2028 = vmul.f32 %v406, %v2005
    %v2029 = vmul.f32 %v405, %v2009
    %v2030 = vmul.f32 %v404, %v2013
    %v2031 = vmul.f32 %v403, %v2017
    %v2032 = vmul.f32 %v402, %v2021
    %v2033 = vmul.f32 %v409, %v2025
    %v2034 = vpack.c.bf16 %v2026, %v2026
    %v2035 = vpack.c.bf16 %v2027, %v2027
    %v2036 = vpack.c.bf16 %v2028, %v2028
    %v2037 = vpack.c.bf16 %v2029, %v2029
    %v2038 = vpack.c.bf16 %v2030, %v2030
    %v2039 = vpack.c.bf16 %v2031, %v2031
    %v2040 = vpack.c.bf16 %v2032, %v2032
    %v2041 = vpack.c.bf16 %v2033, %v2033
    %2042 = vst [vmem:[#allocation2 + $0x240] sm:$0xf] %v2034
    %2043 = vst [vmem:[#allocation2 + $0x248] sm:$0xf] %v2035
    %2044 = vst [vmem:[#allocation2 + $0x250] sm:$0xf] %v2036
    %2045 = vst [vmem:[#allocation2 + $0x258] sm:$0xf] %v2037
    %2046 = vst [vmem:[#allocation2 + $0x260] sm:$0xf] %v2038
    %2047 = vst [vmem:[#allocation2 + $0x268] sm:$0xf] %v2039
    %2048 = vst [vmem:[#allocation2 + $0x270] sm:$0xf] %v2040
    %2049 = vst [vmem:[#allocation2 + $0x278] sm:$0xf] %v2041
    %v2050 = vlaneseq
    %v2051 = vshrl.u32 %v2050, 7
    %v2052 = vsub.s32 3, %v2051
    %v2053 = vrot.slane %v121, %v2052
    %v2054 = vlaneseq
    %v2055 = vshrl.u32 %v2054, 7
    %v2056 = vsub.s32 3, %v2055
    %v2057 = vrot.slane %v122, %v2056
    %v2058 = vlaneseq
    %v2059 = vshrl.u32 %v2058, 7
    %v2060 = vsub.s32 3, %v2059
    %v2061 = vrot.slane %v123, %v2060
    %v2062 = vlaneseq
    %v2063 = vshrl.u32 %v2062, 7
    %v2064 = vsub.s32 3, %v2063
    %v2065 = vrot.slane %v124, %v2064
    %v2066 = vlaneseq
    %v2067 = vshrl.u32 %v2066, 7
    %v2068 = vsub.s32 3, %v2067
    %v2069 = vrot.slane %v125, %v2068
    %v2070 = vlaneseq
    %v2071 = vshrl.u32 %v2070, 7
    %v2072 = vsub.s32 3, %v2071
    %v2073 = vrot.slane %v126, %v2072
    %v2074 = vlaneseq
    %v2075 = vshrl.u32 %v2074, 7
    %v2076 = vsub.s32 3, %v2075
    %v2077 = vrot.slane %v127, %v2076
    %v2078 = vlaneseq
    %v2079 = vshrl.u32 %v2078, 7
    %v2080 = vsub.s32 3, %v2079
    %v2081 = vrot.slane %v128, %v2080
    %v2082 = vmul.f32 %v489, %v2053
    %v2083 = vmul.f32 %v488, %v2057
    %v2084 = vmul.f32 %v487, %v2061
    %v2085 = vmul.f32 %v486, %v2065
    %v2086 = vmul.f32 %v485, %v2069
    %v2087 = vmul.f32 %v484, %v2073
    %v2088 = vmul.f32 %v483, %v2077
    %v2089 = vmul.f32 %v490, %v2081
    %v2090 = vpack.c.bf16 %v2082, %v2082
    %v2091 = vpack.c.bf16 %v2083, %v2083
    %v2092 = vpack.c.bf16 %v2084, %v2084
    %v2093 = vpack.c.bf16 %v2085, %v2085
    %v2094 = vpack.c.bf16 %v2086, %v2086
    %v2095 = vpack.c.bf16 %v2087, %v2087
    %v2096 = vpack.c.bf16 %v2088, %v2088
    %v2097 = vpack.c.bf16 %v2089, %v2089
    %v2106 = vrot.slane %v2090, 4
    %v2107 = vrot.slane %v2091, 4
    %v2108 = vrot.slane %v2092, 4
    %v2109 = vrot.slane %v2093, 4
    %v2110 = vrot.slane %v2094, 4
    %v2111 = vrot.slane %v2095, 4
    %v2112 = vrot.slane %v2096, 4
    %v2113 = vrot.slane %v2097, 4
    %2122 = vst [vmem:[#allocation2 + $0x240] sm:$0xf0] %v2106
    %2123 = vst [vmem:[#allocation2 + $0x248] sm:$0xf0] %v2107
    %2124 = vst [vmem:[#allocation2 + $0x250] sm:$0xf0] %v2108
    %2125 = vst [vmem:[#allocation2 + $0x258] sm:$0xf0] %v2109
    %2126 = vst [vmem:[#allocation2 + $0x260] sm:$0xf0] %v2110
    %2127 = vst [vmem:[#allocation2 + $0x268] sm:$0xf0] %v2111
    %2128 = vst [vmem:[#allocation2 + $0x270] sm:$0xf0] %v2112
    %2129 = vst [vmem:[#allocation2 + $0x278] sm:$0xf0] %v2113
    %v2130 = vlaneseq
    %v2131 = vshrl.u32 %v2130, 7
    %v2132 = vsub.s32 4, %v2131
    %v2133 = vrot.slane %v121, %v2132
    %v2134 = vlaneseq
    %v2135 = vshrl.u32 %v2134, 7
    %v2136 = vsub.s32 4, %v2135
    %v2137 = vrot.slane %v122, %v2136
    %v2138 = vlaneseq
    %v2139 = vshrl.u32 %v2138, 7
    %v2140 = vsub.s32 4, %v2139
    %v2141 = vrot.slane %v123, %v2140
    %v2142 = vlaneseq
    %v2143 = vshrl.u32 %v2142, 7
    %v2144 = vsub.s32 4, %v2143
    %v2145 = vrot.slane %v124, %v2144
    %v2146 = vlaneseq
    %v2147 = vshrl.u32 %v2146, 7
    %v2148 = vsub.s32 4, %v2147
    %v2149 = vrot.slane %v125, %v2148
    %v2150 = vlaneseq
    %v2151 = vshrl.u32 %v2150, 7
    %v2152 = vsub.s32 4, %v2151
    %v2153 = vrot.slane %v126, %v2152
    %v2154 = vlaneseq
    %v2155 = vshrl.u32 %v2154, 7
    %v2156 = vsub.s32 4, %v2155
    %v2157 = vrot.slane %v127, %v2156
    %v2158 = vlaneseq
    %v2159 = vshrl.u32 %v2158, 7
    %v2160 = vsub.s32 4, %v2159
    %v2161 = vrot.slane %v128, %v2160
    %v2162 = vmul.f32 %v594, %v2133
    %v2163 = vmul.f32 %v593, %v2137
    %v2164 = vmul.f32 %v592, %v2141
    %v2165 = vmul.f32 %v591, %v2145
    %v2166 = vmul.f32 %v590, %v2149
    %v2167 = vmul.f32 %v589, %v2153
    %v2168 = vmul.f32 %v588, %v2157
    %v2169 = vmul.f32 %v595, %v2161
    %v2170 = vpack.c.bf16 %v2162, %v2162
    %v2171 = vpack.c.bf16 %v2163, %v2163
    %v2172 = vpack.c.bf16 %v2164, %v2164
    %v2173 = vpack.c.bf16 %v2165, %v2165
    %v2174 = vpack.c.bf16 %v2166, %v2166
    %v2175 = vpack.c.bf16 %v2167, %v2167
    %v2176 = vpack.c.bf16 %v2168, %v2168
    %v2177 = vpack.c.bf16 %v2169, %v2169
    %2178 = vst [vmem:[#allocation2 + $0x280] sm:$0xf] %v2170
    %2179 = vst [vmem:[#allocation2 + $0x288] sm:$0xf] %v2171
    %2180 = vst [vmem:[#allocation2 + $0x290] sm:$0xf] %v2172
    %2181 = vst [vmem:[#allocation2 + $0x298] sm:$0xf] %v2173
    %2182 = vst [vmem:[#allocation2 + $0x2a0] sm:$0xf] %v2174
    %2183 = vst [vmem:[#allocation2 + $0x2a8] sm:$0xf] %v2175
    %2184 = vst [vmem:[#allocation2 + $0x2b0] sm:$0xf] %v2176
    %2185 = vst [vmem:[#allocation2 + $0x2b8] sm:$0xf] %v2177
    %v2186 = vlaneseq
    %v2187 = vshrl.u32 %v2186, 7
    %v2188 = vsub.s32 5, %v2187
    %v2189 = vrot.slane %v121, %v2188
    %v2190 = vlaneseq
    %v2191 = vshrl.u32 %v2190, 7
    %v2192 = vsub.s32 5, %v2191
    %v2193 = vrot.slane %v122, %v2192
    %v2194 = vlaneseq
    %v2195 = vshrl.u32 %v2194, 7
    %v2196 = vsub.s32 5, %v2195
    %v2197 = vrot.slane %v123, %v2196
    %v2198 = vlaneseq
    %v2199 = vshrl.u32 %v2198, 7
    %v2200 = vsub.s32 5, %v2199
    %v2201 = vrot.slane %v124, %v2200
    %v2202 = vlaneseq
    %v2203 = vshrl.u32 %v2202, 7
    %v2204 = vsub.s32 5, %v2203
    %v2205 = vrot.slane %v125, %v2204
    %v2206 = vlaneseq
    %v2207 = vshrl.u32 %v2206, 7
    %v2208 = vsub.s32 5, %v2207
    %v2209 = vrot.slane %v126, %v2208
    %v2210 = vlaneseq
    %v2211 = vshrl.u32 %v2210, 7
    %v2212 = vsub.s32 5, %v2211
    %v2213 = vrot.slane %v127, %v2212
    %v2214 = vlaneseq
    %v2215 = vshrl.u32 %v2214, 7
    %v2216 = vsub.s32 5, %v2215
    %v2217 = vrot.slane %v128, %v2216
    %v2218 = vmul.f32 %v675, %v2189
    %v2219 = vmul.f32 %v674, %v2193
    %v2220 = vmul.f32 %v673, %v2197
    %v2221 = vmul.f32 %v672, %v2201
    %v2222 = vmul.f32 %v671, %v2205
    %v2223 = vmul.f32 %v670, %v2209
    %v2224 = vmul.f32 %v669, %v2213
    %v2225 = vmul.f32 %v676, %v2217
    %v2226 = vpack.c.bf16 %v2218, %v2218
    %v2227 = vpack.c.bf16 %v2219, %v2219
    %v2228 = vpack.c.bf16 %v2220, %v2220
    %v2229 = vpack.c.bf16 %v2221, %v2221
    %v2230 = vpack.c.bf16 %v2222, %v2222
    %v2231 = vpack.c.bf16 %v2223, %v2223
    %v2232 = vpack.c.bf16 %v2224, %v2224
    %v2233 = vpack.c.bf16 %v2225, %v2225
    %v2242 = vrot.slane %v2226, 4
    %v2243 = vrot.slane %v2227, 4
    %v2244 = vrot.slane %v2228, 4
    %v2245 = vrot.slane %v2229, 4
    %v2246 = vrot.slane %v2230, 4
    %v2247 = vrot.slane %v2231, 4
    %v2248 = vrot.slane %v2232, 4
    %v2249 = vrot.slane %v2233, 4
    %2258 = vst [vmem:[#allocation2 + $0x280] sm:$0xf0] %v2242
    %2259 = vst [vmem:[#allocation2 + $0x288] sm:$0xf0] %v2243
    %2260 = vst [vmem:[#allocation2 + $0x290] sm:$0xf0] %v2244
    %2261 = vst [vmem:[#allocation2 + $0x298] sm:$0xf0] %v2245
    %2262 = vst [vmem:[#allocation2 + $0x2a0] sm:$0xf0] %v2246
    %2263 = vst [vmem:[#allocation2 + $0x2a8] sm:$0xf0] %v2247
    %2264 = vst [vmem:[#allocation2 + $0x2b0] sm:$0xf0] %v2248
    %2265 = vst [vmem:[#allocation2 + $0x2b8] sm:$0xf0] %v2249
    %v2266 = vlaneseq
    %v2267 = vshrl.u32 %v2266, 7
    %v2268 = vsub.s32 6, %v2267
    %v2269 = vrot.slane %v121, %v2268
    %v2270 = vlaneseq
    %v2271 = vshrl.u32 %v2270, 7
    %v2272 = vsub.s32 6, %v2271
    %v2273 = vrot.slane %v122, %v2272
    %v2274 = vlaneseq
    %v2275 = vshrl.u32 %v2274, 7
    %v2276 = vsub.s32 6, %v2275
    %v2277 = vrot.slane %v123, %v2276
    %v2278 = vlaneseq
    %v2279 = vshrl.u32 %v2278, 7
    %v2280 = vsub.s32 6, %v2279
    %v2281 = vrot.slane %v124, %v2280
    %v2282 = vlaneseq
    %v2283 = vshrl.u32 %v2282, 7
    %v2284 = vsub.s32 6, %v2283
    %v2285 = vrot.slane %v125, %v2284
    %v2286 = vlaneseq
    %v2287 = vshrl.u32 %v2286, 7
    %v2288 = vsub.s32 6, %v2287
    %v2289 = vrot.slane %v126, %v2288
    %v2290 = vlaneseq
    %v2291 = vshrl.u32 %v2290, 7
    %v2292 = vsub.s32 6, %v2291
    %v2293 = vrot.slane %v127, %v2292
    %v2294 = vlaneseq
    %v2295 = vshrl.u32 %v2294, 7
    %v2296 = vsub.s32 6, %v2295
    %v2297 = vrot.slane %v128, %v2296
    %v2298 = vmul.f32 %v780, %v2269
    %v2299 = vmul.f32 %v779, %v2273
    %v2300 = vmul.f32 %v778, %v2277
    %v2301 = vmul.f32 %v777, %v2281
    %v2302 = vmul.f32 %v776, %v2285
    %v2303 = vmul.f32 %v775, %v2289
    %v2304 = vmul.f32 %v774, %v2293
    %v2305 = vmul.f32 %v781, %v2297
    %v2306 = vpack.c.bf16 %v2298, %v2298
    %v2307 = vpack.c.bf16 %v2299, %v2299
    %v2308 = vpack.c.bf16 %v2300, %v2300
    %v2309 = vpack.c.bf16 %v2301, %v2301
    %v2310 = vpack.c.bf16 %v2302, %v2302
    %v2311 = vpack.c.bf16 %v2303, %v2303
    %v2312 = vpack.c.bf16 %v2304, %v2304
    %v2313 = vpack.c.bf16 %v2305, %v2305
    %2314 = vst [vmem:[#allocation2 + $0x2c0] sm:$0xf] %v2306
    %2315 = vst [vmem:[#allocation2 + $0x2c8] sm:$0xf] %v2307
    %2316 = vst [vmem:[#allocation2 + $0x2d0] sm:$0xf] %v2308
    %2317 = vst [vmem:[#allocation2 + $0x2d8] sm:$0xf] %v2309
    %2318 = vst [vmem:[#allocation2 + $0x2e0] sm:$0xf] %v2310
    %2319 = vst [vmem:[#allocation2 + $0x2e8] sm:$0xf] %v2311
    %2320 = vst [vmem:[#allocation2 + $0x2f0] sm:$0xf] %v2312
    %2321 = vst [vmem:[#allocation2 + $0x2f8] sm:$0xf] %v2313
    %v2322 = vlaneseq
    %v2323 = vshrl.u32 %v2322, 7
    %v2324 = vsub.s32 7, %v2323
    %v2325 = vrot.slane %v121, %v2324
    %v2326 = vlaneseq
    %v2327 = vshrl.u32 %v2326, 7
    %v2328 = vsub.s32 7, %v2327
    %v2329 = vrot.slane %v122, %v2328
    %v2330 = vlaneseq
    %v2331 = vshrl.u32 %v2330, 7
    %v2332 = vsub.s32 7, %v2331
    %v2333 = vrot.slane %v123, %v2332
    %v2334 = vlaneseq
    %v2335 = vshrl.u32 %v2334, 7
    %v2336 = vsub.s32 7, %v2335
    %v2337 = vrot.slane %v124, %v2336
    %v2338 = vlaneseq
    %v2339 = vshrl.u32 %v2338, 7
    %v2340 = vsub.s32 7, %v2339
    %v2341 = vrot.slane %v125, %v2340
    %v2342 = vlaneseq
    %v2343 = vshrl.u32 %v2342, 7
    %v2344 = vsub.s32 7, %v2343
    %v2345 = vrot.slane %v126, %v2344
    %v2346 = vlaneseq
    %v2347 = vshrl.u32 %v2346, 7
    %v2348 = vsub.s32 7, %v2347
    %v2349 = vrot.slane %v127, %v2348
    %v2350 = vlaneseq
    %v2351 = vshrl.u32 %v2350, 7
    %v2352 = vsub.s32 7, %v2351
    %v2353 = vrot.slane %v128, %v2352
    %v2354 = vmul.f32 %v861, %v2325
    %v2355 = vmul.f32 %v860, %v2329
    %v2356 = vmul.f32 %v859, %v2333
    %v2357 = vmul.f32 %v858, %v2337
    %v2358 = vmul.f32 %v857, %v2341
    %v2359 = vmul.f32 %v856, %v2345
    %v2360 = vmul.f32 %v855, %v2349
    %v2361 = vmul.f32 %v862, %v2353
    %v2362 = vpack.c.bf16 %v2354, %v2354
    %v2363 = vpack.c.bf16 %v2355, %v2355
    %v2364 = vpack.c.bf16 %v2356, %v2356
    %v2365 = vpack.c.bf16 %v2357, %v2357
    %v2366 = vpack.c.bf16 %v2358, %v2358
    %v2367 = vpack.c.bf16 %v2359, %v2359
    %v2368 = vpack.c.bf16 %v2360, %v2360
    %v2369 = vpack.c.bf16 %v2361, %v2361
    %v2378 = vrot.slane %v2362, 4
    %v2379 = vrot.slane %v2363, 4
    %v2380 = vrot.slane %v2364, 4
    %v2381 = vrot.slane %v2365, 4
    %v2382 = vrot.slane %v2366, 4
    %v2383 = vrot.slane %v2367, 4
    %v2384 = vrot.slane %v2368, 4
    %v2385 = vrot.slane %v2369, 4
    %2394 = vst [vmem:[#allocation2 + $0x2c0] sm:$0xf0] %v2378
    %2395 = vst [vmem:[#allocation2 + $0x2c8] sm:$0xf0] %v2379
    %2396 = vst [vmem:[#allocation2 + $0x2d0] sm:$0xf0] %v2380
    %2397 = vst [vmem:[#allocation2 + $0x2d8] sm:$0xf0] %v2381
    %2398 = vst [vmem:[#allocation2 + $0x2e0] sm:$0xf0] %v2382
    %2399 = vst [vmem:[#allocation2 + $0x2e8] sm:$0xf0] %v2383
    %2400 = vst [vmem:[#allocation2 + $0x2f0] sm:$0xf0] %v2384
    %2401 = vst [vmem:[#allocation2 + $0x2f8] sm:$0xf0] %v2385
    %v2402 = vlaneseq
    %v2403 = vshrl.u32 %v2402, 7
    %v2404 = vsub.s32 0, %v2403
    %v2405 = vrot.slane %v129, %v2404
    %v2406 = vlaneseq
    %v2407 = vshrl.u32 %v2406, 7
    %v2408 = vsub.s32 0, %v2407
    %v2409 = vrot.slane %v130, %v2408
    %v2410 = vlaneseq
    %v2411 = vshrl.u32 %v2410, 7
    %v2412 = vsub.s32 0, %v2411
    %v2413 = vrot.slane %v131, %v2412
    %v2414 = vlaneseq
    %v2415 = vshrl.u32 %v2414, 7
    %v2416 = vsub.s32 0, %v2415
    %v2417 = vrot.slane %v132, %v2416
    %v2418 = vlaneseq
    %v2419 = vshrl.u32 %v2418, 7
    %v2420 = vsub.s32 0, %v2419
    %v2421 = vrot.slane %v133, %v2420
    %v2422 = vlaneseq
    %v2423 = vshrl.u32 %v2422, 7
    %v2424 = vsub.s32 0, %v2423
    %v2425 = vrot.slane %v134, %v2424
    %v2426 = vlaneseq
    %v2427 = vshrl.u32 %v2426, 7
    %v2428 = vsub.s32 0, %v2427
    %v2429 = vrot.slane %v135, %v2428
    %v2430 = vlaneseq
    %v2431 = vshrl.u32 %v2430, 7
    %v2432 = vsub.s32 0, %v2431
    %v2433 = vrot.slane %v136, %v2432
    %v2434 = vmul.f32 %v966, %v2405
    %v2435 = vmul.f32 %v965, %v2409
    %v2436 = vmul.f32 %v964, %v2413
    %v2437 = vmul.f32 %v963, %v2417
    %v2438 = vmul.f32 %v962, %v2421
    %v2439 = vmul.f32 %v961, %v2425
    %v2440 = vmul.f32 %v960, %v2429
    %v2441 = vmul.f32 %v967, %v2433
    %v2442 = vpack.c.bf16 %v2434, %v2434
    %v2443 = vpack.c.bf16 %v2435, %v2435
    %v2444 = vpack.c.bf16 %v2436, %v2436
    %v2445 = vpack.c.bf16 %v2437, %v2437
    %v2446 = vpack.c.bf16 %v2438, %v2438
    %v2447 = vpack.c.bf16 %v2439, %v2439
    %v2448 = vpack.c.bf16 %v2440, %v2440
    %v2449 = vpack.c.bf16 %v2441, %v2441
    %2450 = vst [vmem:[#allocation2 + $0x300] sm:$0xf] %v2442
    %2451 = vst [vmem:[#allocation2 + $0x308] sm:$0xf] %v2443
    %2452 = vst [vmem:[#allocation2 + $0x310] sm:$0xf] %v2444
    %2453 = vst [vmem:[#allocation2 + $0x318] sm:$0xf] %v2445
    %2454 = vst [vmem:[#allocation2 + $0x320] sm:$0xf] %v2446
    %2455 = vst [vmem:[#allocation2 + $0x328] sm:$0xf] %v2447
    %2456 = vst [vmem:[#allocation2 + $0x330] sm:$0xf] %v2448
    %2457 = vst [vmem:[#allocation2 + $0x338] sm:$0xf] %v2449
    %v2458 = vlaneseq
    %v2459 = vshrl.u32 %v2458, 7
    %v2460 = vsub.s32 1, %v2459
    %v2461 = vrot.slane %v129, %v2460
    %v2462 = vlaneseq
    %v2463 = vshrl.u32 %v2462, 7
    %v2464 = vsub.s32 1, %v2463
    %v2465 = vrot.slane %v130, %v2464
    %v2466 = vlaneseq
    %v2467 = vshrl.u32 %v2466, 7
    %v2468 = vsub.s32 1, %v2467
    %v2469 = vrot.slane %v131, %v2468
    %v2470 = vlaneseq
    %v2471 = vshrl.u32 %v2470, 7
    %v2472 = vsub.s32 1, %v2471
    %v2473 = vrot.slane %v132, %v2472
    %v2474 = vlaneseq
    %v2475 = vshrl.u32 %v2474, 7
    %v2476 = vsub.s32 1, %v2475
    %v2477 = vrot.slane %v133, %v2476
    %v2478 = vlaneseq
    %v2479 = vshrl.u32 %v2478, 7
    %v2480 = vsub.s32 1, %v2479
    %v2481 = vrot.slane %v134, %v2480
    %v2482 = vlaneseq
    %v2483 = vshrl.u32 %v2482, 7
    %v2484 = vsub.s32 1, %v2483
    %v2485 = vrot.slane %v135, %v2484
    %v2486 = vlaneseq
    %v2487 = vshrl.u32 %v2486, 7
    %v2488 = vsub.s32 1, %v2487
    %v2489 = vrot.slane %v136, %v2488
    %v2490 = vmul.f32 %v1047, %v2461
    %v2491 = vmul.f32 %v1046, %v2465
    %v2492 = vmul.f32 %v1045, %v2469
    %v2493 = vmul.f32 %v1044, %v2473
    %v2494 = vmul.f32 %v1043, %v2477
    %v2495 = vmul.f32 %v1042, %v2481
    %v2496 = vmul.f32 %v1041, %v2485
    %v2497 = vmul.f32 %v1048, %v2489
    %v2498 = vpack.c.bf16 %v2490, %v2490
    %v2499 = vpack.c.bf16 %v2491, %v2491
    %v2500 = vpack.c.bf16 %v2492, %v2492
    %v2501 = vpack.c.bf16 %v2493, %v2493
    %v2502 = vpack.c.bf16 %v2494, %v2494
    %v2503 = vpack.c.bf16 %v2495, %v2495
    %v2504 = vpack.c.bf16 %v2496, %v2496
    %v2505 = vpack.c.bf16 %v2497, %v2497
    %v2514 = vrot.slane %v2498, 4
    %v2515 = vrot.slane %v2499, 4
    %v2516 = vrot.slane %v2500, 4
    %v2517 = vrot.slane %v2501, 4
    %v2518 = vrot.slane %v2502, 4
    %v2519 = vrot.slane %v2503, 4
    %v2520 = vrot.slane %v2504, 4
    %v2521 = vrot.slane %v2505, 4
    %2530 = vst [vmem:[#allocation2 + $0x300] sm:$0xf0] %v2514
    %2531 = vst [vmem:[#allocation2 + $0x308] sm:$0xf0] %v2515
    %2532 = vst [vmem:[#allocation2 + $0x310] sm:$0xf0] %v2516
    %2533 = vst [vmem:[#allocation2 + $0x318] sm:$0xf0] %v2517
    %2534 = vst [vmem:[#allocation2 + $0x320] sm:$0xf0] %v2518
    %2535 = vst [vmem:[#allocation2 + $0x328] sm:$0xf0] %v2519
    %2536 = vst [vmem:[#allocation2 + $0x330] sm:$0xf0] %v2520
    %2537 = vst [vmem:[#allocation2 + $0x338] sm:$0xf0] %v2521
    %v2538 = vlaneseq
    %v2539 = vshrl.u32 %v2538, 7
    %v2540 = vsub.s32 2, %v2539
    %v2541 = vrot.slane %v129, %v2540
    %v2542 = vlaneseq
    %v2543 = vshrl.u32 %v2542, 7
    %v2544 = vsub.s32 2, %v2543
    %v2545 = vrot.slane %v130, %v2544
    %v2546 = vlaneseq
    %v2547 = vshrl.u32 %v2546, 7
    %v2548 = vsub.s32 2, %v2547
    %v2549 = vrot.slane %v131, %v2548
    %v2550 = vlaneseq
    %v2551 = vshrl.u32 %v2550, 7
    %v2552 = vsub.s32 2, %v2551
    %v2553 = vrot.slane %v132, %v2552
    %v2554 = vlaneseq
    %v2555 = vshrl.u32 %v2554, 7
    %v2556 = vsub.s32 2, %v2555
    %v2557 = vrot.slane %v133, %v2556
    %v2558 = vlaneseq
    %v2559 = vshrl.u32 %v2558, 7
    %v2560 = vsub.s32 2, %v2559
    %v2561 = vrot.slane %v134, %v2560
    %v2562 = vlaneseq
    %v2563 = vshrl.u32 %v2562, 7
    %v2564 = vsub.s32 2, %v2563
    %v2565 = vrot.slane %v135, %v2564
    %v2566 = vlaneseq
    %v2567 = vshrl.u32 %v2566, 7
    %v2568 = vsub.s32 2, %v2567
    %v2569 = vrot.slane %v136, %v2568
    %v2570 = vmul.f32 %v1152, %v2541
    %v2571 = vmul.f32 %v1151, %v2545
    %v2572 = vmul.f32 %v1150, %v2549
    %v2573 = vmul.f32 %v1149, %v2553
    %v2574 = vmul.f32 %v1148, %v2557
    %v2575 = vmul.f32 %v1147, %v2561
    %v2576 = vmul.f32 %v1146, %v2565
    %v2577 = vmul.f32 %v1153, %v2569
    %v2578 = vpack.c.bf16 %v2570, %v2570
    %v2579 = vpack.c.bf16 %v2571, %v2571
    %v2580 = vpack.c.bf16 %v2572, %v2572
    %v2581 = vpack.c.bf16 %v2573, %v2573
    %v2582 = vpack.c.bf16 %v2574, %v2574
    %v2583 = vpack.c.bf16 %v2575, %v2575
    %v2584 = vpack.c.bf16 %v2576, %v2576
    %v2585 = vpack.c.bf16 %v2577, %v2577
    %2586 = vst [vmem:[#allocation2 + $0x340] sm:$0xf] %v2578
    %2587 = vst [vmem:[#allocation2 + $0x348] sm:$0xf] %v2579
    %2588 = vst [vmem:[#allocation2 + $0x350] sm:$0xf] %v2580
    %2589 = vst [vmem:[#allocation2 + $0x358] sm:$0xf] %v2581
    %2590 = vst [vmem:[#allocation2 + $0x360] sm:$0xf] %v2582
    %2591 = vst [vmem:[#allocation2 + $0x368] sm:$0xf] %v2583
    %2592 = vst [vmem:[#allocation2 + $0x370] sm:$0xf] %v2584
    %2593 = vst [vmem:[#allocation2 + $0x378] sm:$0xf] %v2585
    %v2594 = vld [vmem:[#allocation8] sm:$0xff]
    %v2595 = vld [vmem:[#allocation2] sm:$0xff]
    %v2596 = vld [vmem:[#allocation2 + $0x8] sm:$0xff]
    %v2597 = vld [vmem:[#allocation2 + $0x10] sm:$0xff]
    %v2598 = vld [vmem:[#allocation2 + $0x18] sm:$0xff]
    %v2599 = vld [vmem:[#allocation2 + $0x20] sm:$0xff]
    %v2600 = vld [vmem:[#allocation2 + $0x28] sm:$0xff]
    %v2601 = vld [vmem:[#allocation2 + $0x30] sm:$0xff]
    %v2602 = vld [vmem:[#allocation2 + $0x38] sm:$0xff]
    %v2603 = vld [vmem:[#allocation2 + $0x40] sm:$0xff]
    %v2604 = vld [vmem:[#allocation2 + $0x48] sm:$0xff]
    %v2605 = vld [vmem:[#allocation2 + $0x50] sm:$0xff]
    %v2606 = vld [vmem:[#allocation2 + $0x58] sm:$0xff]
    %v2607 = vld [vmem:[#allocation2 + $0x60] sm:$0xff]
    %v2608 = vld [vmem:[#allocation2 + $0x68] sm:$0xff]
    %v2609 = vld [vmem:[#allocation2 + $0x70] sm:$0xff]
    %v2610 = vld [vmem:[#allocation2 + $0x78] sm:$0xff]
    %v2611 = vld [vmem:[#allocation2 + $0x80] sm:$0xff]
    %v2612 = vld [vmem:[#allocation2 + $0x88] sm:$0xff]
    %v2613 = vld [vmem:[#allocation2 + $0x90] sm:$0xff]
    %v2614 = vld [vmem:[#allocation2 + $0x98] sm:$0xff]
    %v2615 = vld [vmem:[#allocation2 + $0xa0] sm:$0xff]
    %v2616 = vld [vmem:[#allocation2 + $0xa8] sm:$0xff]
    %v2617 = vld [vmem:[#allocation2 + $0xb0] sm:$0xff]
    %v2618 = vld [vmem:[#allocation2 + $0xb8] sm:$0xff]
    %v2619 = vld [vmem:[#allocation2 + $0xc0] sm:$0xff]
    %v2620 = vld [vmem:[#allocation2 + $0xc8] sm:$0xff]
    %v2621 = vld [vmem:[#allocation2 + $0xd0] sm:$0xff]
    %v2622 = vld [vmem:[#allocation2 + $0xd8] sm:$0xff]
    %v2623 = vld [vmem:[#allocation2 + $0xe0] sm:$0xff]
    %v2624 = vld [vmem:[#allocation2 + $0xe8] sm:$0xff]
    %v2625 = vld [vmem:[#allocation2 + $0xf0] sm:$0xff]
    %v2626 = vld [vmem:[#allocation2 + $0xf8] sm:$0xff]
    %v2627 = vld [vmem:[#allocation2 + $0x100] sm:$0xff]
    %v2628 = vld [vmem:[#allocation2 + $0x108] sm:$0xff]
    %v2629 = vld [vmem:[#allocation2 + $0x110] sm:$0xff]
    %v2630 = vld [vmem:[#allocation2 + $0x118] sm:$0xff]
    %v2631 = vld [vmem:[#allocation2 + $0x120] sm:$0xff]
    %v2632 = vld [vmem:[#allocation2 + $0x128] sm:$0xff]
    %v2633 = vld [vmem:[#allocation2 + $0x130] sm:$0xff]
    %v2634 = vld [vmem:[#allocation2 + $0x138] sm:$0xff]
    %v2635 = vld [vmem:[#allocation2 + $0x140] sm:$0xff]
    %v2636 = vld [vmem:[#allocation2 + $0x148] sm:$0xff]
    %v2637 = vld [vmem:[#allocation2 + $0x150] sm:$0xff]
    %v2638 = vld [vmem:[#allocation2 + $0x158] sm:$0xff]
    %v2639 = vld [vmem:[#allocation2 + $0x160] sm:$0xff]
    %v2640 = vld [vmem:[#allocation2 + $0x168] sm:$0xff]
    %v2641 = vld [vmem:[#allocation2 + $0x170] sm:$0xff]
    %v2642 = vld [vmem:[#allocation2 + $0x178] sm:$0xff]
    %v2643 = vld [vmem:[#allocation2 + $0x180] sm:$0xff]
    %v2644 = vld [vmem:[#allocation2 + $0x188] sm:$0xff]
    %v2645 = vld [vmem:[#allocation2 + $0x190] sm:$0xff]
    %v2646 = vld [vmem:[#allocation2 + $0x198] sm:$0xff]
    %v2647 = vld [vmem:[#allocation2 + $0x1a0] sm:$0xff]
    %v2648 = vld [vmem:[#allocation2 + $0x1a8] sm:$0xff]
    %v2649 = vld [vmem:[#allocation2 + $0x1b0] sm:$0xff]
    %v2650 = vld [vmem:[#allocation2 + $0x1b8] sm:$0xff]
    %v2651 = vld [vmem:[#allocation2 + $0x1c0] sm:$0xff]
    %v2652 = vld [vmem:[#allocation2 + $0x1c8] sm:$0xff]
    %v2653 = vld [vmem:[#allocation2 + $0x1d0] sm:$0xff]
    %v2654 = vld [vmem:[#allocation2 + $0x1d8] sm:$0xff]
    %v2655 = vld [vmem:[#allocation2 + $0x1e0] sm:$0xff]
    %v2656 = vld [vmem:[#allocation2 + $0x1e8] sm:$0xff]
    %v2657 = vld [vmem:[#allocation2 + $0x1f0] sm:$0xff]
    %v2658 = vld [vmem:[#allocation2 + $0x1f8] sm:$0xff]
    %v2659 = vld [vmem:[#allocation2 + $0x200] sm:$0xff]
    %v2660 = vld [vmem:[#allocation2 + $0x208] sm:$0xff]
    %v2661 = vld [vmem:[#allocation2 + $0x210] sm:$0xff]
    %v2662 = vld [vmem:[#allocation2 + $0x218] sm:$0xff]
    %v2663 = vld [vmem:[#allocation2 + $0x220] sm:$0xff]
    %v2664 = vld [vmem:[#allocation2 + $0x228] sm:$0xff]
    %v2665 = vld [vmem:[#allocation2 + $0x230] sm:$0xff]
    %v2666 = vld [vmem:[#allocation2 + $0x238] sm:$0xff]
    %v2667 = vld [vmem:[#allocation2 + $0x240] sm:$0xff]
    %v2668 = vld [vmem:[#allocation2 + $0x248] sm:$0xff]
    %v2669 = vld [vmem:[#allocation2 + $0x250] sm:$0xff]
    %v2670 = vld [vmem:[#allocation2 + $0x258] sm:$0xff]
    %v2671 = vld [vmem:[#allocation2 + $0x260] sm:$0xff]
    %v2672 = vld [vmem:[#allocation2 + $0x268] sm:$0xff]
    %v2673 = vld [vmem:[#allocation2 + $0x270] sm:$0xff]
    %v2674 = vld [vmem:[#allocation2 + $0x278] sm:$0xff]
    %v2675 = vld [vmem:[#allocation2 + $0x280] sm:$0xff]
    %v2676 = vld [vmem:[#allocation2 + $0x288] sm:$0xff]
    %v2677 = vld [vmem:[#allocation2 + $0x290] sm:$0xff]
    %v2678 = vld [vmem:[#allocation2 + $0x298] sm:$0xff]
    %v2679 = vld [vmem:[#allocation2 + $0x2a0] sm:$0xff]
    %v2680 = vld [vmem:[#allocation2 + $0x2a8] sm:$0xff]
    %v2681 = vld [vmem:[#allocation2 + $0x2b0] sm:$0xff]
    %v2682 = vld [vmem:[#allocation2 + $0x2b8] sm:$0xff]
    %v2683 = vld [vmem:[#allocation2 + $0x2c0] sm:$0xff]
    %v2684 = vld [vmem:[#allocation2 + $0x2c8] sm:$0xff]
    %v2685 = vld [vmem:[#allocation2 + $0x2d0] sm:$0xff]
    %v2686 = vld [vmem:[#allocation2 + $0x2d8] sm:$0xff]
    %v2687 = vld [vmem:[#allocation2 + $0x2e0] sm:$0xff]
    %v2688 = vld [vmem:[#allocation2 + $0x2e8] sm:$0xff]
    %v2689 = vld [vmem:[#allocation2 + $0x2f0] sm:$0xff]
    %v2690 = vld [vmem:[#allocation2 + $0x2f8] sm:$0xff]
    %v2691 = vld [vmem:[#allocation2 + $0x300] sm:$0xff]
    %v2692 = vld [vmem:[#allocation2 + $0x308] sm:$0xff]
    %v2693 = vld [vmem:[#allocation2 + $0x310] sm:$0xff]
    %v2694 = vld [vmem:[#allocation2 + $0x318] sm:$0xff]
    %v2695 = vld [vmem:[#allocation2 + $0x320] sm:$0xff]
    %v2696 = vld [vmem:[#allocation2 + $0x328] sm:$0xff]
    %v2697 = vld [vmem:[#allocation2 + $0x330] sm:$0xff]
    %v2698 = vld [vmem:[#allocation2 + $0x338] sm:$0xff]
    %v2699 = vld [vmem:[#allocation2 + $0x340] sm:$0xf]
    %v2700 = vld [vmem:[#allocation2 + $0x348] sm:$0xf]
    %v2701 = vld [vmem:[#allocation2 + $0x350] sm:$0xf]
    %v2702 = vld [vmem:[#allocation2 + $0x358] sm:$0xf]
    %v2703 = vld [vmem:[#allocation2 + $0x360] sm:$0xf]
    %v2704 = vld [vmem:[#allocation2 + $0x368] sm:$0xf]
    %v2705 = vld [vmem:[#allocation2 + $0x370] sm:$0xf]
    %v2706 = vld [vmem:[#allocation2 + $0x378] sm:$0xf]
    %2708 = vset.pattern.permute.xlu0 2
    %2709 = vperm.xlu0 %2708, %v138
    %v2710 = vpop.permute.xlu0 %2709
    %v2713 = vunpack.c.l.b16 %v2594
    %v2714 = vunpack.c.h.b16 %v2594
    %v2715 = vpack.c.b16 %v2713, %v2713
    %v2716 = vpack.c.b16 %v2714, %v2714
    %vm2718 = vcmask 719872
    %v2720 = vsel %vm2718, %v2716, 0
    %vm2722 = vcmask 1043456
    %v2724 = vsel %vm2722, %v2699, 0
    %v2727 = vsel %vm2722, %v2700, 0
    %v2730 = vsel %vm2722, %v2701, 0
    %v2733 = vsel %vm2722, %v2702, 0
    %v2736 = vsel %vm2722, %v2703, 0
    %v2739 = vsel %vm2722, %v2704, 0
    %v2742 = vsel %vm2722, %v2705, 0
    %v2745 = vsel %vm2722, %v2706, 0
    %2747 = vmatprep.subr.bf16.mxu0 %v2596
    %2748 = vmatpush1.bf16.msra.mxu0 %v2595
    %2749 = vmatprep.subr.bf16.mxu0 %v2604
    %2750 = vmatpush1.bf16.msra.mxu0 %v2603
    %2751 = vmatprep.subr.bf16.mxu0 %v2612
    %2752 = vmatpush1.bf16.msra.mxu0 %v2611
    %2753 = vmatprep.subr.bf16.mxu0 %v2620
    %2754 = vmatpush1.bf16.msra.mxu0 %v2619
    %2755 = vmatprep.subr.bf16.mxu0 %v2628
    %2756 = vmatpush1.bf16.msra.mxu0 %v2627
    %2757 = vmatprep.subr.bf16.mxu0 %v2636
    %2758 = vmatpush1.bf16.msra.mxu0 %v2635
    %2759 = vmatprep.subr.bf16.mxu0 %v2644
    %2760 = vmatpush1.bf16.msra.mxu0 %v2643
    %2761 = vmatprep.subr.bf16.mxu0 %v2652
    %2762 = vmatpush1.bf16.msra.mxu0 %v2651
    %2763 = vmatprep.subr.bf16.mxu0 %v2660
    %2764 = vmatpush1.bf16.msra.mxu0 %v2659
    %2765 = vmatprep.subr.bf16.mxu0 %v2668
    %2766 = vmatpush1.bf16.msra.mxu0 %v2667
    %2767 = vmatprep.subr.bf16.mxu0 %v2676
    %2768 = vmatpush1.bf16.msra.mxu0 %v2675
    %2769 = vmatprep.subr.bf16.mxu0 %v2684
    %2770 = vmatpush1.bf16.msra.mxu0 %v2683
    %2771 = vmatprep.subr.bf16.mxu0 %v2692
    %2772 = vmatpush1.bf16.msra.mxu0 %v2691
    %2773 = vmatprep.subr.bf16.mxu0 %v2727
    %2774 = vmatpush1.bf16.msra.mxu0 %v2724
    %2775 = vmatprep.subr.bf16.mxu0 0
    %2776 = vmatpush1.bf16.msra.mxu0 0
    %2777 = vmatprep.subr.bf16.mxu0 0
    %2778 = vmatpush1.bf16.msra.mxu0 0
    %2779 = vmatprep.mubr.bf16.mxu0 %v2720
    %2780 = vmatmul.mubr.bf16.gmra.mrb[0].mxu0 %v2715
    %v2781 = vpop.f32.mrb[0].mxu0
    %v2782 = vadd.f32 %v2710, %v2781
    %v2783 = vpop.f32.mrb[0].mxu0
    %v2784 = vadd.f32 %v2710, %v2783
    %v2785 = vpop.f32.mrb[0].mxu0
    %v2786 = vpop.f32.mrb[0].mxu0
    %2787 = vdwg.mxu0
    %2788 = vmatprep.subr.bf16.mxu0 %v2598
    %2789 = vmatpush1.bf16.msra.mxu0 %v2597
    %2790 = vmatprep.subr.bf16.mxu0 %v2606
    %2791 = vmatpush1.bf16.msra.mxu0 %v2605
    %2792 = vmatprep.subr.bf16.mxu0 %v2614
    %2793 = vmatpush1.bf16.msra.mxu0 %v2613
    %2794 = vmatprep.subr.bf16.mxu0 %v2622
    %2795 = vmatpush1.bf16.msra.mxu0 %v2621
    %2796 = vmatprep.subr.bf16.mxu0 %v2630
    %2797 = vmatpush1.bf16.msra.mxu0 %v2629
    %2798 = vmatprep.subr.bf16.mxu0 %v2638
    %2799 = vmatpush1.bf16.msra.mxu0 %v2637
    %2800 = vmatprep.subr.bf16.mxu0 %v2646
    %2801 = vmatpush1.bf16.msra.mxu0 %v2645
    %2802 = vmatprep.subr.bf16.mxu0 %v2654
    %2803 = vmatpush1.bf16.msra.mxu0 %v2653
    %2804 = vmatprep.subr.bf16.mxu0 %v2662
    %2805 = vmatpush1.bf16.msra.mxu0 %v2661
    %2806 = vmatprep.subr.bf16.mxu0 %v2670
    %2807 = vmatpush1.bf16.msra.mxu0 %v2669
    %2808 = vmatprep.subr.bf16.mxu0 %v2678
    %2809 = vmatpush1.bf16.msra.mxu0 %v2677
    %2810 = vmatprep.subr.bf16.mxu0 %v2686
    %2811 = vmatpush1.bf16.msra.mxu0 %v2685
    %2812 = vmatprep.subr.bf16.mxu0 %v2694
    %2813 = vmatpush1.bf16.msra.mxu0 %v2693
    %2814 = vmatprep.subr.bf16.mxu0 %v2733
    %2815 = vmatpush1.bf16.msra.mxu0 %v2730
    %2816 = vmatprep.subr.bf16.mxu0 0
    %2817 = vmatpush1.bf16.msra.mxu0 0
    %2818 = vmatprep.subr.bf16.mxu0 0
    %2819 = vmatpush1.bf16.msra.mxu0 0
    %2820 = vmatprep.mubr.bf16.mxu0 %v2720
    %2821 = vmatmul.mubr.bf16.gmra.mrb[0].mxu0 %v2715
    %v2822 = vpop.f32.mrb[0].mxu0
    %v2823 = vadd.f32 %v2710, %v2822
    %v2824 = vpop.f32.mrb[0].mxu0
    %v2825 = vadd.f32 %v2710, %v2824
    %v2826 = vpop.f32.mrb[0].mxu0
    %v2827 = vpop.f32.mrb[0].mxu0
    %2828 = vdwg.mxu0
    %2829 = vmatprep.subr.bf16.mxu0 %v2600
    %2830 = vmatpush1.bf16.msra.mxu0 %v2599
    %2831 = vmatprep.subr.bf16.mxu0 %v2608
    %2832 = vmatpush1.bf16.msra.mxu0 %v2607
    %2833 = vmatprep.subr.bf16.mxu0 %v2616
    %2834 = vmatpush1.bf16.msra.mxu0 %v2615
    %2835 = vmatprep.subr.bf16.mxu0 %v2624
    %2836 = vmatpush1.bf16.msra.mxu0 %v2623
    %2837 = vmatprep.subr.bf16.mxu0 %v2632
    %2838 = vmatpush1.bf16.msra.mxu0 %v2631
    %2839 = vmatprep.subr.bf16.mxu0 %v2640
    %2840 = vmatpush1.bf16.msra.mxu0 %v2639
    %2841 = vmatprep.subr.bf16.mxu0 %v2648
    %2842 = vmatpush1.bf16.msra.mxu0 %v2647
    %2843 = vmatprep.subr.bf16.mxu0 %v2656
    %2844 = vmatpush1.bf16.msra.mxu0 %v2655
    %2845 = vmatprep.subr.bf16.mxu0 %v2664
    %2846 = vmatpush1.bf16.msra.mxu0 %v2663
    %2847 = vmatprep.subr.bf16.mxu0 %v2672
    %2848 = vmatpush1.bf16.msra.mxu0 %v2671
    %2849 = vmatprep.subr.bf16.mxu0 %v2680
    %2850 = vmatpush1.bf16.msra.mxu0 %v2679
    %2851 = vmatprep.subr.bf16.mxu0 %v2688
    %2852 = vmatpush1.bf16.msra.mxu0 %v2687
    %2853 = vmatprep.subr.bf16.mxu0 %v2696
    %2854 = vmatpush1.bf16.msra.mxu0 %v2695
    %2855 = vmatprep.subr.bf16.mxu0 %v2739
    %2856 = vmatpush1.bf16.msra.mxu0 %v2736
    %2857 = vmatprep.subr.bf16.mxu0 0
    %2858 = vmatpush1.bf16.msra.mxu0 0
    %2859 = vmatprep.subr.bf16.mxu0 0
    %2860 = vmatpush1.bf16.msra.mxu0 0
    %2861 = vmatprep.mubr.bf16.mxu0 %v2720
    %2862 = vmatmul.mubr.bf16.gmra.mrb[0].mxu0 %v2715
    %v2863 = vpop.f32.mrb[0].mxu0
    %v2864 = vadd.f32 %v2710, %v2863
    %v2865 = vpop.f32.mrb[0].mxu0
    %v2866 = vadd.f32 %v2710, %v2865
    %v2867 = vpop.f32.mrb[0].mxu0
    %v2868 = vpop.f32.mrb[0].mxu0
    %2869 = vdwg.mxu0
    %2870 = vmatprep.subr.bf16.mxu0 %v2602
    %2871 = vmatpush1.bf16.msra.mxu0 %v2601
    %2872 = vmatprep.subr.bf16.mxu0 %v2610
    %2873 = vmatpush1.bf16.msra.mxu0 %v2609
    %2874 = vmatprep.subr.bf16.mxu0 %v2618
    %2875 = vmatpush1.bf16.msra.mxu0 %v2617
    %2876 = vmatprep.subr.bf16.mxu0 %v2626
    %2877 = vmatpush1.bf16.msra.mxu0 %v2625
    %2878 = vmatprep.subr.bf16.mxu0 %v2634
    %2879 = vmatpush1.bf16.msra.mxu0 %v2633
    %2880 = vmatprep.subr.bf16.mxu0 %v2642
    %2881 = vmatpush1.bf16.msra.mxu0 %v2641
    %2882 = vmatprep.subr.bf16.mxu0 %v2650
    %2883 = vmatpush1.bf16.msra.mxu0 %v2649
    %2884 = vmatprep.subr.bf16.mxu0 %v2658
    %2885 = vmatpush1.bf16.msra.mxu0 %v2657
    %2886 = vmatprep.subr.bf16.mxu0 %v2666
    %2887 = vmatpush1.bf16.msra.mxu0 %v2665
    %2888 = vmatprep.subr.bf16.mxu0 %v2674
    %2889 = vmatpush1.bf16.msra.mxu0 %v2673
    %2890 = vmatprep.subr.bf16.mxu0 %v2682
    %2891 = vmatpush1.bf16.msra.mxu0 %v2681
    %2892 = vmatprep.subr.bf16.mxu0 %v2690
    %2893 = vmatpush1.bf16.msra.mxu0 %v2689
    %2894 = vmatprep.subr.bf16.mxu0 %v2698
    %2895 = vmatpush1.bf16.msra.mxu0 %v2697
    %2896 = vmatprep.subr.bf16.mxu0 %v2745
    %2897 = vmatpush1.bf16.msra.mxu0 %v2742
    %2898 = vmatprep.subr.bf16.mxu0 0
    %2899 = vmatpush1.bf16.msra.mxu0 0
    %2900 = vmatprep.subr.bf16.mxu0 0
    %2901 = vmatpush1.bf16.msra.mxu0 0
    %2902 = vmatprep.mubr.bf16.mxu0 %v2720
    %2903 = vmatmul.mubr.bf16.gmra.mrb[0].mxu0 %v2715
    %v2904 = vpop.f32.mrb[0].mxu0
    %v2905 = vadd.f32 %v2710, %v2904
    %v2906 = vpop.f32.mrb[0].mxu0
    %v2907 = vadd.f32 %v2710, %v2906
    %v2908 = vpop.f32.mrb[0].mxu0
    %v2909 = vpop.f32.mrb[0].mxu0
    %2910 = vdwg.mxu0
    %v2911 = vadd.f32 %v2782, %v2784
    %v2912 = vadd.f32 %v2911, %v2823
    %v2913 = vadd.f32 %v2912, %v2825
    %2914 = vadd.xlane.f32.xlu0 %v2913
    %v2915 = vpop.xlane.xlu0 %2914
    %v2916 = vmul.f32 %v2782, %v2782
    %v2917 = vmul.f32 %v2784, %v2784
    %v2918 = vmul.f32 %v2823, %v2823
    %v2919 = vmul.f32 %v2825, %v2825
    %v2920 = vadd.f32 %v2916, %v2917
    %v2921 = vadd.f32 %v2920, %v2918
    %v2922 = vadd.f32 %v2921, %v2919
    %2923 = vadd.xlane.f32.xlu0 %v2922
    %v2924 = vpop.xlane.xlu0 %2923
    %v2925 = vmul.f32 %v2915, %v138
    %vm2926 = vcmask 39968
    %v2927 = vsel %vm2926, %v2925, 0.0
    %v2928 = vrot.slane %v2927, 4
    %v2929 = vadd.f32 %v2927, %v2928
    %v2930 = vrot.slane %v2929, 2
    %v2931 = vadd.f32 %v2929, %v2930
    %v2932 = vrot.slane %v2931, 1
    %v2933 = vadd.f32 %v2931, %v2932
    %v2934 = vmul.f32 %v138, %v2933
    %v2935 = vadd.f32 %v2934, 0.0
    %v2936 = vmul.f32 %v2924, %v138
    %v2937 = vsel %vm2926, %v2936, 0.0
    %v2938 = vrot.slane %v2937, 4
    %v2939 = vadd.f32 %v2937, %v2938
    %v2940 = vrot.slane %v2939, 2
    %v2941 = vadd.f32 %v2939, %v2940
    %v2942 = vrot.slane %v2941, 1
    %v2943 = vadd.f32 %v2941, %v2942
    %v2944 = vmul.f32 %v138, %v2943
    %v2945 = vadd.f32 %v2944, 0.0
    %vm2946 = vcmask 48168
    %v2947 = vsel %vm2946, %v2925, 0.0
    %v2948 = vrot.slane %v2947, 4
    %v2949 = vadd.f32 %v2947, %v2948
    %v2950 = vrot.slane %v2949, 2
    %v2951 = vadd.f32 %v2949, %v2950
    %v2952 = vrot.slane %v2951, 1
    %v2953 = vadd.f32 %v2951, %v2952
    %v2954 = vmul.f32 %v138, %v2953
    %2956 = vrot.lane.b32.xlu0 %v2954, 127
    %v2957 = vpop.permute.xlu0 %2956
    %v2959 = vadd.f32 %v2935, %v2957
    %v2960 = vsel %vm2946, %v2936, 0.0
    %v2961 = vrot.slane %v2960, 4
    %v2962 = vadd.f32 %v2960, %v2961
    %v2963 = vrot.slane %v2962, 2
    %v2964 = vadd.f32 %v2962, %v2963
    %v2965 = vrot.slane %v2964, 1
    %v2966 = vadd.f32 %v2964, %v2965
    %v2967 = vmul.f32 %v138, %v2966
    %2969 = vrot.lane.b32.xlu0 %v2967, 127
    %v2970 = vpop.permute.xlu0 %2969
    %v2972 = vadd.f32 %v2945, %v2970
    %v2973 = vmul.f32 %v2959, 0.00048828125
    %v2974 = vmul.f32 %v2972, 0.00048828125
    %v2975 = vmul.f32 %v2973, %v2973
    %v2976 = vsub.f32 %v2974, %v2975
    %v2977 = vadd.f32 %v2976, 1e-05
    %v2978 = vrsqrt.pop %v2977
    %2980 = vset.pattern.permute.xlu0 4
    %2981 = vperm.xlu0 %2980, %v2973
    %v2982 = vpop.permute.xlu0 %2981
    %v2984 = vsub.f32 %v2782, %v2982
    %v2985 = vsub.f32 %v2784, %v2982
    %v2986 = vsub.f32 %v2823, %v2982
    %v2987 = vsub.f32 %v2825, %v2982
    %2988 = vrot.lane.b32.xlu0 %v138, 4
    %v2989 = vpop.permute.xlu0 %2988
    %v2991 = vmul.f32 %v2978, %v2989
    %2993 = vset.pattern.permute.xlu0 4
    %2994 = vperm.xlu0 %2993, %v2991
    %v2995 = vpop.permute.xlu0 %2994
    %v2997 = vmul.f32 %v2984, %v2995
    %v2998 = vmul.f32 %v2985, %v2995
    %v2999 = vmul.f32 %v2986, %v2995
    %v3000 = vmul.f32 %v2987, %v2995
    %3001 = vset.pattern.permute.xlu0 1
    %3002 = vperm.xlu0 %3001, %v138
    %v3003 = vpop.permute.xlu0 %3002
    %v3005 = vadd.f32 %v2997, %v3003
    %v3006 = vadd.f32 %v2998, %v3003
    %v3007 = vadd.f32 %v2999, %v3003
    %v3008 = vadd.f32 %v3000, %v3003
    %v3009 = vadd.f32 %v2864, %v2866
    %v3010 = vadd.f32 %v3009, %v2905
    %v3011 = vadd.f32 %v3010, %v2907
    %3012 = vadd.xlane.f32.xlu0 %v3011
    %v3013 = vpop.xlane.xlu0 %3012
    %v3014 = vmul.f32 %v2864, %v2864
    %v3015 = vmul.f32 %v2866, %v2866
    %v3016 = vmul.f32 %v2905, %v2905
    %v3017 = vmul.f32 %v2907, %v2907
    %v3018 = vadd.f32 %v3014, %v3015
    %v3019 = vadd.f32 %v3018, %v3016
    %v3020 = vadd.f32 %v3019, %v3017
    %3021 = vadd.xlane.f32.xlu0 %v3020
    %v3022 = vpop.xlane.xlu0 %3021
    %v3023 = vmul.f32 %v3013, %v138
    %v3024 = vsel %vm2926, %v3023, 0.0
    %v3025 = vrot.slane %v3024, 4
    %v3026 = vadd.f32 %v3024, %v3025
    %v3027 = vrot.slane %v3026, 2
    %v3028 = vadd.f32 %v3026, %v3027
    %v3029 = vrot.slane %v3028, 1
    %v3030 = vadd.f32 %v3028, %v3029
    %v3031 = vmul.f32 %v138, %v3030
    %v3032 = vadd.f32 %v3031, 0.0
    %v3033 = vmul.f32 %v3022, %v138
    %v3034 = vsel %vm2926, %v3033, 0.0
    %v3035 = vrot.slane %v3034, 4
    %v3036 = vadd.f32 %v3034, %v3035
    %v3037 = vrot.slane %v3036, 2
    %v3038 = vadd.f32 %v3036, %v3037
    %v3039 = vrot.slane %v3038, 1
    %v3040 = vadd.f32 %v3038, %v3039
    %v3041 = vmul.f32 %v138, %v3040
    %v3042 = vadd.f32 %v3041, 0.0
    %v3043 = vsel %vm2946, %v3023, 0.0
    %v3044 = vrot.slane %v3043, 4
    %v3045 = vadd.f32 %v3043, %v3044
    %v3046 = vrot.slane %v3045, 2
    %v3047 = vadd.f32 %v3045, %v3046
    %v3048 = vrot.slane %v3047, 1
    %v3049 = vadd.f32 %v3047, %v3048
    %v3050 = vmul.f32 %v138, %v3049
    %3052 = vrot.lane.b32.xlu0 %v3050, 127
    %v3053 = vpop.permute.xlu0 %3052
    %v3055 = vadd.f32 %v3032, %v3053
    %v3056 = vsel %vm2946, %v3033, 0.0
    %v3057 = vrot.slane %v3056, 4
    %v3058 = vadd.f32 %v3056, %v3057
    %v3059 = vrot.slane %v3058, 2
    %v3060 = vadd.f32 %v3058, %v3059
    %v3061 = vrot.slane %v3060, 1
    %v3062 = vadd.f32 %v3060, %v3061
    %v3063 = vmul.f32 %v138, %v3062
    %3065 = vrot.lane.b32.xlu0 %v3063, 127
    %v3066 = vpop.permute.xlu0 %3065
    %v3068 = vadd.f32 %v3042, %v3066
    %v3069 = vmul.f32 %v3055, 0.00048828125
    %v3070 = vmul.f32 %v3068, 0.00048828125
    %v3071 = vmul.f32 %v3069, %v3069
    %v3072 = vsub.f32 %v3070, %v3071
    %v3073 = vadd.f32 %v3072, 1e-05
    %v3074 = vrsqrt.pop %v3073
    %3076 = vset.pattern.permute.xlu0 4
    %3077 = vperm.xlu0 %3076, %v3069
    %v3078 = vpop.permute.xlu0 %3077
    %v3080 = vsub.f32 %v2864, %v3078
    %v3081 = vsub.f32 %v2866, %v3078
    %v3082 = vsub.f32 %v2905, %v3078
    %v3083 = vsub.f32 %v2907, %v3078
    %v3084 = vmul.f32 %v3074, %v2989
    %3086 = vset.pattern.permute.xlu0 4
    %3087 = vperm.xlu0 %3086, %v3084
    %v3088 = vpop.permute.xlu0 %3087
    %v3090 = vmul.f32 %v3080, %v3088
    %v3091 = vmul.f32 %v3081, %v3088
    %v3092 = vmul.f32 %v3082, %v3088
    %v3093 = vmul.f32 %v3083, %v3088
    %v3094 = vadd.f32 %v3090, %v3003
    %v3095 = vadd.f32 %v3091, %v3003
    %v3096 = vadd.f32 %v3092, %v3003
    %v3097 = vadd.f32 %v3093, %v3003
    %v3098 = vxor.u32 %v3005, 2147483648
    %v3099 = vxor.u32 %v3006, 2147483648
    %v3100 = vxor.u32 %v3007, 2147483648
    %v3101 = vxor.u32 %v3008, 2147483648
    %v3102 = vxor.u32 %v3094, 2147483648
    %v3103 = vxor.u32 %v3095, 2147483648
    %v3104 = vxor.u32 %v3096, 2147483648
    %v3105 = vxor.u32 %v3097, 2147483648
    %v3106 = vmul.f32 %v3098, 1.442695
    %v3107 = vpow.pop %v3106
    %v3108 = vmul.f32 %v3099, 1.442695
    %v3109 = vpow.pop %v3108
    %v3110 = vmul.f32 %v3100, 1.442695
    %v3111 = vpow.pop %v3110
    %v3112 = vmul.f32 %v3101, 1.442695
    %v3113 = vpow.pop %v3112
    %v3114 = vmul.f32 %v3102, 1.442695
    %v3115 = vpow.pop %v3114
    %v3116 = vmul.f32 %v3103, 1.442695
    %v3117 = vpow.pop %v3116
    %v3118 = vmul.f32 %v3104, 1.442695
    %v3119 = vpow.pop %v3118
    %v3120 = vmul.f32 %v3105, 1.442695
    %v3121 = vpow.pop %v3120
    %v3122 = vadd.f32 %v3107, 1.0
    %v3123 = vadd.f32 %v3109, 1.0
    %v3124 = vadd.f32 %v3111, 1.0
    %v3125 = vadd.f32 %v3113, 1.0
    %v3126 = vadd.f32 %v3115, 1.0
    %v3127 = vadd.f32 %v3117, 1.0
    %v3128 = vadd.f32 %v3119, 1.0
    %v3129 = vadd.f32 %v3121, 1.0
    %v3130 = vrcp.pop %v3122
    %v3131 = vmul.f32 1.0, %v3130
    %v3132 = vrcp.pop %v3123
    %v3133 = vmul.f32 1.0, %v3132
    %v3134 = vrcp.pop %v3124
    %v3135 = vmul.f32 1.0, %v3134
    %v3136 = vrcp.pop %v3125
    %v3137 = vmul.f32 1.0, %v3136
    %v3138 = vrcp.pop %v3126
    %v3139 = vmul.f32 1.0, %v3138
    %v3140 = vrcp.pop %v3127
    %v3141 = vmul.f32 1.0, %v3140
    %v3142 = vrcp.pop %v3128
    %v3143 = vmul.f32 1.0, %v3142
    %v3144 = vrcp.pop %v3129
    %v3145 = vmul.f32 1.0, %v3144
    %v3146 = vmul.f32 %v3005, %v3131
    %v3147 = vmul.f32 %v3006, %v3133
    %v3148 = vmul.f32 %v3007, %v3135
    %v3149 = vmul.f32 %v3008, %v3137
    %v3150 = vmul.f32 %v3094, %v3139
    %v3151 = vmul.f32 %v3095, %v3141
    %v3152 = vmul.f32 %v3096, %v3143
    %v3153 = vmul.f32 %v3097, %v3145
    %3154 = vrot.lane.b32.xlu0 %v3146, 73
    %v3155 = vpop.permute.xlu0 %3154
    %3156 = vrot.lane.b32.xlu0 %v3147, 73
    %v3157 = vpop.permute.xlu0 %3156
    %3158 = vrot.lane.b32.xlu0 %v3148, 73
    %v3159 = vpop.permute.xlu0 %3158
    %3160 = vrot.lane.b32.xlu0 %v3149, 73
    %v3161 = vpop.permute.xlu0 %3160
    %3162 = vrot.lane.b32.xlu0 %v3150, 73
    %v3163 = vpop.permute.xlu0 %3162
    %3164 = vrot.lane.b32.xlu0 %v3151, 73
    %v3165 = vpop.permute.xlu0 %3164
    %3166 = vrot.lane.b32.xlu0 %v3152, 73
    %v3167 = vpop.permute.xlu0 %3166
    %3168 = vrot.lane.b32.xlu0 %v3153, 73
    %v3169 = vpop.permute.xlu0 %3168
    %v3170 = vsel %vm401, %v3167, %v3169
    %v3171 = vsel %vm401, %v3165, %v3167
    %v3172 = vsel %vm401, %v3163, %v3165
    %v3173 = vsel %vm401, %v3161, %v3163
    %v3174 = vsel %vm401, %v3159, %v3161
    %v3175 = vsel %vm401, %v3157, %v3159
    %v3176 = vsel %vm401, %v3155, %v3157
    %v3177 = vsel %vm401, %v3169, %v3155
    %v3178 = vmul.f32 %v3177, %v413
    %v3179 = vmul.f32 %v3176, %v417
    %v3180 = vmul.f32 %v3175, %v421
    %v3181 = vmul.f32 %v3174, %v425
    %v3182 = vmul.f32 %v3173, %v429
    %v3183 = vmul.f32 %v3172, %v433
    %v3184 = vmul.f32 %v3171, %v437
    %v3185 = vmul.f32 %v3170, %v441
    %v3186 = vpack.c.bf16 %v3178, %v3178
    %v3187 = vpack.c.bf16 %v3179, %v3179
    %v3188 = vpack.c.bf16 %v3180, %v3180
    %v3189 = vpack.c.bf16 %v3181, %v3181
    %v3190 = vpack.c.bf16 %v3182, %v3182
    %v3191 = vpack.c.bf16 %v3183, %v3183
    %v3192 = vpack.c.bf16 %v3184, %v3184
    %v3193 = vpack.c.bf16 %v3185, %v3185
    %3194 = vst [vmem:[#allocation2] sm:$0xf] %v3186
    %3195 = vst [vmem:[#allocation2 + $0x8] sm:$0xf] %v3187
    %3196 = vst [vmem:[#allocation2 + $0x10] sm:$0xf] %v3188
    %3197 = vst [vmem:[#allocation2 + $0x18] sm:$0xf] %v3189
    %3198 = vst [vmem:[#allocation2 + $0x20] sm:$0xf] %v3190
    %3199 = vst [vmem:[#allocation2 + $0x28] sm:$0xf] %v3191
    %3200 = vst [vmem:[#allocation2 + $0x30] sm:$0xf] %v3192
    %3201 = vst [vmem:[#allocation2 + $0x38] sm:$0xf] %v3193
    %3202 = vrot.lane.b32.xlu0 %v3146, 72
    %v3203 = vpop.permute.xlu0 %3202
    %3204 = vrot.lane.b32.xlu0 %v3147, 72
    %v3205 = vpop.permute.xlu0 %3204
    %3206 = vrot.lane.b32.xlu0 %v3148, 72
    %v3207 = vpop.permute.xlu0 %3206
    %3208 = vrot.lane.b32.xlu0 %v3149, 72
    %v3209 = vpop.permute.xlu0 %3208
    %3210 = vrot.lane.b32.xlu0 %v3150, 72
    %v3211 = vpop.permute.xlu0 %3210
    %3212 = vrot.lane.b32.xlu0 %v3151, 72
    %v3213 = vpop.permute.xlu0 %3212
    %3214 = vrot.lane.b32.xlu0 %v3152, 72
    %v3215 = vpop.permute.xlu0 %3214
    %3216 = vrot.lane.b32.xlu0 %v3153, 72
    %v3217 = vpop.permute.xlu0 %3216
    %v3218 = vsel %vm482, %v3215, %v3217
    %v3219 = vsel %vm482, %v3213, %v3215
    %v3220 = vsel %vm482, %v3211, %v3213
    %v3221 = vsel %vm482, %v3209, %v3211
    %v3222 = vsel %vm482, %v3207, %v3209
    %v3223 = vsel %vm482, %v3205, %v3207
    %v3224 = vsel %vm482, %v3203, %v3205
    %v3225 = vsel %vm482, %v3217, %v3203
    %v3226 = vmul.f32 %v3225, %v494
    %v3227 = vmul.f32 %v3224, %v498
    %v3228 = vmul.f32 %v3223, %v502
    %v3229 = vmul.f32 %v3222, %v506
    %v3230 = vmul.f32 %v3221, %v510
    %v3231 = vmul.f32 %v3220, %v514
    %v3232 = vmul.f32 %v3219, %v518
    %v3233 = vmul.f32 %v3218, %v522
    %v3234 = vpack.c.bf16 %v3226, %v3226
    %v3235 = vpack.c.bf16 %v3227, %v3227
    %v3236 = vpack.c.bf16 %v3228, %v3228
    %v3237 = vpack.c.bf16 %v3229, %v3229
    %v3238 = vpack.c.bf16 %v3230, %v3230
    %v3239 = vpack.c.bf16 %v3231, %v3231
    %v3240 = vpack.c.bf16 %v3232, %v3232
    %v3241 = vpack.c.bf16 %v3233, %v3233
    %v3250 = vrot.slane %v3234, 4
    %v3251 = vrot.slane %v3235, 4
    %v3252 = vrot.slane %v3236, 4
    %v3253 = vrot.slane %v3237, 4
    %v3254 = vrot.slane %v3238, 4
    %v3255 = vrot.slane %v3239, 4
    %v3256 = vrot.slane %v3240, 4
    %v3257 = vrot.slane %v3241, 4
    %3266 = vst [vmem:[#allocation2] sm:$0xf0] %v3250
    %3267 = vst [vmem:[#allocation2 + $0x8] sm:$0xf0] %v3251
    %3268 = vst [vmem:[#allocation2 + $0x10] sm:$0xf0] %v3252
    %3269 = vst [vmem:[#allocation2 + $0x18] sm:$0xf0] %v3253
    %3270 = vst [vmem:[#allocation2 + $0x20] sm:$0xf0] %v3254
    %3271 = vst [vmem:[#allocation2 + $0x28] sm:$0xf0] %v3255
    %3272 = vst [vmem:[#allocation2 + $0x30] sm:$0xf0] %v3256
    %3273 = vst [vmem:[#allocation2 + $0x38] sm:$0xf0] %v3257
    %3274 = vrot.lane.b32.xlu0 %v3146, 71
    %v3275 = vpop.permute.xlu0 %3274
    %3276 = vrot.lane.b32.xlu0 %v3147, 71
    %v3277 = vpop.permute.xlu0 %3276
    %3278 = vrot.lane.b32.xlu0 %v3148, 71
    %v3279 = vpop.permute.xlu0 %3278
    %3280 = vrot.lane.b32.xlu0 %v3149, 71
    %v3281 = vpop.permute.xlu0 %3280
    %3282 = vrot.lane.b32.xlu0 %v3150, 71
    %v3283 = vpop.permute.xlu0 %3282
    %3284 = vrot.lane.b32.xlu0 %v3151, 71
    %v3285 = vpop.permute.xlu0 %3284
    %3286 = vrot.lane.b32.xlu0 %v3152, 71
    %v3287 = vpop.permute.xlu0 %3286
    %3288 = vrot.lane.b32.xlu0 %v3153, 71
    %v3289 = vpop.permute.xlu0 %3288
    %v3290 = vsel %vm587, %v3287, %v3289
    %v3291 = vsel %vm587, %v3285, %v3287
    %v3292 = vsel %vm587, %v3283, %v3285
    %v3293 = vsel %vm587, %v3281, %v3283
    %v3294 = vsel %vm587, %v3279, %v3281
    %v3295 = vsel %vm587, %v3277, %v3279
    %v3296 = vsel %vm587, %v3275, %v3277
    %v3297 = vsel %vm587, %v3289, %v3275
    %v3298 = vmul.f32 %v3297, %v599
    %v3299 = vmul.f32 %v3296, %v603
    %v3300 = vmul.f32 %v3295, %v607
    %v3301 = vmul.f32 %v3294, %v611
    %v3302 = vmul.f32 %v3293, %v615
    %v3303 = vmul.f32 %v3292, %v619
    %v3304 = vmul.f32 %v3291, %v623
    %v3305 = vmul.f32 %v3290, %v627
    %v3306 = vpack.c.bf16 %v3298, %v3298
    %v3307 = vpack.c.bf16 %v3299, %v3299
    %v3308 = vpack.c.bf16 %v3300, %v3300
    %v3309 = vpack.c.bf16 %v3301, %v3301
    %v3310 = vpack.c.bf16 %v3302, %v3302
    %v3311 = vpack.c.bf16 %v3303, %v3303
    %v3312 = vpack.c.bf16 %v3304, %v3304
    %v3313 = vpack.c.bf16 %v3305, %v3305
    %3314 = vst [vmem:[#allocation2 + $0x40] sm:$0xf] %v3306
    %3315 = vst [vmem:[#allocation2 + $0x48] sm:$0xf] %v3307
    %3316 = vst [vmem:[#allocation2 + $0x50] sm:$0xf] %v3308
    %3317 = vst [vmem:[#allocation2 + $0x58] sm:$0xf] %v3309
    %3318 = vst [vmem:[#allocation2 + $0x60] sm:$0xf] %v3310
    %3319 = vst [vmem:[#allocation2 + $0x68] sm:$0xf] %v3311
    %3320 = vst [vmem:[#allocation2 + $0x70] sm:$0xf] %v3312
    %3321 = vst [vmem:[#allocation2 + $0x78] sm:$0xf] %v3313
    %3322 = vrot.lane.b32.xlu0 %v3146, 65
    %v3323 = vpop.permute.xlu0 %3322
    %3324 = vrot.lane.b32.xlu0 %v3147, 65
    %v3325 = vpop.permute.xlu0 %3324
    %3326 = vrot.lane.b32.xlu0 %v3148, 65
    %v3327 = vpop.permute.xlu0 %3326
    %3328 = vrot.lane.b32.xlu0 %v3149, 65
    %v3329 = vpop.permute.xlu0 %3328
    %3330 = vrot.lane.b32.xlu0 %v3150, 65
    %v3331 = vpop.permute.xlu0 %3330
    %3332 = vrot.lane.b32.xlu0 %v3151, 65
    %v3333 = vpop.permute.xlu0 %3332
    %3334 = vrot.lane.b32.xlu0 %v3152, 65
    %v3335 = vpop.permute.xlu0 %3334
    %3336 = vrot.lane.b32.xlu0 %v3153, 65
    %v3337 = vpop.permute.xlu0 %3336
    %v3338 = vsel %vm668, %v3335, %v3337
    %v3339 = vsel %vm668, %v3333, %v3335
    %v3340 = vsel %vm668, %v3331, %v3333
    %v3341 = vsel %vm668, %v3329, %v3331
    %v3342 = vsel %vm668, %v3327, %v3329
    %v3343 = vsel %vm668, %v3325, %v3327
    %v3344 = vsel %vm668, %v3323, %v3325
    %v3345 = vsel %vm668, %v3337, %v3323
    %v3346 = vmul.f32 %v3345, %v680
    %v3347 = vmul.f32 %v3344, %v684
    %v3348 = vmul.f32 %v3343, %v688
    %v3349 = vmul.f32 %v3342, %v692
    %v3350 = vmul.f32 %v3341, %v696
    %v3351 = vmul.f32 %v3340, %v700
    %v3352 = vmul.f32 %v3339, %v704
    %v3353 = vmul.f32 %v3338, %v708
    %v3354 = vpack.c.bf16 %v3346, %v3346
    %v3355 = vpack.c.bf16 %v3347, %v3347
    %v3356 = vpack.c.bf16 %v3348, %v3348
    %v3357 = vpack.c.bf16 %v3349, %v3349
    %v3358 = vpack.c.bf16 %v3350, %v3350
    %v3359 = vpack.c.bf16 %v3351, %v3351
    %v3360 = vpack.c.bf16 %v3352, %v3352
    %v3361 = vpack.c.bf16 %v3353, %v3353
    %v3370 = vrot.slane %v3354, 4
    %v3371 = vrot.slane %v3355, 4
    %v3372 = vrot.slane %v3356, 4
    %v3373 = vrot.slane %v3357, 4
    %v3374 = vrot.slane %v3358, 4
    %v3375 = vrot.slane %v3359, 4
    %v3376 = vrot.slane %v3360, 4
    %v3377 = vrot.slane %v3361, 4
    %3386 = vst [vmem:[#allocation2 + $0x40] sm:$0xf0] %v3370
    %3387 = vst [vmem:[#allocation2 + $0x48] sm:$0xf0] %v3371
    %3388 = vst [vmem:[#allocation2 + $0x50] sm:$0xf0] %v3372
    %3389 = vst [vmem:[#allocation2 + $0x58] sm:$0xf0] %v3373
    %3390 = vst [vmem:[#allocation2 + $0x60] sm:$0xf0] %v3374
    %3391 = vst [vmem:[#allocation2 + $0x68] sm:$0xf0] %v3375
    %3392 = vst [vmem:[#allocation2 + $0x70] sm:$0xf0] %v3376
    %3393 = vst [vmem:[#allocation2 + $0x78] sm:$0xf0] %v3377
    %3394 = vrot.lane.b32.xlu0 %v3146, 64
    %v3395 = vpop.permute.xlu0 %3394
    %3396 = vrot.lane.b32.xlu0 %v3147, 64
    %v3397 = vpop.permute.xlu0 %3396
    %3398 = vrot.lane.b32.xlu0 %v3148, 64
    %v3399 = vpop.permute.xlu0 %3398
    %3400 = vrot.lane.b32.xlu0 %v3149, 64
    %v3401 = vpop.permute.xlu0 %3400
    %3402 = vrot.lane.b32.xlu0 %v3150, 64
    %v3403 = vpop.permute.xlu0 %3402
    %3404 = vrot.lane.b32.xlu0 %v3151, 64
    %v3405 = vpop.permute.xlu0 %3404
    %3406 = vrot.lane.b32.xlu0 %v3152, 64
    %v3407 = vpop.permute.xlu0 %3406
    %3408 = vrot.lane.b32.xlu0 %v3153, 64
    %v3409 = vpop.permute.xlu0 %3408
    %v3410 = vsel %vm773, %v3407, %v3409
    %v3411 = vsel %vm773, %v3405, %v3407
    %v3412 = vsel %vm773, %v3403, %v3405
    %v3413 = vsel %vm773, %v3401, %v3403
    %v3414 = vsel %vm773, %v3399, %v3401
    %v3415 = vsel %vm773, %v3397, %v3399
    %v3416 = vsel %vm773, %v3395, %v3397
    %v3417 = vsel %vm773, %v3409, %v3395
    %v3418 = vmul.f32 %v3417, %v785
    %v3419 = vmul.f32 %v3416, %v789
    %v3420 = vmul.f32 %v3415, %v793
    %v3421 = vmul.f32 %v3414, %v797
    %v3422 = vmul.f32 %v3413, %v801
    %v3423 = vmul.f32 %v3412, %v805
    %v3424 = vmul.f32 %v3411, %v809
    %v3425 = vmul.f32 %v3410, %v813
    %v3426 = vpack.c.bf16 %v3418, %v3418
    %v3427 = vpack.c.bf16 %v3419, %v3419
    %v3428 = vpack.c.bf16 %v3420, %v3420
    %v3429 = vpack.c.bf16 %v3421, %v3421
    %v3430 = vpack.c.bf16 %v3422, %v3422
    %v3431 = vpack.c.bf16 %v3423, %v3423
    %v3432 = vpack.c.bf16 %v3424, %v3424
    %v3433 = vpack.c.bf16 %v3425, %v3425
    %3434 = vst [vmem:[#allocation2 + $0x80] sm:$0xf] %v3426
    %3435 = vst [vmem:[#allocation2 + $0x88] sm:$0xf] %v3427
    %3436 = vst [vmem:[#allocation2 + $0x90] sm:$0xf] %v3428
    %3437 = vst [vmem:[#allocation2 + $0x98] sm:$0xf] %v3429
    %3438 = vst [vmem:[#allocation2 + $0xa0] sm:$0xf] %v3430
    %3439 = vst [vmem:[#allocation2 + $0xa8] sm:$0xf] %v3431
    %3440 = vst [vmem:[#allocation2 + $0xb0] sm:$0xf] %v3432
    %3441 = vst [vmem:[#allocation2 + $0xb8] sm:$0xf] %v3433
    %3442 = vrot.lane.b32.xlu0 %v3146, 63
    %v3443 = vpop.permute.xlu0 %3442
    %3444 = vrot.lane.b32.xlu0 %v3147, 63
    %v3445 = vpop.permute.xlu0 %3444
    %3446 = vrot.lane.b32.xlu0 %v3148, 63
    %v3447 = vpop.permute.xlu0 %3446
    %3448 = vrot.lane.b32.xlu0 %v3149, 63
    %v3449 = vpop.permute.xlu0 %3448
    %3450 = vrot.lane.b32.xlu0 %v3150, 63
    %v3451 = vpop.permute.xlu0 %3450
    %3452 = vrot.lane.b32.xlu0 %v3151, 63
    %v3453 = vpop.permute.xlu0 %3452
    %3454 = vrot.lane.b32.xlu0 %v3152, 63
    %v3455 = vpop.permute.xlu0 %3454
    %3456 = vrot.lane.b32.xlu0 %v3153, 63
    %v3457 = vpop.permute.xlu0 %3456
    %v3458 = vsel %vm854, %v3455, %v3457
    %v3459 = vsel %vm854, %v3453, %v3455
    %v3460 = vsel %vm854, %v3451, %v3453
    %v3461 = vsel %vm854, %v3449, %v3451
    %v3462 = vsel %vm854, %v3447, %v3449
    %v3463 = vsel %vm854, %v3445, %v3447
    %v3464 = vsel %vm854, %v3443, %v3445
    %v3465 = vsel %vm854, %v3457, %v3443
    %v3466 = vmul.f32 %v3465, %v866
    %v3467 = vmul.f32 %v3464, %v870
    %v3468 = vmul.f32 %v3463, %v874
    %v3469 = vmul.f32 %v3462, %v878
    %v3470 = vmul.f32 %v3461, %v882
    %v3471 = vmul.f32 %v3460, %v886
    %v3472 = vmul.f32 %v3459, %v890
    %v3473 = vmul.f32 %v3458, %v894
    %v3474 = vpack.c.bf16 %v3466, %v3466
    %v3475 = vpack.c.bf16 %v3467, %v3467
    %v3476 = vpack.c.bf16 %v3468, %v3468
    %v3477 = vpack.c.bf16 %v3469, %v3469
    %v3478 = vpack.c.bf16 %v3470, %v3470
    %v3479 = vpack.c.bf16 %v3471, %v3471
    %v3480 = vpack.c.bf16 %v3472, %v3472
    %v3481 = vpack.c.bf16 %v3473, %v3473
    %v3490 = vrot.slane %v3474, 4
    %v3491 = vrot.slane %v3475, 4
    %v3492 = vrot.slane %v3476, 4
    %v3493 = vrot.slane %v3477, 4
    %v3494 = vrot.slane %v3478, 4
    %v3495 = vrot.slane %v3479, 4
    %v3496 = vrot.slane %v3480, 4
    %v3497 = vrot.slane %v3481, 4
    %3506 = vst [vmem:[#allocation2 + $0x80] sm:$0xf0] %v3490
    %3507 = vst [vmem:[#allocation2 + $0x88] sm:$0xf0] %v3491
    %3508 = vst [vmem:[#allocation2 + $0x90] sm:$0xf0] %v3492
    %3509 = vst [vmem:[#allocation2 + $0x98] sm:$0xf0] %v3493
    %3510 = vst [vmem:[#allocation2 + $0xa0] sm:$0xf0] %v3494
    %3511 = vst [vmem:[#allocation2 + $0xa8] sm:$0xf0] %v3495
    %3512 = vst [vmem:[#allocation2 + $0xb0] sm:$0xf0] %v3496
    %3513 = vst [vmem:[#allocation2 + $0xb8] sm:$0xf0] %v3497
    %3514 = vrot.lane.b32.xlu0 %v3146, 57
    %v3515 = vpop.permute.xlu0 %3514
    %3516 = vrot.lane.b32.xlu0 %v3147, 57
    %v3517 = vpop.permute.xlu0 %3516
    %3518 = vrot.lane.b32.xlu0 %v3148, 57
    %v3519 = vpop.permute.xlu0 %3518
    %3520 = vrot.lane.b32.xlu0 %v3149, 57
    %v3521 = vpop.permute.xlu0 %3520
    %3522 = vrot.lane.b32.xlu0 %v3150, 57
    %v3523 = vpop.permute.xlu0 %3522
    %3524 = vrot.lane.b32.xlu0 %v3151, 57
    %v3525 = vpop.permute.xlu0 %3524
    %3526 = vrot.lane.b32.xlu0 %v3152, 57
    %v3527 = vpop.permute.xlu0 %3526
    %3528 = vrot.lane.b32.xlu0 %v3153, 57
    %v3529 = vpop.permute.xlu0 %3528
    %v3530 = vsel %vm959, %v3527, %v3529
    %v3531 = vsel %vm959, %v3525, %v3527
    %v3532 = vsel %vm959, %v3523, %v3525
    %v3533 = vsel %vm959, %v3521, %v3523
    %v3534 = vsel %vm959, %v3519, %v3521
    %v3535 = vsel %vm959, %v3517, %v3519
    %v3536 = vsel %vm959, %v3515, %v3517
    %v3537 = vsel %vm959, %v3529, %v3515
    %v3538 = vmul.f32 %v3537, %v971
    %v3539 = vmul.f32 %v3536, %v975
    %v3540 = vmul.f32 %v3535, %v979
    %v3541 = vmul.f32 %v3534, %v983
    %v3542 = vmul.f32 %v3533, %v987
    %v3543 = vmul.f32 %v3532, %v991
    %v3544 = vmul.f32 %v3531, %v995
    %v3545 = vmul.f32 %v3530, %v999
    %v3546 = vpack.c.bf16 %v3538, %v3538
    %v3547 = vpack.c.bf16 %v3539, %v3539
    %v3548 = vpack.c.bf16 %v3540, %v3540
    %v3549 = vpack.c.bf16 %v3541, %v3541
    %v3550 = vpack.c.bf16 %v3542, %v3542
    %v3551 = vpack.c.bf16 %v3543, %v3543
    %v3552 = vpack.c.bf16 %v3544, %v3544
    %v3553 = vpack.c.bf16 %v3545, %v3545
    %3554 = vst [vmem:[#allocation2 + $0xc0] sm:$0xf] %v3546
    %3555 = vst [vmem:[#allocation2 + $0xc8] sm:$0xf] %v3547
    %3556 = vst [vmem:[#allocation2 + $0xd0] sm:$0xf] %v3548
    %3557 = vst [vmem:[#allocation2 + $0xd8] sm:$0xf] %v3549
    %3558 = vst [vmem:[#allocation2 + $0xe0] sm:$0xf] %v3550
    %3559 = vst [vmem:[#allocation2 + $0xe8] sm:$0xf] %v3551
    %3560 = vst [vmem:[#allocation2 + $0xf0] sm:$0xf] %v3552
    %3561 = vst [vmem:[#allocation2 + $0xf8] sm:$0xf] %v3553
    %3562 = vrot.lane.b32.xlu0 %v3146, 56
    %v3563 = vpop.permute.xlu0 %3562
    %3564 = vrot.lane.b32.xlu0 %v3147, 56
    %v3565 = vpop.permute.xlu0 %3564
    %3566 = vrot.lane.b32.xlu0 %v3148, 56
    %v3567 = vpop.permute.xlu0 %3566
    %3568 = vrot.lane.b32.xlu0 %v3149, 56
    %v3569 = vpop.permute.xlu0 %3568
    %3570 = vrot.lane.b32.xlu0 %v3150, 56
    %v3571 = vpop.permute.xlu0 %3570
    %3572 = vrot.lane.b32.xlu0 %v3151, 56
    %v3573 = vpop.permute.xlu0 %3572
    %3574 = vrot.lane.b32.xlu0 %v3152, 56
    %v3575 = vpop.permute.xlu0 %3574
    %3576 = vrot.lane.b32.xlu0 %v3153, 56
    %v3577 = vpop.permute.xlu0 %3576
    %v3578 = vsel %vm1040, %v3575, %v3577
    %v3579 = vsel %vm1040, %v3573, %v3575
    %v3580 = vsel %vm1040, %v3571, %v3573
    %v3581 = vsel %vm1040, %v3569, %v3571
    %v3582 = vsel %vm1040, %v3567, %v3569
    %v3583 = vsel %vm1040, %v3565, %v3567
    %v3584 = vsel %vm1040, %v3563, %v3565
    %v3585 = vsel %vm1040, %v3577, %v3563
    %v3586 = vmul.f32 %v3585, %v1052
    %v3587 = vmul.f32 %v3584, %v1056
    %v3588 = vmul.f32 %v3583, %v1060
    %v3589 = vmul.f32 %v3582, %v1064
    %v3590 = vmul.f32 %v3581, %v1068
    %v3591 = vmul.f32 %v3580, %v1072
    %v3592 = vmul.f32 %v3579, %v1076
    %v3593 = vmul.f32 %v3578, %v1080
    %v3594 = vpack.c.bf16 %v3586, %v3586
    %v3595 = vpack.c.bf16 %v3587, %v3587
    %v3596 = vpack.c.bf16 %v3588, %v3588
    %v3597 = vpack.c.bf16 %v3589, %v3589
    %v3598 = vpack.c.bf16 %v3590, %v3590
    %v3599 = vpack.c.bf16 %v3591, %v3591
    %v3600 = vpack.c.bf16 %v3592, %v3592
    %v3601 = vpack.c.bf16 %v3593, %v3593
    %v3610 = vrot.slane %v3594, 4
    %v3611 = vrot.slane %v3595, 4
    %v3612 = vrot.slane %v3596, 4
    %v3613 = vrot.slane %v3597, 4
    %v3614 = vrot.slane %v3598, 4
    %v3615 = vrot.slane %v3599, 4
    %v3616 = vrot.slane %v3600, 4
    %v3617 = vrot.slane %v3601, 4
    %3626 = vst [vmem:[#allocation2 + $0xc0] sm:$0xf0] %v3610
    %3627 = vst [vmem:[#allocation2 + $0xc8] sm:$0xf0] %v3611
    %3628 = vst [vmem:[#allocation2 + $0xd0] sm:$0xf0] %v3612
    %3629 = vst [vmem:[#allocation2 + $0xd8] sm:$0xf0] %v3613
    %3630 = vst [vmem:[#allocation2 + $0xe0] sm:$0xf0] %v3614
    %3631 = vst [vmem:[#allocation2 + $0xe8] sm:$0xf0] %v3615
    %3632 = vst [vmem:[#allocation2 + $0xf0] sm:$0xf0] %v3616
    %3633 = vst [vmem:[#allocation2 + $0xf8] sm:$0xf0] %v3617
    %3634 = vrot.lane.b32.xlu0 %v3146, 55
    %v3635 = vpop.permute.xlu0 %3634
    %3636 = vrot.lane.b32.xlu0 %v3147, 55
    %v3637 = vpop.permute.xlu0 %3636
    %3638 = vrot.lane.b32.xlu0 %v3148, 55
    %v3639 = vpop.permute.xlu0 %3638
    %3640 = vrot.lane.b32.xlu0 %v3149, 55
    %v3641 = vpop.permute.xlu0 %3640
    %3642 = vrot.lane.b32.xlu0 %v3150, 55
    %v3643 = vpop.permute.xlu0 %3642
    %3644 = vrot.lane.b32.xlu0 %v3151, 55
    %v3645 = vpop.permute.xlu0 %3644
    %3646 = vrot.lane.b32.xlu0 %v3152, 55
    %v3647 = vpop.permute.xlu0 %3646
    %3648 = vrot.lane.b32.xlu0 %v3153, 55
    %v3649 = vpop.permute.xlu0 %3648
    %v3650 = vsel %vm1145, %v3647, %v3649
    %v3651 = vsel %vm1145, %v3645, %v3647
    %v3652 = vsel %vm1145, %v3643, %v3645
    %v3653 = vsel %vm1145, %v3641, %v3643
    %v3654 = vsel %vm1145, %v3639, %v3641
    %v3655 = vsel %vm1145, %v3637, %v3639
    %v3656 = vsel %vm1145, %v3635, %v3637
    %v3657 = vsel %vm1145, %v3649, %v3635
    %v3658 = vmul.f32 %v3657, %v1157
    %v3659 = vmul.f32 %v3656, %v1161
    %v3660 = vmul.f32 %v3655, %v1165
    %v3661 = vmul.f32 %v3654, %v1169
    %v3662 = vmul.f32 %v3653, %v1173
    %v3663 = vmul.f32 %v3652, %v1177
    %v3664 = vmul.f32 %v3651, %v1181
    %v3665 = vmul.f32 %v3650, %v1185
    %v3666 = vpack.c.bf16 %v3658, %v3658
    %v3667 = vpack.c.bf16 %v3659, %v3659
    %v3668 = vpack.c.bf16 %v3660, %v3660
    %v3669 = vpack.c.bf16 %v3661, %v3661
    %v3670 = vpack.c.bf16 %v3662, %v3662
    %v3671 = vpack.c.bf16 %v3663, %v3663
    %v3672 = vpack.c.bf16 %v3664, %v3664
    %v3673 = vpack.c.bf16 %v3665, %v3665
    %3674 = vst [vmem:[#allocation2 + $0x100] sm:$0xf] %v3666
    %3675 = vst [vmem:[#allocation2 + $0x108] sm:$0xf] %v3667
    %3676 = vst [vmem:[#allocation2 + $0x110] sm:$0xf] %v3668
    %3677 = vst [vmem:[#allocation2 + $0x118] sm:$0xf] %v3669
    %3678 = vst [vmem:[#allocation2 + $0x120] sm:$0xf] %v3670
    %3679 = vst [vmem:[#allocation2 + $0x128] sm:$0xf] %v3671
    %3680 = vst [vmem:[#allocation2 + $0x130] sm:$0xf] %v3672
    %3681 = vst [vmem:[#allocation2 + $0x138] sm:$0xf] %v3673
    %3682 = vrot.lane.b32.xlu0 %v3146, 9
    %v3683 = vpop.permute.xlu0 %3682
    %3684 = vrot.lane.b32.xlu0 %v3147, 9
    %v3685 = vpop.permute.xlu0 %3684
    %3686 = vrot.lane.b32.xlu0 %v3148, 9
    %v3687 = vpop.permute.xlu0 %3686
    %3688 = vrot.lane.b32.xlu0 %v3149, 9
    %v3689 = vpop.permute.xlu0 %3688
    %3690 = vrot.lane.b32.xlu0 %v3150, 9
    %v3691 = vpop.permute.xlu0 %3690
    %3692 = vrot.lane.b32.xlu0 %v3151, 9
    %v3693 = vpop.permute.xlu0 %3692
    %3694 = vrot.lane.b32.xlu0 %v3152, 9
    %v3695 = vpop.permute.xlu0 %3694
    %3696 = vrot.lane.b32.xlu0 %v3153, 9
    %v3697 = vpop.permute.xlu0 %3696
    %v3698 = vsel %vm1226, %v3695, %v3697
    %v3699 = vsel %vm1226, %v3693, %v3695
    %v3700 = vsel %vm1226, %v3691, %v3693
    %v3701 = vsel %vm1226, %v3689, %v3691
    %v3702 = vsel %vm1226, %v3687, %v3689
    %v3703 = vsel %vm1226, %v3685, %v3687
    %v3704 = vsel %vm1226, %v3683, %v3685
    %v3705 = vsel %vm1226, %v3697, %v3683
    %v3706 = vmul.f32 %v3705, %v1238
    %v3707 = vmul.f32 %v3704, %v1242
    %v3708 = vmul.f32 %v3703, %v1246
    %v3709 = vmul.f32 %v3702, %v1250
    %v3710 = vmul.f32 %v3701, %v1254
    %v3711 = vmul.f32 %v3700, %v1258
    %v3712 = vmul.f32 %v3699, %v1262
    %v3713 = vmul.f32 %v3698, %v1266
    %v3714 = vpack.c.bf16 %v3706, %v3706
    %v3715 = vpack.c.bf16 %v3707, %v3707
    %v3716 = vpack.c.bf16 %v3708, %v3708
    %v3717 = vpack.c.bf16 %v3709, %v3709
    %v3718 = vpack.c.bf16 %v3710, %v3710
    %v3719 = vpack.c.bf16 %v3711, %v3711
    %v3720 = vpack.c.bf16 %v3712, %v3712
    %v3721 = vpack.c.bf16 %v3713, %v3713
    %v3730 = vrot.slane %v3714, 4
    %v3731 = vrot.slane %v3715, 4
    %v3732 = vrot.slane %v3716, 4
    %v3733 = vrot.slane %v3717, 4
    %v3734 = vrot.slane %v3718, 4
    %v3735 = vrot.slane %v3719, 4
    %v3736 = vrot.slane %v3720, 4
    %v3737 = vrot.slane %v3721, 4
    %3746 = vst [vmem:[#allocation2 + $0x100] sm:$0xf0] %v3730
    %3747 = vst [vmem:[#allocation2 + $0x108] sm:$0xf0] %v3731
    %3748 = vst [vmem:[#allocation2 + $0x110] sm:$0xf0] %v3732
    %3749 = vst [vmem:[#allocation2 + $0x118] sm:$0xf0] %v3733
    %3750 = vst [vmem:[#allocation2 + $0x120] sm:$0xf0] %v3734
    %3751 = vst [vmem:[#allocation2 + $0x128] sm:$0xf0] %v3735
    %3752 = vst [vmem:[#allocation2 + $0x130] sm:$0xf0] %v3736
    %3753 = vst [vmem:[#allocation2 + $0x138] sm:$0xf0] %v3737
    %3754 = vrot.lane.b32.xlu0 %v3146, 8
    %v3755 = vpop.permute.xlu0 %3754
    %3756 = vrot.lane.b32.xlu0 %v3147, 8
    %v3757 = vpop.permute.xlu0 %3756
    %3758 = vrot.lane.b32.xlu0 %v3148, 8
    %v3759 = vpop.permute.xlu0 %3758
    %3760 = vrot.lane.b32.xlu0 %v3149, 8
    %v3761 = vpop.permute.xlu0 %3760
    %3762 = vrot.lane.b32.xlu0 %v3150, 8
    %v3763 = vpop.permute.xlu0 %3762
    %3764 = vrot.lane.b32.xlu0 %v3151, 8
    %v3765 = vpop.permute.xlu0 %3764
    %3766 = vrot.lane.b32.xlu0 %v3152, 8
    %v3767 = vpop.permute.xlu0 %3766
    %3768 = vrot.lane.b32.xlu0 %v3153, 8
    %v3769 = vpop.permute.xlu0 %3768
    %v3770 = vsel %vm1331, %v3767, %v3769
    %v3771 = vsel %vm1331, %v3765, %v3767
    %v3772 = vsel %vm1331, %v3763, %v3765
    %v3773 = vsel %vm1331, %v3761, %v3763
    %v3774 = vsel %vm1331, %v3759, %v3761
    %v3775 = vsel %vm1331, %v3757, %v3759
    %v3776 = vsel %vm1331, %v3755, %v3757
    %v3777 = vsel %vm1331, %v3769, %v3755
    %v3778 = vmul.f32 %v3777, %v1343
    %v3779 = vmul.f32 %v3776, %v1347
    %v3780 = vmul.f32 %v3775, %v1351
    %v3781 = vmul.f32 %v3774, %v1355
    %v3782 = vmul.f32 %v3773, %v1359
    %v3783 = vmul.f32 %v3772, %v1363
    %v3784 = vmul.f32 %v3771, %v1367
    %v3785 = vmul.f32 %v3770, %v1371
    %v3786 = vpack.c.bf16 %v3778, %v3778
    %v3787 = vpack.c.bf16 %v3779, %v3779
    %v3788 = vpack.c.bf16 %v3780, %v3780
    %v3789 = vpack.c.bf16 %v3781, %v3781
    %v3790 = vpack.c.bf16 %v3782, %v3782
    %v3791 = vpack.c.bf16 %v3783, %v3783
    %v3792 = vpack.c.bf16 %v3784, %v3784
    %v3793 = vpack.c.bf16 %v3785, %v3785
    %3794 = vst [vmem:[#allocation2 + $0x140] sm:$0xf] %v3786
    %3795 = vst [vmem:[#allocation2 + $0x148] sm:$0xf] %v3787
    %3796 = vst [vmem:[#allocation2 + $0x150] sm:$0xf] %v3788
    %3797 = vst [vmem:[#allocation2 + $0x158] sm:$0xf] %v3789
    %3798 = vst [vmem:[#allocation2 + $0x160] sm:$0xf] %v3790
    %3799 = vst [vmem:[#allocation2 + $0x168] sm:$0xf] %v3791
    %3800 = vst [vmem:[#allocation2 + $0x170] sm:$0xf] %v3792
    %3801 = vst [vmem:[#allocation2 + $0x178] sm:$0xf] %v3793
    %3802 = vrot.lane.b32.xlu0 %v3146, 7
    %v3803 = vpop.permute.xlu0 %3802
    %3804 = vrot.lane.b32.xlu0 %v3147, 7
    %v3805 = vpop.permute.xlu0 %3804
    %3806 = vrot.lane.b32.xlu0 %v3148, 7
    %v3807 = vpop.permute.xlu0 %3806
    %3808 = vrot.lane.b32.xlu0 %v3149, 7
    %v3809 = vpop.permute.xlu0 %3808
    %3810 = vrot.lane.b32.xlu0 %v3150, 7
    %v3811 = vpop.permute.xlu0 %3810
    %3812 = vrot.lane.b32.xlu0 %v3151, 7
    %v3813 = vpop.permute.xlu0 %3812
    %3814 = vrot.lane.b32.xlu0 %v3152, 7
    %v3815 = vpop.permute.xlu0 %3814
    %3816 = vrot.lane.b32.xlu0 %v3153, 7
    %v3817 = vpop.permute.xlu0 %3816
    %v3818 = vsel %vm1412, %v3815, %v3817
    %v3819 = vsel %vm1412, %v3813, %v3815
    %v3820 = vsel %vm1412, %v3811, %v3813
    %v3821 = vsel %vm1412, %v3809, %v3811
    %v3822 = vsel %vm1412, %v3807, %v3809
    %v3823 = vsel %vm1412, %v3805, %v3807
    %v3824 = vsel %vm1412, %v3803, %v3805
    %v3825 = vsel %vm1412, %v3817, %v3803
    %v3826 = vmul.f32 %v3825, %v1424
    %v3827 = vmul.f32 %v3824, %v1428
    %v3828 = vmul.f32 %v3823, %v1432
    %v3829 = vmul.f32 %v3822, %v1436
    %v3830 = vmul.f32 %v3821, %v1440
    %v3831 = vmul.f32 %v3820, %v1444
    %v3832 = vmul.f32 %v3819, %v1448
    %v3833 = vmul.f32 %v3818, %v1452
    %v3834 = vpack.c.bf16 %v3826, %v3826
    %v3835 = vpack.c.bf16 %v3827, %v3827
    %v3836 = vpack.c.bf16 %v3828, %v3828
    %v3837 = vpack.c.bf16 %v3829, %v3829
    %v3838 = vpack.c.bf16 %v3830, %v3830
    %v3839 = vpack.c.bf16 %v3831, %v3831
    %v3840 = vpack.c.bf16 %v3832, %v3832
    %v3841 = vpack.c.bf16 %v3833, %v3833
    %v3850 = vrot.slane %v3834, 4
    %v3851 = vrot.slane %v3835, 4
    %v3852 = vrot.slane %v3836, 4
    %v3853 = vrot.slane %v3837, 4
    %v3854 = vrot.slane %v3838, 4
    %v3855 = vrot.slane %v3839, 4
    %v3856 = vrot.slane %v3840, 4
    %v3857 = vrot.slane %v3841, 4
    %3866 = vst [vmem:[#allocation2 + $0x140] sm:$0xf0] %v3850
    %3867 = vst [vmem:[#allocation2 + $0x148] sm:$0xf0] %v3851
    %3868 = vst [vmem:[#allocation2 + $0x150] sm:$0xf0] %v3852
    %3869 = vst [vmem:[#allocation2 + $0x158] sm:$0xf0] %v3853
    %3870 = vst [vmem:[#allocation2 + $0x160] sm:$0xf0] %v3854
    %3871 = vst [vmem:[#allocation2 + $0x168] sm:$0xf0] %v3855
    %3872 = vst [vmem:[#allocation2 + $0x170] sm:$0xf0] %v3856
    %3873 = vst [vmem:[#allocation2 + $0x178] sm:$0xf0] %v3857
    %3874 = vrot.lane.b32.xlu0 %v3146, 1
    %v3875 = vpop.permute.xlu0 %3874
    %3876 = vrot.lane.b32.xlu0 %v3147, 1
    %v3877 = vpop.permute.xlu0 %3876
    %3878 = vrot.lane.b32.xlu0 %v3148, 1
    %v3879 = vpop.permute.xlu0 %3878
    %3880 = vrot.lane.b32.xlu0 %v3149, 1
    %v3881 = vpop.permute.xlu0 %3880
    %3882 = vrot.lane.b32.xlu0 %v3150, 1
    %v3883 = vpop.permute.xlu0 %3882
    %3884 = vrot.lane.b32.xlu0 %v3151, 1
    %v3885 = vpop.permute.xlu0 %3884
    %3886 = vrot.lane.b32.xlu0 %v3152, 1
    %v3887 = vpop.permute.xlu0 %3886
    %3888 = vrot.lane.b32.xlu0 %v3153, 1
    %v3889 = vpop.permute.xlu0 %3888
    %v3890 = vsel %vm1517, %v3887, %v3889
    %v3891 = vsel %vm1517, %v3885, %v3887
    %v3892 = vsel %vm1517, %v3883, %v3885
    %v3893 = vsel %vm1517, %v3881, %v3883
    %v3894 = vsel %vm1517, %v3879, %v3881
    %v3895 = vsel %vm1517, %v3877, %v3879
    %v3896 = vsel %vm1517, %v3875, %v3877
    %v3897 = vsel %vm1517, %v3889, %v3875
    %v3898 = vmul.f32 %v3897, %v1529
    %v3899 = vmul.f32 %v3896, %v1533
    %v3900 = vmul.f32 %v3895, %v1537
    %v3901 = vmul.f32 %v3894, %v1541
    %v3902 = vmul.f32 %v3893, %v1545
    %v3903 = vmul.f32 %v3892, %v1549
    %v3904 = vmul.f32 %v3891, %v1553
    %v3905 = vmul.f32 %v3890, %v1557
    %v3906 = vpack.c.bf16 %v3898, %v3898
    %v3907 = vpack.c.bf16 %v3899, %v3899
    %v3908 = vpack.c.bf16 %v3900, %v3900
    %v3909 = vpack.c.bf16 %v3901, %v3901
    %v3910 = vpack.c.bf16 %v3902, %v3902
    %v3911 = vpack.c.bf16 %v3903, %v3903
    %v3912 = vpack.c.bf16 %v3904, %v3904
    %v3913 = vpack.c.bf16 %v3905, %v3905
    %3914 = vst [vmem:[#allocation2 + $0x180] sm:$0xf] %v3906
    %3915 = vst [vmem:[#allocation2 + $0x188] sm:$0xf] %v3907
    %3916 = vst [vmem:[#allocation2 + $0x190] sm:$0xf] %v3908
    %3917 = vst [vmem:[#allocation2 + $0x198] sm:$0xf] %v3909
    %3918 = vst [vmem:[#allocation2 + $0x1a0] sm:$0xf] %v3910
    %3919 = vst [vmem:[#allocation2 + $0x1a8] sm:$0xf] %v3911
    %3920 = vst [vmem:[#allocation2 + $0x1b0] sm:$0xf] %v3912
    %3921 = vst [vmem:[#allocation2 + $0x1b8] sm:$0xf] %v3913
    %v3922 = vpack.c.bf16 %v3146, %v3146
    %v3923 = vpack.c.bf16 %v3147, %v3147
    %v3924 = vpack.c.bf16 %v3148, %v3148
    %v3925 = vpack.c.bf16 %v3149, %v3149
    %v3926 = vpack.c.bf16 %v3150, %v3150
    %v3927 = vpack.c.bf16 %v3151, %v3151
    %v3928 = vpack.c.bf16 %v3152, %v3152
    %v3929 = vpack.c.bf16 %v3153, %v3153
    %v3938 = vrot.slane %v3922, 4
    %v3939 = vrot.slane %v3923, 4
    %v3940 = vrot.slane %v3924, 4
    %v3941 = vrot.slane %v3925, 4
    %v3942 = vrot.slane %v3926, 4
    %v3943 = vrot.slane %v3927, 4
    %v3944 = vrot.slane %v3928, 4
    %v3945 = vrot.slane %v3929, 4
    %3954 = vst [vmem:[#allocation2 + $0x180] sm:$0xf0] %v3938
    %3955 = vst [vmem:[#allocation2 + $0x188] sm:$0xf0] %v3939
    %3956 = vst [vmem:[#allocation2 + $0x190] sm:$0xf0] %v3940
    %3957 = vst [vmem:[#allocation2 + $0x198] sm:$0xf0] %v3941
    %3958 = vst [vmem:[#allocation2 + $0x1a0] sm:$0xf0] %v3942
    %3959 = vst [vmem:[#allocation2 + $0x1a8] sm:$0xf0] %v3943
    %3960 = vst [vmem:[#allocation2 + $0x1b0] sm:$0xf0] %v3944
    %3961 = vst [vmem:[#allocation2 + $0x1b8] sm:$0xf0] %v3945
    %3962 = vrot.lane.b32.xlu0 %v3146, 127
    %v3963 = vpop.permute.xlu0 %3962
    %3964 = vrot.lane.b32.xlu0 %v3147, 127
    %v3965 = vpop.permute.xlu0 %3964
    %3966 = vrot.lane.b32.xlu0 %v3148, 127
    %v3967 = vpop.permute.xlu0 %3966
    %3968 = vrot.lane.b32.xlu0 %v3149, 127
    %v3969 = vpop.permute.xlu0 %3968
    %3970 = vrot.lane.b32.xlu0 %v3150, 127
    %v3971 = vpop.permute.xlu0 %3970
    %3972 = vrot.lane.b32.xlu0 %v3151, 127
    %v3973 = vpop.permute.xlu0 %3972
    %3974 = vrot.lane.b32.xlu0 %v3152, 127
    %v3975 = vpop.permute.xlu0 %3974
    %3976 = vrot.lane.b32.xlu0 %v3153, 127
    %v3977 = vpop.permute.xlu0 %3976
    %v3978 = vsel %vm1638, %v3975, %v3977
    %v3979 = vsel %vm1638, %v3973, %v3975
    %v3980 = vsel %vm1638, %v3971, %v3973
    %v3981 = vsel %vm1638, %v3969, %v3971
    %v3982 = vsel %vm1638, %v3967, %v3969
    %v3983 = vsel %vm1638, %v3965, %v3967
    %v3984 = vsel %vm1638, %v3963, %v3965
    %v3985 = vsel %vm1638, %v3977, %v3963
    %v3986 = vmul.f32 %v3984, %v1650
    %v3987 = vmul.f32 %v3983, %v1654
    %v3988 = vmul.f32 %v3982, %v1658
    %v3989 = vmul.f32 %v3981, %v1662
    %v3990 = vmul.f32 %v3980, %v1666
    %v3991 = vmul.f32 %v3979, %v1670
    %v3992 = vmul.f32 %v3978, %v1674
    %v3993 = vmul.f32 %v3985, %v1678
    %v3994 = vpack.c.bf16 %v3986, %v3986
    %v3995 = vpack.c.bf16 %v3987, %v3987
    %v3996 = vpack.c.bf16 %v3988, %v3988
    %v3997 = vpack.c.bf16 %v3989, %v3989
    %v3998 = vpack.c.bf16 %v3990, %v3990
    %v3999 = vpack.c.bf16 %v3991, %v3991
    %v4000 = vpack.c.bf16 %v3992, %v3992
    %v4001 = vpack.c.bf16 %v3993, %v3993
    %4002 = vst [vmem:[#allocation2 + $0x1c0] sm:$0xf] %v3994
    %4003 = vst [vmem:[#allocation2 + $0x1c8] sm:$0xf] %v3995
    %4004 = vst [vmem:[#allocation2 + $0x1d0] sm:$0xf] %v3996
    %4005 = vst [vmem:[#allocation2 + $0x1d8] sm:$0xf] %v3997
    %4006 = vst [vmem:[#allocation2 + $0x1e0] sm:$0xf] %v3998
    %4007 = vst [vmem:[#allocation2 + $0x1e8] sm:$0xf] %v3999
    %4008 = vst [vmem:[#allocation2 + $0x1f0] sm:$0xf] %v4000
    %4009 = vst [vmem:[#allocation2 + $0x1f8] sm:$0xf] %v4001
    %4010 = vrot.lane.b32.xlu0 %v3146, 121
    %v4011 = vpop.permute.xlu0 %4010
    %4012 = vrot.lane.b32.xlu0 %v3147, 121
    %v4013 = vpop.permute.xlu0 %4012
    %4014 = vrot.lane.b32.xlu0 %v3148, 121
    %v4015 = vpop.permute.xlu0 %4014
    %4016 = vrot.lane.b32.xlu0 %v3149, 121
    %v4017 = vpop.permute.xlu0 %4016
    %4018 = vrot.lane.b32.xlu0 %v3150, 121
    %v4019 = vpop.permute.xlu0 %4018
    %4020 = vrot.lane.b32.xlu0 %v3151, 121
    %v4021 = vpop.permute.xlu0 %4020
    %4022 = vrot.lane.b32.xlu0 %v3152, 121
    %v4023 = vpop.permute.xlu0 %4022
    %4024 = vrot.lane.b32.xlu0 %v3153, 121
    %v4025 = vpop.permute.xlu0 %4024
    %v4026 = vsel %vm1719, %v4023, %v4025
    %v4027 = vsel %vm1719, %v4021, %v4023
    %v4028 = vsel %vm1719, %v4019, %v4021
    %v4029 = vsel %vm1719, %v4017, %v4019
    %v4030 = vsel %vm1719, %v4015, %v4017
    %v4031 = vsel %vm1719, %v4013, %v4015
    %v4032 = vsel %vm1719, %v4011, %v4013
    %v4033 = vsel %vm1719, %v4025, %v4011
    %v4034 = vmul.f32 %v4032, %v1731
    %v4035 = vmul.f32 %v4031, %v1735
    %v4036 = vmul.f32 %v4030, %v1739
    %v4037 = vmul.f32 %v4029, %v1743
    %v4038 = vmul.f32 %v4028, %v1747
    %v4039 = vmul.f32 %v4027, %v1751
    %v4040 = vmul.f32 %v4026, %v1755
    %v4041 = vmul.f32 %v4033, %v1759
    %v4042 = vpack.c.bf16 %v4034, %v4034
    %v4043 = vpack.c.bf16 %v4035, %v4035
    %v4044 = vpack.c.bf16 %v4036, %v4036
    %v4045 = vpack.c.bf16 %v4037, %v4037
    %v4046 = vpack.c.bf16 %v4038, %v4038
    %v4047 = vpack.c.bf16 %v4039, %v4039
    %v4048 = vpack.c.bf16 %v4040, %v4040
    %v4049 = vpack.c.bf16 %v4041, %v4041
    %v4058 = vrot.slane %v4042, 4
    %v4059 = vrot.slane %v4043, 4
    %v4060 = vrot.slane %v4044, 4
    %v4061 = vrot.slane %v4045, 4
    %v4062 = vrot.slane %v4046, 4
    %v4063 = vrot.slane %v4047, 4
    %v4064 = vrot.slane %v4048, 4
    %v4065 = vrot.slane %v4049, 4
    %4074 = vst [vmem:[#allocation2 + $0x1c0] sm:$0xf0] %v4058
    %4075 = vst [vmem:[#allocation2 + $0x1c8] sm:$0xf0] %v4059
    %4076 = vst [vmem:[#allocation2 + $0x1d0] sm:$0xf0] %v4060
    %4077 = vst [vmem:[#allocation2 + $0x1d8] sm:$0xf0] %v4061
    %4078 = vst [vmem:[#allocation2 + $0x1e0] sm:$0xf0] %v4062
    %4079 = vst [vmem:[#allocation2 + $0x1e8] sm:$0xf0] %v4063
    %4080 = vst [vmem:[#allocation2 + $0x1f0] sm:$0xf0] %v4064
    %4081 = vst [vmem:[#allocation2 + $0x1f8] sm:$0xf0] %v4065
    %4082 = vrot.lane.b32.xlu0 %v3146, 120
    %v4083 = vpop.permute.xlu0 %4082
    %4084 = vrot.lane.b32.xlu0 %v3147, 120
    %v4085 = vpop.permute.xlu0 %4084
    %4086 = vrot.lane.b32.xlu0 %v3148, 120
    %v4087 = vpop.permute.xlu0 %4086
    %4088 = vrot.lane.b32.xlu0 %v3149, 120
    %v4089 = vpop.permute.xlu0 %4088
    %4090 = vrot.lane.b32.xlu0 %v3150, 120
    %v4091 = vpop.permute.xlu0 %4090
    %4092 = vrot.lane.b32.xlu0 %v3151, 120
    %v4093 = vpop.permute.xlu0 %4092
    %4094 = vrot.lane.b32.xlu0 %v3152, 120
    %v4095 = vpop.permute.xlu0 %4094
    %4096 = vrot.lane.b32.xlu0 %v3153, 120
    %v4097 = vpop.permute.xlu0 %4096
    %v4098 = vsel %vm1824, %v4095, %v4097
    %v4099 = vsel %vm1824, %v4093, %v4095
    %v4100 = vsel %vm1824, %v4091, %v4093
    %v4101 = vsel %vm1824, %v4089, %v4091
    %v4102 = vsel %vm1824, %v4087, %v4089
    %v4103 = vsel %vm1824, %v4085, %v4087
    %v4104 = vsel %vm1824, %v4083, %v4085
    %v4105 = vsel %vm1824, %v4097, %v4083
    %v4106 = vmul.f32 %v4104, %v1836
    %v4107 = vmul.f32 %v4103, %v1840
    %v4108 = vmul.f32 %v4102, %v1844
    %v4109 = vmul.f32 %v4101, %v1848
    %v4110 = vmul.f32 %v4100, %v1852
    %v4111 = vmul.f32 %v4099, %v1856
    %v4112 = vmul.f32 %v4098, %v1860
    %v4113 = vmul.f32 %v4105, %v1864
    %v4114 = vpack.c.bf16 %v4106, %v4106
    %v4115 = vpack.c.bf16 %v4107, %v4107
    %v4116 = vpack.c.bf16 %v4108, %v4108
    %v4117 = vpack.c.bf16 %v4109, %v4109
    %v4118 = vpack.c.bf16 %v4110, %v4110
    %v4119 = vpack.c.bf16 %v4111, %v4111
    %v4120 = vpack.c.bf16 %v4112, %v4112
    %v4121 = vpack.c.bf16 %v4113, %v4113
    %4122 = vst [vmem:[#allocation2 + $0x200] sm:$0xf] %v4114
    %4123 = vst [vmem:[#allocation2 + $0x208] sm:$0xf] %v4115
    %4124 = vst [vmem:[#allocation2 + $0x210] sm:$0xf] %v4116
    %4125 = vst [vmem:[#allocation2 + $0x218] sm:$0xf] %v4117
    %4126 = vst [vmem:[#allocation2 + $0x220] sm:$0xf] %v4118
    %4127 = vst [vmem:[#allocation2 + $0x228] sm:$0xf] %v4119
    %4128 = vst [vmem:[#allocation2 + $0x230] sm:$0xf] %v4120
    %4129 = vst [vmem:[#allocation2 + $0x238] sm:$0xf] %v4121
    %4130 = vrot.lane.b32.xlu0 %v3146, 119
    %v4131 = vpop.permute.xlu0 %4130
    %4132 = vrot.lane.b32.xlu0 %v3147, 119
    %v4133 = vpop.permute.xlu0 %4132
    %4134 = vrot.lane.b32.xlu0 %v3148, 119
    %v4135 = vpop.permute.xlu0 %4134
    %4136 = vrot.lane.b32.xlu0 %v3149, 119
    %v4137 = vpop.permute.xlu0 %4136
    %4138 = vrot.lane.b32.xlu0 %v3150, 119
    %v4139 = vpop.permute.xlu0 %4138
    %4140 = vrot.lane.b32.xlu0 %v3151, 119
    %v4141 = vpop.permute.xlu0 %4140
    %4142 = vrot.lane.b32.xlu0 %v3152, 119
    %v4143 = vpop.permute.xlu0 %4142
    %4144 = vrot.lane.b32.xlu0 %v3153, 119
    %v4145 = vpop.permute.xlu0 %4144
    %v4146 = vsel %vm1905, %v4143, %v4145
    %v4147 = vsel %vm1905, %v4141, %v4143
    %v4148 = vsel %vm1905, %v4139, %v4141
    %v4149 = vsel %vm1905, %v4137, %v4139
    %v4150 = vsel %vm1905, %v4135, %v4137
    %v4151 = vsel %vm1905, %v4133, %v4135
    %v4152 = vsel %vm1905, %v4131, %v4133
    %v4153 = vsel %vm1905, %v4145, %v4131
    %v4154 = vmul.f32 %v4152, %v1917
    %v4155 = vmul.f32 %v4151, %v1921
    %v4156 = vmul.f32 %v4150, %v1925
    %v4157 = vmul.f32 %v4149, %v1929
    %v4158 = vmul.f32 %v4148, %v1933
    %v4159 = vmul.f32 %v4147, %v1937
    %v4160 = vmul.f32 %v4146, %v1941
    %v4161 = vmul.f32 %v4153, %v1945
    %v4162 = vpack.c.bf16 %v4154, %v4154
    %v4163 = vpack.c.bf16 %v4155, %v4155
    %v4164 = vpack.c.bf16 %v4156, %v4156
    %v4165 = vpack.c.bf16 %v4157, %v4157
    %v4166 = vpack.c.bf16 %v4158, %v4158
    %v4167 = vpack.c.bf16 %v4159, %v4159
    %v4168 = vpack.c.bf16 %v4160, %v4160
    %v4169 = vpack.c.bf16 %v4161, %v4161
    %v4178 = vrot.slane %v4162, 4
    %v4179 = vrot.slane %v4163, 4
    %v4180 = vrot.slane %v4164, 4
    %v4181 = vrot.slane %v4165, 4
    %v4182 = vrot.slane %v4166, 4
    %v4183 = vrot.slane %v4167, 4
    %v4184 = vrot.slane %v4168, 4
    %v4185 = vrot.slane %v4169, 4
    %4194 = vst [vmem:[#allocation2 + $0x200] sm:$0xf0] %v4178
    %4195 = vst [vmem:[#allocation2 + $0x208] sm:$0xf0] %v4179
    %4196 = vst [vmem:[#allocation2 + $0x210] sm:$0xf0] %v4180
    %4197 = vst [vmem:[#allocation2 + $0x218] sm:$0xf0] %v4181
    %4198 = vst [vmem:[#allocation2 + $0x220] sm:$0xf0] %v4182
    %4199 = vst [vmem:[#allocation2 + $0x228] sm:$0xf0] %v4183
    %4200 = vst [vmem:[#allocation2 + $0x230] sm:$0xf0] %v4184
    %4201 = vst [vmem:[#allocation2 + $0x238] sm:$0xf0] %v4185
    %v4202 = vmul.f32 %v3176, %v1997
    %v4203 = vmul.f32 %v3175, %v2001
    %v4204 = vmul.f32 %v3174, %v2005
    %v4205 = vmul.f32 %v3173, %v2009
    %v4206 = vmul.f32 %v3172, %v2013
    %v4207 = vmul.f32 %v3171, %v2017
    %v4208 = vmul.f32 %v3170, %v2021
    %v4209 = vmul.f32 %v3177, %v2025
    %v4210 = vpack.c.bf16 %v4202, %v4202
    %v4211 = vpack.c.bf16 %v4203, %v4203
    %v4212 = vpack.c.bf16 %v4204, %v4204
    %v4213 = vpack.c.bf16 %v4205, %v4205
    %v4214 = vpack.c.bf16 %v4206, %v4206
    %v4215 = vpack.c.bf16 %v4207, %v4207
    %v4216 = vpack.c.bf16 %v4208, %v4208
    %v4217 = vpack.c.bf16 %v4209, %v4209
    %4218 = vst [vmem:[#allocation2 + $0x240] sm:$0xf] %v4210
    %4219 = vst [vmem:[#allocation2 + $0x248] sm:$0xf] %v4211
    %4220 = vst [vmem:[#allocation2 + $0x250] sm:$0xf] %v4212
    %4221 = vst [vmem:[#allocation2 + $0x258] sm:$0xf] %v4213
    %4222 = vst [vmem:[#allocation2 + $0x260] sm:$0xf] %v4214
    %4223 = vst [vmem:[#allocation2 + $0x268] sm:$0xf] %v4215
    %4224 = vst [vmem:[#allocation2 + $0x270] sm:$0xf] %v4216
    %4225 = vst [vmem:[#allocation2 + $0x278] sm:$0xf] %v4217
    %v4226 = vmul.f32 %v3224, %v2053
    %v4227 = vmul.f32 %v3223, %v2057
    %v4228 = vmul.f32 %v3222, %v2061
    %v4229 = vmul.f32 %v3221, %v2065
    %v4230 = vmul.f32 %v3220, %v2069
    %v4231 = vmul.f32 %v3219, %v2073
    %v4232 = vmul.f32 %v3218, %v2077
    %v4233 = vmul.f32 %v3225, %v2081
    %v4234 = vpack.c.bf16 %v4226, %v4226
    %v4235 = vpack.c.bf16 %v4227, %v4227
    %v4236 = vpack.c.bf16 %v4228, %v4228
    %v4237 = vpack.c.bf16 %v4229, %v4229
    %v4238 = vpack.c.bf16 %v4230, %v4230
    %v4239 = vpack.c.bf16 %v4231, %v4231
    %v4240 = vpack.c.bf16 %v4232, %v4232
    %v4241 = vpack.c.bf16 %v4233, %v4233
    %v4250 = vrot.slane %v4234, 4
    %v4251 = vrot.slane %v4235, 4
    %v4252 = vrot.slane %v4236, 4
    %v4253 = vrot.slane %v4237, 4
    %v4254 = vrot.slane %v4238, 4
    %v4255 = vrot.slane %v4239, 4
    %v4256 = vrot.slane %v4240, 4
    %v4257 = vrot.slane %v4241, 4
    %4266 = vst [vmem:[#allocation2 + $0x240] sm:$0xf0] %v4250
    %4267 = vst [vmem:[#allocation2 + $0x248] sm:$0xf0] %v4251
    %4268 = vst [vmem:[#allocation2 + $0x250] sm:$0xf0] %v4252
    %4269 = vst [vmem:[#allocation2 + $0x258] sm:$0xf0] %v4253
    %4270 = vst [vmem:[#allocation2 + $0x260] sm:$0xf0] %v4254
    %4271 = vst [vmem:[#allocation2 + $0x268] sm:$0xf0] %v4255
    %4272 = vst [vmem:[#allocation2 + $0x270] sm:$0xf0] %v4256
    %4273 = vst [vmem:[#allocation2 + $0x278] sm:$0xf0] %v4257
    %v4274 = vmul.f32 %v3296, %v2133
    %v4275 = vmul.f32 %v3295, %v2137
    %v4276 = vmul.f32 %v3294, %v2141
    %v4277 = vmul.f32 %v3293, %v2145
    %v4278 = vmul.f32 %v3292, %v2149
    %v4279 = vmul.f32 %v3291, %v2153
    %v4280 = vmul.f32 %v3290, %v2157
    %v4281 = vmul.f32 %v3297, %v2161
    %v4282 = vpack.c.bf16 %v4274, %v4274
    %v4283 = vpack.c.bf16 %v4275, %v4275
    %v4284 = vpack.c.bf16 %v4276, %v4276
    %v4285 = vpack.c.bf16 %v4277, %v4277
    %v4286 = vpack.c.bf16 %v4278, %v4278
    %v4287 = vpack.c.bf16 %v4279, %v4279
    %v4288 = vpack.c.bf16 %v4280, %v4280
    %v4289 = vpack.c.bf16 %v4281, %v4281
    %4290 = vst [vmem:[#allocation2 + $0x280] sm:$0xf] %v4282
    %4291 = vst [vmem:[#allocation2 + $0x288] sm:$0xf] %v4283
    %4292 = vst [vmem:[#allocation2 + $0x290] sm:$0xf] %v4284
    %4293 = vst [vmem:[#allocation2 + $0x298] sm:$0xf] %v4285
    %4294 = vst [vmem:[#allocation2 + $0x2a0] sm:$0xf] %v4286
    %4295 = vst [vmem:[#allocation2 + $0x2a8] sm:$0xf] %v4287
    %4296 = vst [vmem:[#allocation2 + $0x2b0] sm:$0xf] %v4288
    %4297 = vst [vmem:[#allocation2 + $0x2b8] sm:$0xf] %v4289
    %v4298 = vmul.f32 %v3344, %v2189
    %v4299 = vmul.f32 %v3343, %v2193
    %v4300 = vmul.f32 %v3342, %v2197
    %v4301 = vmul.f32 %v3341, %v2201
    %v4302 = vmul.f32 %v3340, %v2205
    %v4303 = vmul.f32 %v3339, %v2209
    %v4304 = vmul.f32 %v3338, %v2213
    %v4305 = vmul.f32 %v3345, %v2217
    %v4306 = vpack.c.bf16 %v4298, %v4298
    %v4307 = vpack.c.bf16 %v4299, %v4299
    %v4308 = vpack.c.bf16 %v4300, %v4300
    %v4309 = vpack.c.bf16 %v4301, %v4301
    %v4310 = vpack.c.bf16 %v4302, %v4302
    %v4311 = vpack.c.bf16 %v4303, %v4303
    %v4312 = vpack.c.bf16 %v4304, %v4304
    %v4313 = vpack.c.bf16 %v4305, %v4305
    %v4322 = vrot.slane %v4306, 4
    %v4323 = vrot.slane %v4307, 4
    %v4324 = vrot.slane %v4308, 4
    %v4325 = vrot.slane %v4309, 4
    %v4326 = vrot.slane %v4310, 4
    %v4327 = vrot.slane %v4311, 4
    %v4328 = vrot.slane %v4312, 4
    %v4329 = vrot.slane %v4313, 4
    %4338 = vst [vmem:[#allocation2 + $0x280] sm:$0xf0] %v4322
    %4339 = vst [vmem:[#allocation2 + $0x288] sm:$0xf0] %v4323
    %4340 = vst [vmem:[#allocation2 + $0x290] sm:$0xf0] %v4324
    %4341 = vst [vmem:[#allocation2 + $0x298] sm:$0xf0] %v4325
    %4342 = vst [vmem:[#allocation2 + $0x2a0] sm:$0xf0] %v4326
    %4343 = vst [vmem:[#allocation2 + $0x2a8] sm:$0xf0] %v4327
    %4344 = vst [vmem:[#allocation2 + $0x2b0] sm:$0xf0] %v4328
    %4345 = vst [vmem:[#allocation2 + $0x2b8] sm:$0xf0] %v4329
    %v4346 = vmul.f32 %v3416, %v2269
    %v4347 = vmul.f32 %v3415, %v2273
    %v4348 = vmul.f32 %v3414, %v2277
    %v4349 = vmul.f32 %v3413, %v2281
    %v4350 = vmul.f32 %v3412, %v2285
    %v4351 = vmul.f32 %v3411, %v2289
    %v4352 = vmul.f32 %v3410, %v2293
    %v4353 = vmul.f32 %v3417, %v2297
    %v4354 = vpack.c.bf16 %v4346, %v4346
    %v4355 = vpack.c.bf16 %v4347, %v4347
    %v4356 = vpack.c.bf16 %v4348, %v4348
    %v4357 = vpack.c.bf16 %v4349, %v4349
    %v4358 = vpack.c.bf16 %v4350, %v4350
    %v4359 = vpack.c.bf16 %v4351, %v4351
    %v4360 = vpack.c.bf16 %v4352, %v4352
    %v4361 = vpack.c.bf16 %v4353, %v4353
    %4362 = vst [vmem:[#allocation2 + $0x2c0] sm:$0xf] %v4354
    %4363 = vst [vmem:[#allocation2 + $0x2c8] sm:$0xf] %v4355
    %4364 = vst [vmem:[#allocation2 + $0x2d0] sm:$0xf] %v4356
    %4365 = vst [vmem:[#allocation2 + $0x2d8] sm:$0xf] %v4357
    %4366 = vst [vmem:[#allocation2 + $0x2e0] sm:$0xf] %v4358
    %4367 = vst [vmem:[#allocation2 + $0x2e8] sm:$0xf] %v4359
    %4368 = vst [vmem:[#allocation2 + $0x2f0] sm:$0xf] %v4360
    %4369 = vst [vmem:[#allocation2 + $0x2f8] sm:$0xf] %v4361
    %v4370 = vmul.f32 %v3464, %v2325
    %v4371 = vmul.f32 %v3463, %v2329
    %v4372 = vmul.f32 %v3462, %v2333
    %v4373 = vmul.f32 %v3461, %v2337
    %v4374 = vmul.f32 %v3460, %v2341
    %v4375 = vmul.f32 %v3459, %v2345
    %v4376 = vmul.f32 %v3458, %v2349
    %v4377 = vmul.f32 %v3465, %v2353
    %v4378 = vpack.c.bf16 %v4370, %v4370
    %v4379 = vpack.c.bf16 %v4371, %v4371
    %v4380 = vpack.c.bf16 %v4372, %v4372
    %v4381 = vpack.c.bf16 %v4373, %v4373
    %v4382 = vpack.c.bf16 %v4374, %v4374
    %v4383 = vpack.c.bf16 %v4375, %v4375
    %v4384 = vpack.c.bf16 %v4376, %v4376
    %v4385 = vpack.c.bf16 %v4377, %v4377
    %v4394 = vrot.slane %v4378, 4
    %v4395 = vrot.slane %v4379, 4
    %v4396 = vrot.slane %v4380, 4
    %v4397 = vrot.slane %v4381, 4
    %v4398 = vrot.slane %v4382, 4
    %v4399 = vrot.slane %v4383, 4
    %v4400 = vrot.slane %v4384, 4
    %v4401 = vrot.slane %v4385, 4
    %4410 = vst [vmem:[#allocation2 + $0x2c0] sm:$0xf0] %v4394
    %4411 = vst [vmem:[#allocation2 + $0x2c8] sm:$0xf0] %v4395
    %4412 = vst [vmem:[#allocation2 + $0x2d0] sm:$0xf0] %v4396
    %4413 = vst [vmem:[#allocation2 + $0x2d8] sm:$0xf0] %v4397
    %4414 = vst [vmem:[#allocation2 + $0x2e0] sm:$0xf0] %v4398
    %4415 = vst [vmem:[#allocation2 + $0x2e8] sm:$0xf0] %v4399
    %4416 = vst [vmem:[#allocation2 + $0x2f0] sm:$0xf0] %v4400
    %4417 = vst [vmem:[#allocation2 + $0x2f8] sm:$0xf0] %v4401
    %v4418 = vmul.f32 %v3536, %v2405
    %v4419 = vmul.f32 %v3535, %v2409
    %v4420 = vmul.f32 %v3534, %v2413
    %v4421 = vmul.f32 %v3533, %v2417
    %v4422 = vmul.f32 %v3532, %v2421
    %v4423 = vmul.f32 %v3531, %v2425
    %v4424 = vmul.f32 %v3530, %v2429
    %v4425 = vmul.f32 %v3537, %v2433
    %v4426 = vpack.c.bf16 %v4418, %v4418
    %v4427 = vpack.c.bf16 %v4419, %v4419
    %v4428 = vpack.c.bf16 %v4420, %v4420
    %v4429 = vpack.c.bf16 %v4421, %v4421
    %v4430 = vpack.c.bf16 %v4422, %v4422
    %v4431 = vpack.c.bf16 %v4423, %v4423
    %v4432 = vpack.c.bf16 %v4424, %v4424
    %v4433 = vpack.c.bf16 %v4425, %v4425
    %4434 = vst [vmem:[#allocation2 + $0x300] sm:$0xf] %v4426
    %4435 = vst [vmem:[#allocation2 + $0x308] sm:$0xf] %v4427
    %4436 = vst [vmem:[#allocation2 + $0x310] sm:$0xf] %v4428
    %4437 = vst [vmem:[#allocation2 + $0x318] sm:$0xf] %v4429
    %4438 = vst [vmem:[#allocation2 + $0x320] sm:$0xf] %v4430
    %4439 = vst [vmem:[#allocation2 + $0x328] sm:$0xf] %v4431
    %4440 = vst [vmem:[#allocation2 + $0x330] sm:$0xf] %v4432
    %4441 = vst [vmem:[#allocation2 + $0x338] sm:$0xf] %v4433
    %v4442 = vmul.f32 %v3584, %v2461
    %v4443 = vmul.f32 %v3583, %v2465
    %v4444 = vmul.f32 %v3582, %v2469
    %v4445 = vmul.f32 %v3581, %v2473
    %v4446 = vmul.f32 %v3580, %v2477
    %v4447 = vmul.f32 %v3579, %v2481
    %v4448 = vmul.f32 %v3578, %v2485
    %v4449 = vmul.f32 %v3585, %v2489
    %v4450 = vpack.c.bf16 %v4442, %v4442
    %v4451 = vpack.c.bf16 %v4443, %v4443
    %v4452 = vpack.c.bf16 %v4444, %v4444
    %v4453 = vpack.c.bf16 %v4445, %v4445
    %v4454 = vpack.c.bf16 %v4446, %v4446
    %v4455 = vpack.c.bf16 %v4447, %v4447
    %v4456 = vpack.c.bf16 %v4448, %v4448
    %v4457 = vpack.c.bf16 %v4449, %v4449
    %v4466 = vrot.slane %v4450, 4
    %v4467 = vrot.slane %v4451, 4
    %v4468 = vrot.slane %v4452, 4
    %v4469 = vrot.slane %v4453, 4
    %v4470 = vrot.slane %v4454, 4
    %v4471 = vrot.slane %v4455, 4
    %v4472 = vrot.slane %v4456, 4
    %v4473 = vrot.slane %v4457, 4
    %4482 = vst [vmem:[#allocation2 + $0x300] sm:$0xf0] %v4466
    %4483 = vst [vmem:[#allocation2 + $0x308] sm:$0xf0] %v4467
    %4484 = vst [vmem:[#allocation2 + $0x310] sm:$0xf0] %v4468
    %4485 = vst [vmem:[#allocation2 + $0x318] sm:$0xf0] %v4469
    %4486 = vst [vmem:[#allocation2 + $0x320] sm:$0xf0] %v4470
    %4487 = vst [vmem:[#allocation2 + $0x328] sm:$0xf0] %v4471
    %4488 = vst [vmem:[#allocation2 + $0x330] sm:$0xf0] %v4472
    %4489 = vst [vmem:[#allocation2 + $0x338] sm:$0xf0] %v4473
    %v4490 = vmul.f32 %v3656, %v2541
    %v4491 = vmul.f32 %v3655, %v2545
    %v4492 = vmul.f32 %v3654, %v2549
    %v4493 = vmul.f32 %v3653, %v2553
    %v4494 = vmul.f32 %v3652, %v2557
    %v4495 = vmul.f32 %v3651, %v2561
    %v4496 = vmul.f32 %v3650, %v2565
    %v4497 = vmul.f32 %v3657, %v2569
    %v4498 = vpack.c.bf16 %v4490, %v4490
    %v4499 = vpack.c.bf16 %v4491, %v4491
    %v4500 = vpack.c.bf16 %v4492, %v4492
    %v4501 = vpack.c.bf16 %v4493, %v4493
    %v4502 = vpack.c.bf16 %v4494, %v4494
    %v4503 = vpack.c.bf16 %v4495, %v4495
    %v4504 = vpack.c.bf16 %v4496, %v4496
    %v4505 = vpack.c.bf16 %v4497, %v4497
    %4506 = vst [vmem:[#allocation2 + $0x340] sm:$0xf] %v4498
    %4507 = vst [vmem:[#allocation2 + $0x348] sm:$0xf] %v4499
    %4508 = vst [vmem:[#allocation2 + $0x350] sm:$0xf] %v4500
    %4509 = vst [vmem:[#allocation2 + $0x358] sm:$0xf] %v4501
    %4510 = vst [vmem:[#allocation2 + $0x360] sm:$0xf] %v4502
    %4511 = vst [vmem:[#allocation2 + $0x368] sm:$0xf] %v4503
    %4512 = vst [vmem:[#allocation2 + $0x370] sm:$0xf] %v4504
    %4513 = vst [vmem:[#allocation2 + $0x378] sm:$0xf] %v4505
    %v4514 = vpack.c.bf16 %v97, %v97
    %v4515 = vpack.c.bf16 %v98, %v98
    %v4516 = vpack.c.bf16 %v99, %v99
    %v4517 = vpack.c.bf16 %v100, %v100
    %v4518 = vpack.c.bf16 %v101, %v101
    %v4519 = vpack.c.bf16 %v102, %v102
    %v4520 = vpack.c.bf16 %v103, %v103
    %v4521 = vpack.c.bf16 %v104, %v104
    %v4530 = vrot.slane %v4514, 4
    %v4531 = vrot.slane %v4515, 4
    %v4532 = vrot.slane %v4516, 4
    %v4533 = vrot.slane %v4517, 4
    %v4534 = vrot.slane %v4518, 4
    %v4535 = vrot.slane %v4519, 4
    %v4536 = vrot.slane %v4520, 4
    %v4537 = vrot.slane %v4521, 4
    %4546 = vst [vmem:[#allocation2 + $0x340] sm:$0xf0] %v4530
    %4547 = vst [vmem:[#allocation2 + $0x348] sm:$0xf0] %v4531
    %4548 = vst [vmem:[#allocation2 + $0x350] sm:$0xf0] %v4532
    %4549 = vst [vmem:[#allocation2 + $0x358] sm:$0xf0] %v4533
    %4550 = vst [vmem:[#allocation2 + $0x360] sm:$0xf0] %v4534
    %4551 = vst [vmem:[#allocation2 + $0x368] sm:$0xf0] %v4535
    %4552 = vst [vmem:[#allocation2 + $0x370] sm:$0xf0] %v4536
    %4553 = vst [vmem:[#allocation2 + $0x378] sm:$0xf0] %v4537
    %v4554 = vld [vmem:[#allocation9] sm:$0xff]
    %v4555 = vld [vmem:[#allocation2] sm:$0xff]
    %v4556 = vld [vmem:[#allocation2 + $0x8] sm:$0xff]
    %v4557 = vld [vmem:[#allocation2 + $0x10] sm:$0xff]
    %v4558 = vld [vmem:[#allocation2 + $0x18] sm:$0xff]
    %v4559 = vld [vmem:[#allocation2 + $0x20] sm:$0xff]
    %v4560 = vld [vmem:[#allocation2 + $0x28] sm:$0xff]
    %v4561 = vld [vmem:[#allocation2 + $0x30] sm:$0xff]
    %v4562 = vld [vmem:[#allocation2 + $0x38] sm:$0xff]
    %v4563 = vld [vmem:[#allocation2 + $0x40] sm:$0xff]
    %v4564 = vld [vmem:[#allocation2 + $0x48] sm:$0xff]
    %v4565 = vld [vmem:[#allocation2 + $0x50] sm:$0xff]
    %v4566 = vld [vmem:[#allocation2 + $0x58] sm:$0xff]
    %v4567 = vld [vmem:[#allocation2 + $0x60] sm:$0xff]
    %v4568 = vld [vmem:[#allocation2 + $0x68] sm:$0xff]
    %v4569 = vld [vmem:[#allocation2 + $0x70] sm:$0xff]
    %v4570 = vld [vmem:[#allocation2 + $0x78] sm:$0xff]
    %v4571 = vld [vmem:[#allocation2 + $0x80] sm:$0xff]
    %v4572 = vld [vmem:[#allocation2 + $0x88] sm:$0xff]
    %v4573 = vld [vmem:[#allocation2 + $0x90] sm:$0xff]
    %v4574 = vld [vmem:[#allocation2 + $0x98] sm:$0xff]
    %v4575 = vld [vmem:[#allocation2 + $0xa0] sm:$0xff]
    %v4576 = vld [vmem:[#allocation2 + $0xa8] sm:$0xff]
    %v4577 = vld [vmem:[#allocation2 + $0xb0] sm:$0xff]
    %v4578 = vld [vmem:[#allocation2 + $0xb8] sm:$0xff]
    %v4579 = vld [vmem:[#allocation2 + $0xc0] sm:$0xff]
    %v4580 = vld [vmem:[#allocation2 + $0xc8] sm:$0xff]
    %v4581 = vld [vmem:[#allocation2 + $0xd0] sm:$0xff]
    %v4582 = vld [vmem:[#allocation2 + $0xd8] sm:$0xff]
    %v4583 = vld [vmem:[#allocation2 + $0xe0] sm:$0xff]
    %v4584 = vld [vmem:[#allocation2 + $0xe8] sm:$0xff]
    %v4585 = vld [vmem:[#allocation2 + $0xf0] sm:$0xff]
    %v4586 = vld [vmem:[#allocation2 + $0xf8] sm:$0xff]
    %v4587 = vld [vmem:[#allocation2 + $0x100] sm:$0xff]
    %v4588 = vld [vmem:[#allocation2 + $0x108] sm:$0xff]
    %v4589 = vld [vmem:[#allocation2 + $0x110] sm:$0xff]
    %v4590 = vld [vmem:[#allocation2 + $0x118] sm:$0xff]
    %v4591 = vld [vmem:[#allocation2 + $0x120] sm:$0xff]
    %v4592 = vld [vmem:[#allocation2 + $0x128] sm:$0xff]
    %v4593 = vld [vmem:[#allocation2 + $0x130] sm:$0xff]
    %v4594 = vld [vmem:[#allocation2 + $0x138] sm:$0xff]
    %v4595 = vld [vmem:[#allocation2 + $0x140] sm:$0xff]
    %v4596 = vld [vmem:[#allocation2 + $0x148] sm:$0xff]
    %v4597 = vld [vmem:[#allocation2 + $0x150] sm:$0xff]
    %v4598 = vld [vmem:[#allocation2 + $0x158] sm:$0xff]
    %v4599 = vld [vmem:[#allocation2 + $0x160] sm:$0xff]
    %v4600 = vld [vmem:[#allocation2 + $0x168] sm:$0xff]
    %v4601 = vld [vmem:[#allocation2 + $0x170] sm:$0xff]
    %v4602 = vld [vmem:[#allocation2 + $0x178] sm:$0xff]
    %v4603 = vld [vmem:[#allocation2 + $0x180] sm:$0xff]
    %v4604 = vld [vmem:[#allocation2 + $0x188] sm:$0xff]
    %v4605 = vld [vmem:[#allocation2 + $0x190] sm:$0xff]
    %v4606 = vld [vmem:[#allocation2 + $0x198] sm:$0xff]
    %v4607 = vld [vmem:[#allocation2 + $0x1a0] sm:$0xff]
    %v4608 = vld [vmem:[#allocation2 + $0x1a8] sm:$0xff]
    %v4609 = vld [vmem:[#allocation2 + $0x1b0] sm:$0xff]
    %v4610 = vld [vmem:[#allocation2 + $0x1b8] sm:$0xff]
    %v4611 = vld [vmem:[#allocation2 + $0x1c0] sm:$0xff]
    %v4612 = vld [vmem:[#allocation2 + $0x1c8] sm:$0xff]
    %v4613 = vld [vmem:[#allocation2 + $0x1d0] sm:$0xff]
    %v4614 = vld [vmem:[#allocation2 + $0x1d8] sm:$0xff]
    %v4615 = vld [vmem:[#allocation2 + $0x1e0] sm:$0xff]
    %v4616 = vld [vmem:[#allocation2 + $0x1e8] sm:$0xff]
    %v4617 = vld [vmem:[#allocation2 + $0x1f0] sm:$0xff]
    %v4618 = vld [vmem:[#allocation2 + $0x1f8] sm:$0xff]
    %v4619 = vld [vmem:[#allocation2 + $0x200] sm:$0xff]
    %v4620 = vld [vmem:[#allocation2 + $0x208] sm:$0xff]
    %v4621 = vld [vmem:[#allocation2 + $0x210] sm:$0xff]
    %v4622 = vld [vmem:[#allocation2 + $0x218] sm:$0xff]
    %v4623 = vld [vmem:[#allocation2 + $0x220] sm:$0xff]
    %v4624 = vld [vmem:[#allocation2 + $0x228] sm:$0xff]
    %v4625 = vld [vmem:[#allocation2 + $0x230] sm:$0xff]
    %v4626 = vld [vmem:[#allocation2 + $0x238] sm:$0xff]
    %v4627 = vld [vmem:[#allocation2 + $0x240] sm:$0xff]
    %v4628 = vld [vmem:[#allocation2 + $0x248] sm:$0xff]
    %v4629 = vld [vmem:[#allocation2 + $0x250] sm:$0xff]
    %v4630 = vld [vmem:[#allocation2 + $0x258] sm:$0xff]
    %v4631 = vld [vmem:[#allocation2 + $0x260] sm:$0xff]
    %v4632 = vld [vmem:[#allocation2 + $0x268] sm:$0xff]
    %v4633 = vld [vmem:[#allocation2 + $0x270] sm:$0xff]
    %v4634 = vld [vmem:[#allocation2 + $0x278] sm:$0xff]
    %v4635 = vld [vmem:[#allocation2 + $0x280] sm:$0xff]
    %v4636 = vld [vmem:[#allocation2 + $0x288] sm:$0xff]
    %v4637 = vld [vmem:[#allocation2 + $0x290] sm:$0xff]
    %v4638 = vld [vmem:[#allocation2 + $0x298] sm:$0xff]
    %v4639 = vld [vmem:[#allocation2 + $0x2a0] sm:$0xff]
    %v4640 = vld [vmem:[#allocation2 + $0x2a8] sm:$0xff]
    %v4641 = vld [vmem:[#allocation2 + $0x2b0] sm:$0xff]
    %v4642 = vld [vmem:[#allocation2 + $0x2b8] sm:$0xff]
    %v4643 = vld [vmem:[#allocation2 + $0x2c0] sm:$0xff]
    %v4644 = vld [vmem:[#allocation2 + $0x2c8] sm:$0xff]
    %v4645 = vld [vmem:[#allocation2 + $0x2d0] sm:$0xff]
    %v4646 = vld [vmem:[#allocation2 + $0x2d8] sm:$0xff]
    %v4647 = vld [vmem:[#allocation2 + $0x2e0] sm:$0xff]
    %v4648 = vld [vmem:[#allocation2 + $0x2e8] sm:$0xff]
    %v4649 = vld [vmem:[#allocation2 + $0x2f0] sm:$0xff]
    %v4650 = vld [vmem:[#allocation2 + $0x2f8] sm:$0xff]
    %v4651 = vld [vmem:[#allocation2 + $0x300] sm:$0xff]
    %v4652 = vld [vmem:[#allocation2 + $0x308] sm:$0xff]
    %v4653 = vld [vmem:[#allocation2 + $0x310] sm:$0xff]
    %v4654 = vld [vmem:[#allocation2 + $0x318] sm:$0xff]
    %v4655 = vld [vmem:[#allocation2 + $0x320] sm:$0xff]
    %v4656 = vld [vmem:[#allocation2 + $0x328] sm:$0xff]
    %v4657 = vld [vmem:[#allocation2 + $0x330] sm:$0xff]
    %v4658 = vld [vmem:[#allocation2 + $0x338] sm:$0xff]
    %v4659 = vld [vmem:[#allocation2 + $0x340] sm:$0xff]
    %v4660 = vld [vmem:[#allocation2 + $0x348] sm:$0xff]
    %v4661 = vld [vmem:[#allocation2 + $0x350] sm:$0xff]
    %v4662 = vld [vmem:[#allocation2 + $0x358] sm:$0xff]
    %v4663 = vld [vmem:[#allocation2 + $0x360] sm:$0xff]
    %v4664 = vld [vmem:[#allocation2 + $0x368] sm:$0xff]
    %v4665 = vld [vmem:[#allocation2 + $0x370] sm:$0xff]
    %v4666 = vld [vmem:[#allocation2 + $0x378] sm:$0xff]
    %4667 = vset.pattern.permute.xlu0 3
    %4668 = vperm.xlu0 %4667, %v138
    %v4669 = vpop.permute.xlu0 %4668
    %v4672 = vunpack.c.l.b16 %v4554
    %v4673 = vunpack.c.h.b16 %v4554
    %v4674 = vpack.c.b16 %v4672, %v4672
    %v4675 = vpack.c.b16 %v4673, %v4673
    %vm4677 = vcmask 785408
    %v4679 = vsel %vm4677, %v4675, 0
    %4681 = vmatprep.subr.bf16.mxu0 %v4556
    %4682 = vmatpush1.bf16.msra.mxu0 %v4555
    %4683 = vmatprep.subr.bf16.mxu0 %v4564
    %4684 = vmatpush1.bf16.msra.mxu0 %v4563
    %4685 = vmatprep.subr.bf16.mxu0 %v4572
    %4686 = vmatpush1.bf16.msra.mxu0 %v4571
    %4687 = vmatprep.subr.bf16.mxu0 %v4580
    %4688 = vmatpush1.bf16.msra.mxu0 %v4579
    %4689 = vmatprep.subr.bf16.mxu0 %v4588
    %4690 = vmatpush1.bf16.msra.mxu0 %v4587
    %4691 = vmatprep.subr.bf16.mxu0 %v4596
    %4692 = vmatpush1.bf16.msra.mxu0 %v4595
    %4693 = vmatprep.subr.bf16.mxu0 %v4604
    %4694 = vmatpush1.bf16.msra.mxu0 %v4603
    %4695 = vmatprep.subr.bf16.mxu0 %v4612
    %4696 = vmatpush1.bf16.msra.mxu0 %v4611
    %4697 = vmatprep.subr.bf16.mxu0 %v4620
    %4698 = vmatpush1.bf16.msra.mxu0 %v4619
    %4699 = vmatprep.subr.bf16.mxu0 %v4628
    %4700 = vmatpush1.bf16.msra.mxu0 %v4627
    %4701 = vmatprep.subr.bf16.mxu0 %v4636
    %4702 = vmatpush1.bf16.msra.mxu0 %v4635
    %4703 = vmatprep.subr.bf16.mxu0 %v4644
    %4704 = vmatpush1.bf16.msra.mxu0 %v4643
    %4705 = vmatprep.subr.bf16.mxu0 %v4652
    %4706 = vmatpush1.bf16.msra.mxu0 %v4651
    %4707 = vmatprep.subr.bf16.mxu0 %v4660
    %4708 = vmatpush1.bf16.msra.mxu0 %v4659
    %4709 = vmatprep.subr.bf16.mxu0 0
    %4710 = vmatpush1.bf16.msra.mxu0 0
    %4711 = vmatprep.subr.bf16.mxu0 0
    %4712 = vmatpush1.bf16.msra.mxu0 0
    %4713 = vmatprep.mubr.bf16.mxu0 %v4679
    %4714 = vmatmul.mubr.bf16.gmra.mrb[0].mxu0 %v4674
    %v4715 = vpop.f32.mrb[0].mxu0
    %v4716 = vadd.f32 %v4669, %v4715
    %v4717 = vpop.f32.mrb[0].mxu0
    %v4718 = vadd.f32 %v4669, %v4717
    %v4719 = vpop.f32.mrb[0].mxu0
    %v4720 = vpop.f32.mrb[0].mxu0
    %4721 = vdwg.mxu0
    %4722 = vmatprep.subr.bf16.mxu0 %v4558
    %4723 = vmatpush1.bf16.msra.mxu0 %v4557
    %4724 = vmatprep.subr.bf16.mxu0 %v4566
    %4725 = vmatpush1.bf16.msra.mxu0 %v4565
    %4726 = vmatprep.subr.bf16.mxu0 %v4574
    %4727 = vmatpush1.bf16.msra.mxu0 %v4573
    %4728 = vmatprep.subr.bf16.mxu0 %v4582
    %4729 = vmatpush1.bf16.msra.mxu0 %v4581
    %4730 = vmatprep.subr.bf16.mxu0 %v4590
    %4731 = vmatpush1.bf16.msra.mxu0 %v4589
    %4732 = vmatprep.subr.bf16.mxu0 %v4598
    %4733 = vmatpush1.bf16.msra.mxu0 %v4597
    %4734 = vmatprep.subr.bf16.mxu0 %v4606
    %4735 = vmatpush1.bf16.msra.mxu0 %v4605
    %4736 = vmatprep.subr.bf16.mxu0 %v4614
    %4737 = vmatpush1.bf16.msra.mxu0 %v4613
    %4738 = vmatprep.subr.bf16.mxu0 %v4622
    %4739 = vmatpush1.bf16.msra.mxu0 %v4621
    %4740 = vmatprep.subr.bf16.mxu0 %v4630
    %4741 = vmatpush1.bf16.msra.mxu0 %v4629
    %4742 = vmatprep.subr.bf16.mxu0 %v4638
    %4743 = vmatpush1.bf16.msra.mxu0 %v4637
    %4744 = vmatprep.subr.bf16.mxu0 %v4646
    %4745 = vmatpush1.bf16.msra.mxu0 %v4645
    %4746 = vmatprep.subr.bf16.mxu0 %v4654
    %4747 = vmatpush1.bf16.msra.mxu0 %v4653
    %4748 = vmatprep.subr.bf16.mxu0 %v4662
    %4749 = vmatpush1.bf16.msra.mxu0 %v4661
    %4750 = vmatprep.subr.bf16.mxu0 0
    %4751 = vmatpush1.bf16.msra.mxu0 0
    %4752 = vmatprep.subr.bf16.mxu0 0
    %4753 = vmatpush1.bf16.msra.mxu0 0
    %4754 = vmatprep.mubr.bf16.mxu0 %v4679
    %4755 = vmatmul.mubr.bf16.gmra.mrb[0].mxu0 %v4674
    %v4756 = vpop.f32.mrb[0].mxu0
    %v4757 = vadd.f32 %v4669, %v4756
    %v4758 = vpop.f32.mrb[0].mxu0
    %v4759 = vadd.f32 %v4669, %v4758
    %v4760 = vpop.f32.mrb[0].mxu0
    %v4761 = vpop.f32.mrb[0].mxu0
    %4762 = vdwg.mxu0
    %4763 = vmatprep.subr.bf16.mxu0 %v4560
    %4764 = vmatpush1.bf16.msra.mxu0 %v4559
    %4765 = vmatprep.subr.bf16.mxu0 %v4568
    %4766 = vmatpush1.bf16.msra.mxu0 %v4567
    %4767 = vmatprep.subr.bf16.mxu0 %v4576
    %4768 = vmatpush1.bf16.msra.mxu0 %v4575
    %4769 = vmatprep.subr.bf16.mxu0 %v4584
    %4770 = vmatpush1.bf16.msra.mxu0 %v4583
    %4771 = vmatprep.subr.bf16.mxu0 %v4592
    %4772 = vmatpush1.bf16.msra.mxu0 %v4591
    %4773 = vmatprep.subr.bf16.mxu0 %v4600
    %4774 = vmatpush1.bf16.msra.mxu0 %v4599
    %4775 = vmatprep.subr.bf16.mxu0 %v4608
    %4776 = vmatpush1.bf16.msra.mxu0 %v4607
    %4777 = vmatprep.subr.bf16.mxu0 %v4616
    %4778 = vmatpush1.bf16.msra.mxu0 %v4615
    %4779 = vmatprep.subr.bf16.mxu0 %v4624
    %4780 = vmatpush1.bf16.msra.mxu0 %v4623
    %4781 = vmatprep.subr.bf16.mxu0 %v4632
    %4782 = vmatpush1.bf16.msra.mxu0 %v4631
    %4783 = vmatprep.subr.bf16.mxu0 %v4640
    %4784 = vmatpush1.bf16.msra.mxu0 %v4639
    %4785 = vmatprep.subr.bf16.mxu0 %v4648
    %4786 = vmatpush1.bf16.msra.mxu0 %v4647
    %4787 = vmatprep.subr.bf16.mxu0 %v4656
    %4788 = vmatpush1.bf16.msra.mxu0 %v4655
    %4789 = vmatprep.subr.bf16.mxu0 %v4664
    %4790 = vmatpush1.bf16.msra.mxu0 %v4663
    %4791 = vmatprep.subr.bf16.mxu0 0
    %4792 = vmatpush1.bf16.msra.mxu0 0
    %4793 = vmatprep.subr.bf16.mxu0 0
    %4794 = vmatpush1.bf16.msra.mxu0 0
    %4795 = vmatprep.mubr.bf16.mxu0 %v4679
    %4796 = vmatmul.mubr.bf16.gmra.mrb[0].mxu0 %v4674
    %v4797 = vpop.f32.mrb[0].mxu0
    %v4798 = vadd.f32 %v4669, %v4797
    %v4799 = vpop.f32.mrb[0].mxu0
    %v4800 = vadd.f32 %v4669, %v4799
    %v4801 = vpop.f32.mrb[0].mxu0
    %v4802 = vpop.f32.mrb[0].mxu0
    %4803 = vdwg.mxu0
    %4804 = vmatprep.subr.bf16.mxu0 %v4562
    %4805 = vmatpush1.bf16.msra.mxu0 %v4561
    %4806 = vmatprep.subr.bf16.mxu0 %v4570
    %4807 = vmatpush1.bf16.msra.mxu0 %v4569
    %4808 = vmatprep.subr.bf16.mxu0 %v4578
    %4809 = vmatpush1.bf16.msra.mxu0 %v4577
    %4810 = vmatprep.subr.bf16.mxu0 %v4586
    %4811 = vmatpush1.bf16.msra.mxu0 %v4585
    %4812 = vmatprep.subr.bf16.mxu0 %v4594
    %4813 = vmatpush1.bf16.msra.mxu0 %v4593
    %4814 = vmatprep.subr.bf16.mxu0 %v4602
    %4815 = vmatpush1.bf16.msra.mxu0 %v4601
    %4816 = vmatprep.subr.bf16.mxu0 %v4610
    %4817 = vmatpush1.bf16.msra.mxu0 %v4609
    %4818 = vmatprep.subr.bf16.mxu0 %v4618
    %4819 = vmatpush1.bf16.msra.mxu0 %v4617
    %4820 = vmatprep.subr.bf16.mxu0 %v4626
    %4821 = vmatpush1.bf16.msra.mxu0 %v4625
    %4822 = vmatprep.subr.bf16.mxu0 %v4634
    %4823 = vmatpush1.bf16.msra.mxu0 %v4633
    %4824 = vmatprep.subr.bf16.mxu0 %v4642
    %4825 = vmatpush1.bf16.msra.mxu0 %v4641
    %4826 = vmatprep.subr.bf16.mxu0 %v4650
    %4827 = vmatpush1.bf16.msra.mxu0 %v4649
    %4828 = vmatprep.subr.bf16.mxu0 %v4658
    %4829 = vmatpush1.bf16.msra.mxu0 %v4657
    %4830 = vmatprep.subr.bf16.mxu0 %v4666
    %4831 = vmatpush1.bf16.msra.mxu0 %v4665
    %4832 = vmatprep.subr.bf16.mxu0 0
    %4833 = vmatpush1.bf16.msra.mxu0 0
    %4834 = vmatprep.subr.bf16.mxu0 0
    %4835 = vmatpush1.bf16.msra.mxu0 0
    %4836 = vmatprep.mubr.bf16.mxu0 %v4679
    %4837 = vmatmul.mubr.bf16.gmra.mrb[0].mxu0 %v4674
    %v4838 = vpop.f32.mrb[0].mxu0
    %v4839 = vadd.f32 %v4669, %v4838
    %v4840 = vpop.f32.mrb[0].mxu0
    %v4841 = vadd.f32 %v4669, %v4840
    %v4842 = vpop.f32.mrb[0].mxu0
    %v4843 = vpop.f32.mrb[0].mxu0
    %4844 = vdwg.mxu0
    %4845 = vst [vmem:[#allocation14] sm:$0xff] %v4716
    %4846 = vst [vmem:[#allocation14 + $0x8] sm:$0xff] %v4718
    %4847 = vst [vmem:[#allocation14 + $0x10] sm:$0xff] %v4757
    %4848 = vst [vmem:[#allocation14 + $0x18] sm:$0xff] %v4759
    %4849 = vst [vmem:[#allocation14 + $0x20] sm:$0xff] %v4798
    %4850 = vst [vmem:[#allocation14 + $0x28] sm:$0xff] %v4800
    %4851 = vst [vmem:[#allocation14 + $0x30] sm:$0xff] %v4839
    %4852 = vst [vmem:[#allocation14 + $0x38] sm:$0xff] %v4841
    // Predicated region
    $region50: #{tpu_custom_call.1} parent=1 // pred_check
      _
    $region51: #{tpu_custom_call.1} parent=1 // pred_check_branch
      %4854 = sbr.rel (0) target = $region53
    $region52: #{tpu_custom_call.1} parent=1 // pred_region
      %s4856 = ssub.s32 1024, 1024
      %4857 = vsyncadd [#allocation5], %s4856
      %s4859 = sshll.u32 [#allocation14], 4
      %s4860 = int_to_ptr.vmem [resolvable:$true] %s4859
      %4862 = dma.vmem_to_hbm [thread:$0]  %s4860, 1024, %s6, [#allocation5]
    $region53: #{tpu_custom_call.1} parent=1 // pred_fallthru
      _
    // Predicated region
    $region54: #{tpu_custom_call.1} parent=1 // pred_check
      _
    $region55: #{tpu_custom_call.1} parent=1 // pred_check_branch
      %4864 = sbr.rel (0) target = $region57
    $region56: #{tpu_custom_call.1} parent=1 // pred_region
      %4865 = dma.done [#allocation5], 1024
    $region57: #{tpu_custom_call.1} parent=1 // pred_fallthru
      _
    %4866 = vsyncpa [#allocation4], 1
    %4867 = vsyncpa [#allocation7], 1
    %4868 = vsyncpa [#allocation10], 1
    %4869 = vsyncpa [#allocation13], 1
    %4870 = vsyncpa [#allocation5], 1

</llo_original>
